<compile_context>
chip_gen: v7x
topology: tpu7x:2x2x1
jax: 0.10.0
libtpu: 0.0.40
codegen_flags: <defaults>
</compile_context>

<pallas_src>
from math import exp

import numpy as np
import jax
import jax.numpy as jnp
from jax.experimental import pallas as pl
from jax.experimental.pallas import tpu as pltpu


def _gaussian_1d(window_size, sigma=1.5):
    g = np.array(
        [exp(-(x - window_size // 2) ** 2 / float(2 * sigma ** 2)) for x in range(window_size)],
        dtype=np.float32,
    )
    return g / g.sum()


def _build_level_constants(H, W, window_size, levels):
    """Banded gaussian (A, block-diag B^T) and 2x2 avg-pool matrices per level."""
    dims, As, Bts, Phs, Pws = [], [], [], [], []
    h, w = H, W
    for lvl in range(levels):
        ws = min(window_size, h, w)                  # real_size = min(window, h, w)
        hout, wout = h - ws + 1, w - ws + 1
        g = _gaussian_1d(ws)
        A = np.zeros((hout, h), np.float32)
        for p in range(hout):
            A[p, p:p + ws] = g
        Bm = np.zeros((wout, w), np.float32)
        for q in range(wout):
            Bm[q, q:q + ws] = g
        # block-diagonal B^T for the 5-way lane-stacked conv: (5w, 5wout)
        BtBlk = np.zeros((5 * w, 5 * wout), np.float32)
        for c in range(5):
            BtBlk[c * w:(c + 1) * w, c * wout:(c + 1) * wout] = Bm.T
        dims.append((h, w, hout, wout))
        As.append(A)
        Bts.append(BtBlk)
        if lvl < levels - 1:
            hh, wh = h // 2, w // 2
            Ph = np.zeros((hh, h), np.float32)
            for i in range(hh):
                Ph[i, 2 * i] = 0.5
                Ph[i, 2 * i + 1] = 0.5
            Pw = np.zeros((wh, w), np.float32)
            for j in range(wh):
                Pw[j, 2 * j] = 0.5
                Pw[j, 2 * j + 1] = 0.5
            PwBlk = np.zeros((2 * w, 2 * wh), np.float32)
            for c in range(2):
                PwBlk[c * w:(c + 1) * w, c * wh:(c + 1) * wh] = Pw.T
            Phs.append(Ph)
            Pws.append(PwBlk)
            h, w = hh, wh
    return dims, As, Bts, Phs, Pws


def _make_msssim_kernel(level_dims, C1, C2):
    """Fused kernel: one grid step = one (batch*channel) image, all 5 levels."""
    levels = len(level_dims)

    def kernel(*refs):
        x1_ref, x2_ref = refs[0], refs[1]
        idx = 2
        a_refs = refs[idx:idx + levels]; idx += levels
        bt_refs = refs[idx:idx + levels]; idx += levels
        ph_refs = refs[idx:idx + levels - 1]; idx += levels - 1
        pw_refs = refs[idx:idx + levels - 1]; idx += levels - 1
        sums_ref = refs[idx]; idx += 1
        stack_ref = refs[idx]                       # VMEM scratch (H0, 5*W0)

        x1 = x1_ref[0]                              # (H, W) of this image
        x2 = x2_ref[0]

        for lvl in range(levels):
            H, W, Hout, Wout = level_dims[lvl]
            A = a_refs[lvl][...]                    # (Hout, H)
            BtB = bt_refs[lvl][...]                 # (5W, 5Wout) block-diag

            # lane-stack the 5 conv operands -> one wide MXU-friendly slab.
            stack_ref[0:H, 0 * W:1 * W] = x1
            stack_ref[0:H, 1 * W:2 * W] = x2
            stack_ref[0:H, 2 * W:3 * W] = x1 * x1
            stack_ref[0:H, 3 * W:4 * W] = x2 * x2
            stack_ref[0:H, 4 * W:5 * W] = x1 * x2

            t = jnp.dot(A, stack_ref[0:H, 0:5 * W],
                        preferred_element_type=jnp.float32)          # (Hout, 5W)
            conv = jnp.dot(t, BtB, preferred_element_type=jnp.float32)  # (Hout, 5Wout)

            mu1 = conv[:, 0 * Wout:1 * Wout]
            mu2 = conv[:, 1 * Wout:2 * Wout]
            s11 = conv[:, 2 * Wout:3 * Wout]
            s22 = conv[:, 3 * Wout:4 * Wout]
            s12 = conv[:, 4 * Wout:5 * Wout]

            mu1_sq = mu1 * mu1
            mu2_sq = mu2 * mu2
            mu1_mu2 = mu1 * mu2
            sigma1_sq = s11 - mu1_sq
            sigma2_sq = s22 - mu2_sq
            sigma12 = s12 - mu1_mu2

            v1 = 2.0 * sigma12 + C2
            v2 = sigma1_sq + sigma2_sq + C2
            inv_v2 = pl.reciprocal(v2)              # shared reciprocal (EUP)
            cs_map = v1 * inv_v2
            ssim_map = (2.0 * mu1_mu2 + C1) * cs_map * pl.reciprocal(mu1_sq + mu2_sq + C1)

            sums_ref[0, 0:1, 2 * lvl:2 * lvl + 1] = jnp.sum(ssim_map, keepdims=True)
            sums_ref[0, 0:1, 2 * lvl + 1:2 * lvl + 2] = jnp.sum(cs_map, keepdims=True)

            if lvl < levels - 1:
                Hh, Wh = level_dims[lvl + 1][0], level_dims[lvl + 1][1]
                Ph = ph_refs[lvl][...]              # (Hh, H)
                PwB = pw_refs[lvl][...]             # (2W, 2Wh) block-diag
                stack_ref[0:H, 0:W] = x1
                stack_ref[0:H, W:2 * W] = x2
                tp = jnp.dot(Ph, stack_ref[0:H, 0:2 * W],
                             preferred_element_type=jnp.float32)       # (Hh, 2W)
                pooled = jnp.dot(tp, PwB, preferred_element_type=jnp.float32)  # (Hh, 2Wh)
                x1 = pooled[:, 0:Wh]
                x2 = pooled[:, Wh:2 * Wh]

    return kernel


def msssim(img1, img2, window_size=11, size_average=True, val_range=5):
    if val_range is None:
        # TODO(synk): val_range=None (dynamic range from img1 max/min) not implemented.
        raise NotImplementedError("val_range=None not supported")
    if not size_average:
        # TODO(synk): size_average=False (per-image ssim) not implemented.
        raise NotImplementedError("size_average=False not supported")

    B, C, H, W = img1.shape
    levels = 5
    weights = jnp.array([0.0448, 0.2856, 0.3001, 0.2363, 0.1333], jnp.float32)
    L = float(val_range)
    C1 = (0.01 * L) ** 2
    C2 = (0.03 * L) ** 2

    BC = B * C
    x1 = img1.reshape(BC, H, W).astype(jnp.float32)
    x2 = img2.reshape(BC, H, W).astype(jnp.float32)

    dims, As, Bts, Phs, Pws = _build_level_constants(H, W, window_size, levels)
    consts = [jnp.asarray(c) for c in (As + Bts + Phs + Pws)]

    img_spec = pl.BlockSpec((1, H, W), lambda b: (b, 0, 0))
    const_specs = [pl.BlockSpec(c.shape, lambda b: (0, 0)) for c in consts]
    out_spec = pl.BlockSpec((1, 1, 2 * levels), lambda b: (b, 0, 0))

    # explicit VMEM budget (re-derived, works within v7x 64 MiB / v5e scoped default)
    const_bytes = sum(int(np.prod(c.shape)) * 4 for c in consts)
    est = (const_bytes                      # constants, fetched once
           + 2 * 2 * H * W * 4              # x1/x2 blocks, double-buffered
           + H * 5 * W * 4                  # lane-stack scratch
           + 2 * levels * 4 * 2             # output blocks
           + (1 << 20))                     # headroom
    vmem_limit = int(min(max(2 * est, 8 << 20), 60 << 20))

    kernel = _make_msssim_kernel(dims, float(C1), float(C2))

    sums = pl.pallas_call(
        kernel,
        out_shape=jax.ShapeDtypeStruct((BC, 1, 2 * levels), jnp.float32),
        grid=(BC,),
        in_specs=[img_spec, img_spec] + const_specs,
        out_specs=out_spec,
        scratch_shapes=[pltpu.VMEM((H, 5 * W), jnp.float32)],
        compiler_params=pltpu.CompilerParams(
            dimension_semantics=("parallel",),
            vmem_limit_bytes=vmem_limit),
    )(x1, x2, *consts)

    # reduce per-image partial sums in JAX, then normalize per level.
    sums = sums.reshape(BC, 2 * levels).sum(axis=0)
    mssim_l, mcs_l = [], []
    for lvl in range(levels):
        _, _, hout, wout = dims[lvl]
        n = float(BC * hout * wout)
        mssim_l.append(sums[2 * lvl] / n)        # == ssim_map.mean()
        mcs_l.append(sums[2 * lvl + 1] / n)      # == torch.mean(v1 / v2)
    mssim_v = jnp.stack(mssim_l)
    mcs_v = jnp.stack(mcs_l)

    pow1 = mcs_v ** weights
    pow2 = mssim_v ** weights
    return jnp.prod(pow1[:-1] * pow2[-1])        # matches the reference exactly


class MSSSIM_wavelet:
    def __init__(self, window_size=11, size_average=True, channel=3, val_range=5):
        self.window_size = window_size
        self.size_average = size_average
        self.channel = channel
        self.val_range = val_range
        self._fn = jax.jit(lambda a, b: 1.0 - msssim(
            a, b,
            window_size=self.window_size,
            size_average=self.size_average,
            val_range=self.val_range))

    def __call__(self, img1, img2):
        return self._fn(img1, img2)


if __name__ == "__main__":
    key = jax.random.PRNGKey(0)
    k1, k2 = jax.random.split(key)
    # 32x32 spatial is the smallest size for which the reference PyTorch code
    # (5 pyramid levels, each followed by a 2x2 avg-pool) is well defined.
    B, C, H, W = 2, 3, 32, 32
    img1 = jax.random.uniform(k1, (B, C, H, W), jnp.float32, 0.0, 2.0)
    noise = jax.random.normal(k2, (B, C, H, W), jnp.float32) * 0.05
    img2 = jnp.clip(img1 + noise, 0.0, 2.0)

    loss_fn = MSSSIM_wavelet(window_size=11, size_average=True, channel=C, val_range=5)
    out = loss_fn(img1, img2)
    jax.block_until_ready(out)
    print("KERNEL_OK")
</pallas_src>

<mosaic_0001>
module attributes {stable_mosaic.version = 11 : i64} {
  func.func @kernel(%arg0: i32, %arg1: memref<1x32x32xf32, #tpu.memory_space<vmem>>, %arg2: memref<1x32x32xf32, #tpu.memory_space<vmem>>, %arg3: memref<22x32xf32, #tpu.memory_space<vmem>>, %arg4: memref<6x16xf32, #tpu.memory_space<vmem>>, %arg5: memref<1x8xf32, #tpu.memory_space<vmem>>, %arg6: memref<1x4xf32, #tpu.memory_space<vmem>>, %arg7: memref<1x2xf32, #tpu.memory_space<vmem>>, %arg8: memref<160x110xf32, #tpu.memory_space<vmem>>, %arg9: memref<80x30xf32, #tpu.memory_space<vmem>>, %arg10: memref<40x5xf32, #tpu.memory_space<vmem>>, %arg11: memref<20x5xf32, #tpu.memory_space<vmem>>, %arg12: memref<10x5xf32, #tpu.memory_space<vmem>>, %arg13: memref<16x32xf32, #tpu.memory_space<vmem>>, %arg14: memref<8x16xf32, #tpu.memory_space<vmem>>, %arg15: memref<4x8xf32, #tpu.memory_space<vmem>>, %arg16: memref<2x4xf32, #tpu.memory_space<vmem>>, %arg17: memref<64x32xf32, #tpu.memory_space<vmem>>, %arg18: memref<32x16xf32, #tpu.memory_space<vmem>>, %arg19: memref<16x8xf32, #tpu.memory_space<vmem>>, %arg20: memref<8x4xf32, #tpu.memory_space<vmem>>, %arg21: memref<1x1x10xf32, #tpu.memory_space<vmem>>, %arg22: memref<32x160xf32, #tpu.memory_space<vmem>>) attributes {dimension_semantics = [#tpu.dimension_semantics<parallel>], iteration_bounds = array<i64: 6>, scalar_prefetch = 0 : i64, scratch_operands = 1 : i64, tpu.core_type = #tpu.core_type<tc>, window_params = [{transform_indices = @transform_0, window_bounds = array<i64: 1, 32, 32>}, {transform_indices = @transform_1, window_bounds = array<i64: 1, 32, 32>}, {pipeline_mode = #tpu.pipeline_mode<synchronous>, transform_indices = @transform_2, window_bounds = array<i64: 22, 32>}, {pipeline_mode = #tpu.pipeline_mode<synchronous>, transform_indices = @transform_3, window_bounds = array<i64: 6, 16>}, {pipeline_mode = #tpu.pipeline_mode<synchronous>, transform_indices = @transform_4, window_bounds = array<i64: 1, 8>}, {pipeline_mode = #tpu.pipeline_mode<synchronous>, transform_indices = @transform_5, window_bounds = array<i64: 1, 4>}, {pipeline_mode = #tpu.pipeline_mode<synchronous>, transform_indices = @transform_6, window_bounds = array<i64: 1, 2>}, {pipeline_mode = #tpu.pipeline_mode<synchronous>, transform_indices = @transform_7, window_bounds = array<i64: 160, 110>}, {pipeline_mode = #tpu.pipeline_mode<synchronous>, transform_indices = @transform_8, window_bounds = array<i64: 80, 30>}, {pipeline_mode = #tpu.pipeline_mode<synchronous>, transform_indices = @transform_9, window_bounds = array<i64: 40, 5>}, {pipeline_mode = #tpu.pipeline_mode<synchronous>, transform_indices = @transform_10, window_bounds = array<i64: 20, 5>}, {pipeline_mode = #tpu.pipeline_mode<synchronous>, transform_indices = @transform_11, window_bounds = array<i64: 10, 5>}, {pipeline_mode = #tpu.pipeline_mode<synchronous>, transform_indices = @transform_12, window_bounds = array<i64: 16, 32>}, {pipeline_mode = #tpu.pipeline_mode<synchronous>, transform_indices = @transform_13, window_bounds = array<i64: 8, 16>}, {pipeline_mode = #tpu.pipeline_mode<synchronous>, transform_indices = @transform_14, window_bounds = array<i64: 4, 8>}, {pipeline_mode = #tpu.pipeline_mode<synchronous>, transform_indices = @transform_15, window_bounds = array<i64: 2, 4>}, {pipeline_mode = #tpu.pipeline_mode<synchronous>, transform_indices = @transform_16, window_bounds = array<i64: 64, 32>}, {pipeline_mode = #tpu.pipeline_mode<synchronous>, transform_indices = @transform_17, window_bounds = array<i64: 32, 16>}, {pipeline_mode = #tpu.pipeline_mode<synchronous>, transform_indices = @transform_18, window_bounds = array<i64: 16, 8>}, {pipeline_mode = #tpu.pipeline_mode<synchronous>, transform_indices = @transform_19, window_bounds = array<i64: 8, 4>}, {transform_indices = @transform_20, window_bounds = array<i64: 1, 1, 10>}]} {
    %c0 = arith.constant 0 : index
    %c0_0 = arith.constant 0 : index
    %c0_1 = arith.constant 0 : index
    %0 = vector.load %arg1[%c0, %c0_0, %c0_1] : memref<1x32x32xf32, #tpu.memory_space<vmem>>, vector<1x32x32xf32>
    %1 = vector.shape_cast %0 : vector<1x32x32xf32> to vector<32x32xf32>
    %c0_2 = arith.constant 0 : index
    %c0_3 = arith.constant 0 : index
    %c0_4 = arith.constant 0 : index
    %2 = vector.load %arg2[%c0_2, %c0_3, %c0_4] : memref<1x32x32xf32, #tpu.memory_space<vmem>>, vector<1x32x32xf32>
    %3 = vector.shape_cast %2 : vector<1x32x32xf32> to vector<32x32xf32>
    %c0_5 = arith.constant 0 : index
    %c0_6 = arith.constant 0 : index
    %4 = vector.load %arg3[%c0_5, %c0_6] : memref<22x32xf32, #tpu.memory_space<vmem>>, vector<22x32xf32>
    %c0_7 = arith.constant 0 : index
    %c0_8 = arith.constant 0 : index
    %5 = vector.load %arg8[%c0_7, %c0_8] : memref<160x110xf32, #tpu.memory_space<vmem>>, vector<160x110xf32>
    %c0_9 = arith.constant 0 : index
    %c0_10 = arith.constant 0 : index
    %6 = vector.load %arg22[%c0_9, %c0_10] : memref<32x160xf32, #tpu.memory_space<vmem>>, vector<32x32xf32>
    tpu.vector_store %arg22[%c0_9, %c0_10], %1 {strides = array<i32>} : memref<32x160xf32, #tpu.memory_space<vmem>>, vector<32x32xf32>,
    %c0_11 = arith.constant 0 : index
    %c32 = arith.constant 32 : index
    %7 = vector.load %arg22[%c0_11, %c32] : memref<32x160xf32, #tpu.memory_space<vmem>>, vector<32x32xf32>
    tpu.vector_store %arg22[%c0_11, %c32], %3 {strides = array<i32>} : memref<32x160xf32, #tpu.memory_space<vmem>>, vector<32x32xf32>,
    %8 = arith.mulf %1, %1 : vector<32x32xf32>
    %c0_12 = arith.constant 0 : index
    %c64 = arith.constant 64 : index
    %9 = vector.load %arg22[%c0_12, %c64] : memref<32x160xf32, #tpu.memory_space<vmem>>, vector<32x32xf32>
    tpu.vector_store %arg22[%c0_12, %c64], %8 {strides = array<i32>} : memref<32x160xf32, #tpu.memory_space<vmem>>, vector<32x32xf32>,
    %10 = arith.mulf %3, %3 : vector<32x32xf32>
    %c0_13 = arith.constant 0 : index
    %c96 = arith.constant 96 : index
    %11 = vector.load %arg22[%c0_13, %c96] : memref<32x160xf32, #tpu.memory_space<vmem>>, vector<32x32xf32>
    tpu.vector_store %arg22[%c0_13, %c96], %10 {strides = array<i32>} : memref<32x160xf32, #tpu.memory_space<vmem>>, vector<32x32xf32>,
    %12 = arith.mulf %1, %3 : vector<32x32xf32>
    %c0_14 = arith.constant 0 : index
    %c128 = arith.constant 128 : index
    %13 = vector.load %arg22[%c0_14, %c128] : memref<32x160xf32, #tpu.memory_space<vmem>>, vector<32x32xf32>
    tpu.vector_store %arg22[%c0_14, %c128], %12 {strides = array<i32>} : memref<32x160xf32, #tpu.memory_space<vmem>>, vector<32x32xf32>,
    %c0_15 = arith.constant 0 : index
    %c0_16 = arith.constant 0 : index
    %14 = vector.load %arg22[%c0_15, %c0_16] : memref<32x160xf32, #tpu.memory_space<vmem>>, vector<32x160xf32>
    %cst = arith.constant dense<0.000000e+00> : vector<22x160xf32>
    %15 = tpu.matmul %4, %14, %cst {dimension_numbers = #tpu.dot_dimension_numbers<[1], [0], [0], [1], [0, 0, 1, 1], [], []>} : vector<22x32xf32>, vector<32x160xf32>, vector<22x160xf32> -> vector<22x160xf32>
    %cst_17 = arith.constant dense<0.000000e+00> : vector<22x110xf32>
    %16 = tpu.matmul %15, %5, %cst_17 {dimension_numbers = #tpu.dot_dimension_numbers<[1], [0], [0], [1], [0, 0, 1, 1], [], []>} : vector<22x160xf32>, vector<160x110xf32>, vector<22x110xf32> -> vector<22x110xf32>
    %17 = vector.extract_strided_slice %16 {offsets = [0, 0], sizes = [22, 22], strides = [1, 1]} : vector<22x110xf32> to vector<22x22xf32>
    %18 = vector.extract_strided_slice %16 {offsets = [0, 22], sizes = [22, 22], strides = [1, 1]} : vector<22x110xf32> to vector<22x22xf32>
    %19 = vector.extract_strided_slice %16 {offsets = [0, 44], sizes = [22, 22], strides = [1, 1]} : vector<22x110xf32> to vector<22x22xf32>
    %20 = vector.extract_strided_slice %16 {offsets = [0, 66], sizes = [22, 22], strides = [1, 1]} : vector<22x110xf32> to vector<22x22xf32>
    %21 = vector.extract_strided_slice %16 {offsets = [0, 88], sizes = [22, 22], strides = [1, 1]} : vector<22x110xf32> to vector<22x22xf32>
    %22 = arith.mulf %17, %17 : vector<22x22xf32>
    %23 = arith.mulf %18, %18 : vector<22x22xf32>
    %24 = arith.mulf %17, %18 : vector<22x22xf32>
    %25 = arith.subf %19, %22 : vector<22x22xf32>
    %26 = arith.subf %20, %23 : vector<22x22xf32>
    %27 = arith.subf %21, %24 : vector<22x22xf32>
    %cst_18 = arith.constant 2.000000e+00 : f32
    %28 = vector.broadcast %cst_18 : f32 to vector<22x22xf32>
    %29 = arith.mulf %28, %27 : vector<22x22xf32>
    %cst_19 = arith.constant 2.250000e-02 : f32
    %30 = vector.broadcast %cst_19 : f32 to vector<22x22xf32>
    %31 = arith.addf %29, %30 : vector<22x22xf32>
    %32 = arith.addf %25, %26 : vector<22x22xf32>
    %cst_20 = arith.constant 2.250000e-02 : f32
    %33 = vector.broadcast %cst_20 : f32 to vector<22x22xf32>
    %34 = arith.addf %32, %33 : vector<22x22xf32>
    %35 = tpu.reciprocal %34 : vector<22x22xf32> -> vector<22x22xf32>
    %36 = arith.mulf %31, %35 : vector<22x22xf32>
    %cst_21 = arith.constant 2.000000e+00 : f32
    %37 = vector.broadcast %cst_21 : f32 to vector<22x22xf32>
    %38 = arith.mulf %37, %24 : vector<22x22xf32>
    %cst_22 = arith.constant 2.500000e-03 : f32
    %39 = vector.broadcast %cst_22 : f32 to vector<22x22xf32>
    %40 = arith.addf %38, %39 : vector<22x22xf32>
    %41 = arith.mulf %40, %36 : vector<22x22xf32>
    %42 = arith.addf %22, %23 : vector<22x22xf32>
    %cst_23 = arith.constant 2.500000e-03 : f32
    %43 = vector.broadcast %cst_23 : f32 to vector<22x22xf32>
    %44 = arith.addf %42, %43 : vector<22x22xf32>
    %45 = tpu.reciprocal %44 : vector<22x22xf32> -> vector<22x22xf32>
    %46 = arith.mulf %41, %45 : vector<22x22xf32>
    %47 = vector.shape_cast %46 : vector<22x22xf32> to vector<1x22x22xf32>
    %cst_24 = arith.constant dense<0.000000e+00> : vector<1xf32>
    %48 = vector.multi_reduction <add>, %47, %cst_24 [1, 2] : vector<1x22x22xf32> to vector<1xf32>
    %49 = vector.shape_cast %48 : vector<1xf32> to vector<1x1x1xf32>
    %50 = vector.extract %49[0, 0, 0] : f32 from vector<1x1x1xf32>
    %51 = vector.broadcast %50 : f32 to vector<1x1xf32>
    %c0_25 = arith.constant 0 : index
    %c0_26 = arith.constant 0 : index
    %c0_27 = arith.constant 0 : index
    %52 = vector.load %arg21[%c0_25, %c0_26, %c0_27] : memref<1x1x10xf32, #tpu.memory_space<vmem>>, vector<1x1x1xf32>
    %53 = vector.shape_cast %52 : vector<1x1x1xf32> to vector<1x1xf32>
    %54 = vector.shape_cast %51 : vector<1x1xf32> to vector<1x1x1xf32>
    tpu.vector_store %arg21[%c0_25, %c0_26, %c0_27], %54 {strides = array<i32>} : memref<1x1x10xf32, #tpu.memory_space<vmem>>, vector<1x1x1xf32>,
    %55 = vector.shape_cast %36 : vector<22x22xf32> to vector<1x22x22xf32>
    %cst_28 = arith.constant dense<0.000000e+00> : vector<1xf32>
    %56 = vector.multi_reduction <add>, %55, %cst_28 [1, 2] : vector<1x22x22xf32> to vector<1xf32>
    %57 = vector.shape_cast %56 : vector<1xf32> to vector<1x1x1xf32>
    %58 = vector.extract %57[0, 0, 0] : f32 from vector<1x1x1xf32>
    %59 = vector.broadcast %58 : f32 to vector<1x1xf32>
    %c0_29 = arith.constant 0 : index
    %c0_30 = arith.constant 0 : index
    %c1 = arith.constant 1 : index
    %60 = vector.load %arg21[%c0_29, %c0_30, %c1] : memref<1x1x10xf32, #tpu.memory_space<vmem>>, vector<1x1x1xf32>
    %61 = vector.shape_cast %60 : vector<1x1x1xf32> to vector<1x1xf32>
    %62 = vector.shape_cast %59 : vector<1x1xf32> to vector<1x1x1xf32>
    tpu.vector_store %arg21[%c0_29, %c0_30, %c1], %62 {strides = array<i32>} : memref<1x1x10xf32, #tpu.memory_space<vmem>>, vector<1x1x1xf32>,
    %c0_31 = arith.constant 0 : index
    %c0_32 = arith.constant 0 : index
    %63 = vector.load %arg13[%c0_31, %c0_32] : memref<16x32xf32, #tpu.memory_space<vmem>>, vector<16x32xf32>
    %c0_33 = arith.constant 0 : index
    %c0_34 = arith.constant 0 : index
    %64 = vector.load %arg17[%c0_33, %c0_34] : memref<64x32xf32, #tpu.memory_space<vmem>>, vector<64x32xf32>
    %c0_35 = arith.constant 0 : index
    %c0_36 = arith.constant 0 : index
    %65 = vector.load %arg22[%c0_35, %c0_36] : memref<32x160xf32, #tpu.memory_space<vmem>>, vector<32x32xf32>
    tpu.vector_store %arg22[%c0_35, %c0_36], %1 {strides = array<i32>} : memref<32x160xf32, #tpu.memory_space<vmem>>, vector<32x32xf32>,
    %c0_37 = arith.constant 0 : index
    %c32_38 = arith.constant 32 : index
    %66 = vector.load %arg22[%c0_37, %c32_38] : memref<32x160xf32, #tpu.memory_space<vmem>>, vector<32x32xf32>
    tpu.vector_store %arg22[%c0_37, %c32_38], %3 {strides = array<i32>} : memref<32x160xf32, #tpu.memory_space<vmem>>, vector<32x32xf32>,
    %c0_39 = arith.constant 0 : index
    %c0_40 = arith.constant 0 : index
    %67 = vector.load %arg22[%c0_39, %c0_40] : memref<32x160xf32, #tpu.memory_space<vmem>>, vector<32x64xf32>
    %cst_41 = arith.constant dense<0.000000e+00> : vector<16x64xf32>
    %68 = tpu.matmul %63, %67, %cst_41 {dimension_numbers = #tpu.dot_dimension_numbers<[1], [0], [0], [1], [0, 0, 1, 1], [], []>} : vector<16x32xf32>, vector<32x64xf32>, vector<16x64xf32> -> vector<16x64xf32>
    %cst_42 = arith.constant dense<0.000000e+00> : vector<16x32xf32>
    %69 = tpu.matmul %68, %64, %cst_42 {dimension_numbers = #tpu.dot_dimension_numbers<[1], [0], [0], [1], [0, 0, 1, 1], [], []>} : vector<16x64xf32>, vector<64x32xf32>, vector<16x32xf32> -> vector<16x32xf32>
    %70 = vector.extract_strided_slice %69 {offsets = [0, 0], sizes = [16, 16], strides = [1, 1]} : vector<16x32xf32> to vector<16x16xf32>
    %71 = vector.extract_strided_slice %69 {offsets = [0, 16], sizes = [16, 16], strides = [1, 1]} : vector<16x32xf32> to vector<16x16xf32>
    %c0_43 = arith.constant 0 : index
    %c0_44 = arith.constant 0 : index
    %72 = vector.load %arg4[%c0_43, %c0_44] : memref<6x16xf32, #tpu.memory_space<vmem>>, vector<6x16xf32>
    %c0_45 = arith.constant 0 : index
    %c0_46 = arith.constant 0 : index
    %73 = vector.load %arg9[%c0_45, %c0_46] : memref<80x30xf32, #tpu.memory_space<vmem>>, vector<80x30xf32>
    %c0_47 = arith.constant 0 : index
    %c0_48 = arith.constant 0 : index
    %74 = vector.load %arg22[%c0_47, %c0_48] : memref<32x160xf32, #tpu.memory_space<vmem>>, vector<16x16xf32>
    tpu.vector_store %arg22[%c0_47, %c0_48], %70 {strides = array<i32>} : memref<32x160xf32, #tpu.memory_space<vmem>>, vector<16x16xf32>,
    %c0_49 = arith.constant 0 : index
    %c16 = arith.constant 16 : index
    %75 = vector.load %arg22[%c0_49, %c16] : memref<32x160xf32, #tpu.memory_space<vmem>>, vector<16x16xf32>
    tpu.vector_store %arg22[%c0_49, %c16], %71 {strides = array<i32>} : memref<32x160xf32, #tpu.memory_space<vmem>>, vector<16x16xf32>,
    %76 = arith.mulf %70, %70 : vector<16x16xf32>
    %c0_50 = arith.constant 0 : index
    %c32_51 = arith.constant 32 : index
    %77 = vector.load %arg22[%c0_50, %c32_51] : memref<32x160xf32, #tpu.memory_space<vmem>>, vector<16x16xf32>
    tpu.vector_store %arg22[%c0_50, %c32_51], %76 {strides = array<i32>} : memref<32x160xf32, #tpu.memory_space<vmem>>, vector<16x16xf32>,
    %78 = arith.mulf %71, %71 : vector<16x16xf32>
    %c0_52 = arith.constant 0 : index
    %c48 = arith.constant 48 : index
    %79 = vector.load %arg22[%c0_52, %c48] : memref<32x160xf32, #tpu.memory_space<vmem>>, vector<16x16xf32>
    tpu.vector_store %arg22[%c0_52, %c48], %78 {strides = array<i32>} : memref<32x160xf32, #tpu.memory_space<vmem>>, vector<16x16xf32>,
    %80 = arith.mulf %70, %71 : vector<16x16xf32>
    %c0_53 = arith.constant 0 : index
    %c64_54 = arith.constant 64 : index
    %81 = vector.load %arg22[%c0_53, %c64_54] : memref<32x160xf32, #tpu.memory_space<vmem>>, vector<16x16xf32>
    tpu.vector_store %arg22[%c0_53, %c64_54], %80 {strides = array<i32>} : memref<32x160xf32, #tpu.memory_space<vmem>>, vector<16x16xf32>,
    %c0_55 = arith.constant 0 : index
    %c0_56 = arith.constant 0 : index
    %82 = vector.load %arg22[%c0_55, %c0_56] : memref<32x160xf32, #tpu.memory_space<vmem>>, vector<16x80xf32>
    %cst_57 = arith.constant dense<0.000000e+00> : vector<6x80xf32>
    %83 = tpu.matmul %72, %82, %cst_57 {dimension_numbers = #tpu.dot_dimension_numbers<[1], [0], [0], [1], [0, 0, 1, 1], [], []>} : vector<6x16xf32>, vector<16x80xf32>, vector<6x80xf32> -> vector<6x80xf32>
    %cst_58 = arith.constant dense<0.000000e+00> : vector<6x30xf32>
    %84 = tpu.matmul %83, %73, %cst_58 {dimension_numbers = #tpu.dot_dimension_numbers<[1], [0], [0], [1], [0, 0, 1, 1], [], []>} : vector<6x80xf32>, vector<80x30xf32>, vector<6x30xf32> -> vector<6x30xf32>
    %85 = vector.extract_strided_slice %84 {offsets = [0, 0], sizes = [6, 6], strides = [1, 1]} : vector<6x30xf32> to vector<6x6xf32>
    %86 = vector.extract_strided_slice %84 {offsets = [0, 6], sizes = [6, 6], strides = [1, 1]} : vector<6x30xf32> to vector<6x6xf32>
    %87 = vector.extract_strided_slice %84 {offsets = [0, 12], sizes = [6, 6], strides = [1, 1]} : vector<6x30xf32> to vector<6x6xf32>
    %88 = vector.extract_strided_slice %84 {offsets = [0, 18], sizes = [6, 6], strides = [1, 1]} : vector<6x30xf32> to vector<6x6xf32>
    %89 = vector.extract_strided_slice %84 {offsets = [0, 24], sizes = [6, 6], strides = [1, 1]} : vector<6x30xf32> to vector<6x6xf32>
    %90 = arith.mulf %85, %85 : vector<6x6xf32>
    %91 = arith.mulf %86, %86 : vector<6x6xf32>
    %92 = arith.mulf %85, %86 : vector<6x6xf32>
    %93 = arith.subf %87, %90 : vector<6x6xf32>
    %94 = arith.subf %88, %91 : vector<6x6xf32>
    %95 = arith.subf %89, %92 : vector<6x6xf32>
    %cst_59 = arith.constant 2.000000e+00 : f32
    %96 = vector.broadcast %cst_59 : f32 to vector<6x6xf32>
    %97 = arith.mulf %96, %95 : vector<6x6xf32>
    %cst_60 = arith.constant 2.250000e-02 : f32
    %98 = vector.broadcast %cst_60 : f32 to vector<6x6xf32>
    %99 = arith.addf %97, %98 : vector<6x6xf32>
    %100 = arith.addf %93, %94 : vector<6x6xf32>
    %cst_61 = arith.constant 2.250000e-02 : f32
    %101 = vector.broadcast %cst_61 : f32 to vector<6x6xf32>
    %102 = arith.addf %100, %101 : vector<6x6xf32>
    %103 = tpu.reciprocal %102 : vector<6x6xf32> -> vector<6x6xf32>
    %104 = arith.mulf %99, %103 : vector<6x6xf32>
    %cst_62 = arith.constant 2.000000e+00 : f32
    %105 = vector.broadcast %cst_62 : f32 to vector<6x6xf32>
    %106 = arith.mulf %105, %92 : vector<6x6xf32>
    %cst_63 = arith.constant 2.500000e-03 : f32
    %107 = vector.broadcast %cst_63 : f32 to vector<6x6xf32>
    %108 = arith.addf %106, %107 : vector<6x6xf32>
    %109 = arith.mulf %108, %104 : vector<6x6xf32>
    %110 = arith.addf %90, %91 : vector<6x6xf32>
    %cst_64 = arith.constant 2.500000e-03 : f32
    %111 = vector.broadcast %cst_64 : f32 to vector<6x6xf32>
    %112 = arith.addf %110, %111 : vector<6x6xf32>
    %113 = tpu.reciprocal %112 : vector<6x6xf32> -> vector<6x6xf32>
    %114 = arith.mulf %109, %113 : vector<6x6xf32>
    %115 = vector.shape_cast %114 : vector<6x6xf32> to vector<1x6x6xf32>
    %cst_65 = arith.constant dense<0.000000e+00> : vector<1xf32>
    %116 = vector.multi_reduction <add>, %115, %cst_65 [1, 2] : vector<1x6x6xf32> to vector<1xf32>
    %117 = vector.shape_cast %116 : vector<1xf32> to vector<1x1x1xf32>
    %118 = vector.extract %117[0, 0, 0] : f32 from vector<1x1x1xf32>
    %119 = vector.broadcast %118 : f32 to vector<1x1xf32>
    %c0_66 = arith.constant 0 : index
    %c0_67 = arith.constant 0 : index
    %c2 = arith.constant 2 : index
    %120 = vector.load %arg21[%c0_66, %c0_67, %c2] : memref<1x1x10xf32, #tpu.memory_space<vmem>>, vector<1x1x1xf32>
    %121 = vector.shape_cast %120 : vector<1x1x1xf32> to vector<1x1xf32>
    %122 = vector.shape_cast %119 : vector<1x1xf32> to vector<1x1x1xf32>
    tpu.vector_store %arg21[%c0_66, %c0_67, %c2], %122 {strides = array<i32>} : memref<1x1x10xf32, #tpu.memory_space<vmem>>, vector<1x1x1xf32>,
    %123 = vector.shape_cast %104 : vector<6x6xf32> to vector<1x6x6xf32>
    %cst_68 = arith.constant dense<0.000000e+00> : vector<1xf32>
    %124 = vector.multi_reduction <add>, %123, %cst_68 [1, 2] : vector<1x6x6xf32> to vector<1xf32>
    %125 = vector.shape_cast %124 : vector<1xf32> to vector<1x1x1xf32>
    %126 = vector.extract %125[0, 0, 0] : f32 from vector<1x1x1xf32>
    %127 = vector.broadcast %126 : f32 to vector<1x1xf32>
    %c0_69 = arith.constant 0 : index
    %c0_70 = arith.constant 0 : index
    %c3 = arith.constant 3 : index
    %128 = vector.load %arg21[%c0_69, %c0_70, %c3] : memref<1x1x10xf32, #tpu.memory_space<vmem>>, vector<1x1x1xf32>
    %129 = vector.shape_cast %128 : vector<1x1x1xf32> to vector<1x1xf32>
    %130 = vector.shape_cast %127 : vector<1x1xf32> to vector<1x1x1xf32>
    tpu.vector_store %arg21[%c0_69, %c0_70, %c3], %130 {strides = array<i32>} : memref<1x1x10xf32, #tpu.memory_space<vmem>>, vector<1x1x1xf32>,
    %c0_71 = arith.constant 0 : index
    %c0_72 = arith.constant 0 : index
    %131 = vector.load %arg14[%c0_71, %c0_72] : memref<8x16xf32, #tpu.memory_space<vmem>>, vector<8x16xf32>
    %c0_73 = arith.constant 0 : index
    %c0_74 = arith.constant 0 : index
    %132 = vector.load %arg18[%c0_73, %c0_74] : memref<32x16xf32, #tpu.memory_space<vmem>>, vector<32x16xf32>
    %c0_75 = arith.constant 0 : index
    %c0_76 = arith.constant 0 : index
    %133 = vector.load %arg22[%c0_75, %c0_76] : memref<32x160xf32, #tpu.memory_space<vmem>>, vector<16x16xf32>
    tpu.vector_store %arg22[%c0_75, %c0_76], %70 {strides = array<i32>} : memref<32x160xf32, #tpu.memory_space<vmem>>, vector<16x16xf32>,
    %c0_77 = arith.constant 0 : index
    %c16_78 = arith.constant 16 : index
    %134 = vector.load %arg22[%c0_77, %c16_78] : memref<32x160xf32, #tpu.memory_space<vmem>>, vector<16x16xf32>
    tpu.vector_store %arg22[%c0_77, %c16_78], %71 {strides = array<i32>} : memref<32x160xf32, #tpu.memory_space<vmem>>, vector<16x16xf32>,
    %c0_79 = arith.constant 0 : index
    %c0_80 = arith.constant 0 : index
    %135 = vector.load %arg22[%c0_79, %c0_80] : memref<32x160xf32, #tpu.memory_space<vmem>>, vector<16x32xf32>
    %cst_81 = arith.constant dense<0.000000e+00> : vector<8x32xf32>
    %136 = tpu.matmul %131, %135, %cst_81 {dimension_numbers = #tpu.dot_dimension_numbers<[1], [0], [0], [1], [0, 0, 1, 1], [], []>} : vector<8x16xf32>, vector<16x32xf32>, vector<8x32xf32> -> vector<8x32xf32>
    %cst_82 = arith.constant dense<0.000000e+00> : vector<8x16xf32>
    %137 = tpu.matmul %136, %132, %cst_82 {dimension_numbers = #tpu.dot_dimension_numbers<[1], [0], [0], [1], [0, 0, 1, 1], [], []>} : vector<8x32xf32>, vector<32x16xf32>, vector<8x16xf32> -> vector<8x16xf32>
    %138 = vector.extract_strided_slice %137 {offsets = [0, 0], sizes = [8, 8], strides = [1, 1]} : vector<8x16xf32> to vector<8x8xf32>
    %139 = vector.extract_strided_slice %137 {offsets = [0, 8], sizes = [8, 8], strides = [1, 1]} : vector<8x16xf32> to vector<8x8xf32>
    %c0_83 = arith.constant 0 : index
    %c0_84 = arith.constant 0 : index
    %140 = vector.load %arg5[%c0_83, %c0_84] : memref<1x8xf32, #tpu.memory_space<vmem>>, vector<1x8xf32>
    %c0_85 = arith.constant 0 : index
    %c0_86 = arith.constant 0 : index
    %141 = vector.load %arg10[%c0_85, %c0_86] : memref<40x5xf32, #tpu.memory_space<vmem>>, vector<40x5xf32>
    %c0_87 = arith.constant 0 : index
    %c0_88 = arith.constant 0 : index
    %142 = vector.load %arg22[%c0_87, %c0_88] : memref<32x160xf32, #tpu.memory_space<vmem>>, vector<8x8xf32>
    tpu.vector_store %arg22[%c0_87, %c0_88], %138 {strides = array<i32>} : memref<32x160xf32, #tpu.memory_space<vmem>>, vector<8x8xf32>,
    %c0_89 = arith.constant 0 : index
    %c8 = arith.constant 8 : index
    %143 = vector.load %arg22[%c0_89, %c8] : memref<32x160xf32, #tpu.memory_space<vmem>>, vector<8x8xf32>
    tpu.vector_store %arg22[%c0_89, %c8], %139 {strides = array<i32>} : memref<32x160xf32, #tpu.memory_space<vmem>>, vector<8x8xf32>,
    %144 = arith.mulf %138, %138 : vector<8x8xf32>
    %c0_90 = arith.constant 0 : index
    %c16_91 = arith.constant 16 : index
    %145 = vector.load %arg22[%c0_90, %c16_91] : memref<32x160xf32, #tpu.memory_space<vmem>>, vector<8x8xf32>
    tpu.vector_store %arg22[%c0_90, %c16_91], %144 {strides = array<i32>} : memref<32x160xf32, #tpu.memory_space<vmem>>, vector<8x8xf32>,
    %146 = arith.mulf %139, %139 : vector<8x8xf32>
    %c0_92 = arith.constant 0 : index
    %c24 = arith.constant 24 : index
    %147 = vector.load %arg22[%c0_92, %c24] : memref<32x160xf32, #tpu.memory_space<vmem>>, vector<8x8xf32>
    tpu.vector_store %arg22[%c0_92, %c24], %146 {strides = array<i32>} : memref<32x160xf32, #tpu.memory_space<vmem>>, vector<8x8xf32>,
    %148 = arith.mulf %138, %139 : vector<8x8xf32>
    %c0_93 = arith.constant 0 : index
    %c32_94 = arith.constant 32 : index
    %149 = vector.load %arg22[%c0_93, %c32_94] : memref<32x160xf32, #tpu.memory_space<vmem>>, vector<8x8xf32>
    tpu.vector_store %arg22[%c0_93, %c32_94], %148 {strides = array<i32>} : memref<32x160xf32, #tpu.memory_space<vmem>>, vector<8x8xf32>,
    %c0_95 = arith.constant 0 : index
    %c0_96 = arith.constant 0 : index
    %150 = vector.load %arg22[%c0_95, %c0_96] : memref<32x160xf32, #tpu.memory_space<vmem>>, vector<8x40xf32>
    %cst_97 = arith.constant dense<0.000000e+00> : vector<1x40xf32>
    %151 = tpu.matmul %140, %150, %cst_97 {dimension_numbers = #tpu.dot_dimension_numbers<[1], [0], [0], [1], [0, 0, 1, 1], [], []>} : vector<1x8xf32>, vector<8x40xf32>, vector<1x40xf32> -> vector<1x40xf32>
    %cst_98 = arith.constant dense<0.000000e+00> : vector<1x5xf32>
    %152 = tpu.matmul %151, %141, %cst_98 {dimension_numbers = #tpu.dot_dimension_numbers<[1], [0], [0], [1], [0, 0, 1, 1], [], []>} : vector<1x40xf32>, vector<40x5xf32>, vector<1x5xf32> -> vector<1x5xf32>
    %153 = vector.extract_strided_slice %152 {offsets = [0, 0], sizes = [1, 1], strides = [1, 1]} : vector<1x5xf32> to vector<1x1xf32>
    %154 = vector.extract_strided_slice %152 {offsets = [0, 1], sizes = [1, 1], strides = [1, 1]} : vector<1x5xf32> to vector<1x1xf32>
    %155 = vector.extract_strided_slice %152 {offsets = [0, 2], sizes = [1, 1], strides = [1, 1]} : vector<1x5xf32> to vector<1x1xf32>
    %156 = vector.extract_strided_slice %152 {offsets = [0, 3], sizes = [1, 1], strides = [1, 1]} : vector<1x5xf32> to vector<1x1xf32>
    %157 = vector.extract_strided_slice %152 {offsets = [0, 4], sizes = [1, 1], strides = [1, 1]} : vector<1x5xf32> to vector<1x1xf32>
    %158 = arith.mulf %153, %153 : vector<1x1xf32>
    %159 = arith.mulf %154, %154 : vector<1x1xf32>
    %160 = arith.mulf %153, %154 : vector<1x1xf32>
    %161 = arith.subf %155, %158 : vector<1x1xf32>
    %162 = arith.subf %156, %159 : vector<1x1xf32>
    %163 = arith.subf %157, %160 : vector<1x1xf32>
    %cst_99 = arith.constant 2.000000e+00 : f32
    %164 = vector.broadcast %cst_99 : f32 to vector<1x1xf32>
    %165 = arith.mulf %164, %163 : vector<1x1xf32>
    %cst_100 = arith.constant 2.250000e-02 : f32
    %166 = vector.broadcast %cst_100 : f32 to vector<1x1xf32>
    %167 = arith.addf %165, %166 : vector<1x1xf32>
    %168 = arith.addf %161, %162 : vector<1x1xf32>
    %cst_101 = arith.constant 2.250000e-02 : f32
    %169 = vector.broadcast %cst_101 : f32 to vector<1x1xf32>
    %170 = arith.addf %168, %169 : vector<1x1xf32>
    %171 = tpu.reciprocal %170 : vector<1x1xf32> -> vector<1x1xf32>
    %172 = arith.mulf %167, %171 : vector<1x1xf32>
    %cst_102 = arith.constant 2.000000e+00 : f32
    %173 = vector.broadcast %cst_102 : f32 to vector<1x1xf32>
    %174 = arith.mulf %173, %160 : vector<1x1xf32>
    %cst_103 = arith.constant 2.500000e-03 : f32
    %175 = vector.broadcast %cst_103 : f32 to vector<1x1xf32>
    %176 = arith.addf %174, %175 : vector<1x1xf32>
    %177 = arith.mulf %176, %172 : vector<1x1xf32>
    %178 = arith.addf %158, %159 : vector<1x1xf32>
    %cst_104 = arith.constant 2.500000e-03 : f32
    %179 = vector.broadcast %cst_104 : f32 to vector<1x1xf32>
    %180 = arith.addf %178, %179 : vector<1x1xf32>
    %181 = tpu.reciprocal %180 : vector<1x1xf32> -> vector<1x1xf32>
    %182 = arith.mulf %177, %181 : vector<1x1xf32>
    %183 = vector.shape_cast %182 : vector<1x1xf32> to vector<1x1x1xf32>
    %cst_105 = arith.constant dense<0.000000e+00> : vector<1xf32>
    %184 = vector.multi_reduction <add>, %183, %cst_105 [1, 2] : vector<1x1x1xf32> to vector<1xf32>
    %185 = vector.shape_cast %184 : vector<1xf32> to vector<1x1x1xf32>
    %186 = vector.extract %185[0, 0, 0] : f32 from vector<1x1x1xf32>
    %187 = vector.broadcast %186 : f32 to vector<1x1xf32>
    %c0_106 = arith.constant 0 : index
    %c0_107 = arith.constant 0 : index
    %c4 = arith.constant 4 : index
    %188 = vector.load %arg21[%c0_106, %c0_107, %c4] : memref<1x1x10xf32, #tpu.memory_space<vmem>>, vector<1x1x1xf32>
    %189 = vector.shape_cast %188 : vector<1x1x1xf32> to vector<1x1xf32>
    %190 = vector.shape_cast %187 : vector<1x1xf32> to vector<1x1x1xf32>
    tpu.vector_store %arg21[%c0_106, %c0_107, %c4], %190 {strides = array<i32>} : memref<1x1x10xf32, #tpu.memory_space<vmem>>, vector<1x1x1xf32>,
    %191 = vector.shape_cast %172 : vector<1x1xf32> to vector<1x1x1xf32>
    %cst_108 = arith.constant dense<0.000000e+00> : vector<1xf32>
    %192 = vector.multi_reduction <add>, %191, %cst_108 [1, 2] : vector<1x1x1xf32> to vector<1xf32>
    %193 = vector.shape_cast %192 : vector<1xf32> to vector<1x1x1xf32>
    %194 = vector.extract %193[0, 0, 0] : f32 from vector<1x1x1xf32>
    %195 = vector.broadcast %194 : f32 to vector<1x1xf32>
    %c0_109 = arith.constant 0 : index
    %c0_110 = arith.constant 0 : index
    %c5 = arith.constant 5 : index
    %196 = vector.load %arg21[%c0_109, %c0_110, %c5] : memref<1x1x10xf32, #tpu.memory_space<vmem>>, vector<1x1x1xf32>
    %197 = vector.shape_cast %196 : vector<1x1x1xf32> to vector<1x1xf32>
    %198 = vector.shape_cast %195 : vector<1x1xf32> to vector<1x1x1xf32>
    tpu.vector_store %arg21[%c0_109, %c0_110, %c5], %198 {strides = array<i32>} : memref<1x1x10xf32, #tpu.memory_space<vmem>>, vector<1x1x1xf32>,
    %c0_111 = arith.constant 0 : index
    %c0_112 = arith.constant 0 : index
    %199 = vector.load %arg15[%c0_111, %c0_112] : memref<4x8xf32, #tpu.memory_space<vmem>>, vector<4x8xf32>
    %c0_113 = arith.constant 0 : index
    %c0_114 = arith.constant 0 : index
    %200 = vector.load %arg19[%c0_113, %c0_114] : memref<16x8xf32, #tpu.memory_space<vmem>>, vector<16x8xf32>
    %c0_115 = arith.constant 0 : index
    %c0_116 = arith.constant 0 : index
    %201 = vector.load %arg22[%c0_115, %c0_116] : memref<32x160xf32, #tpu.memory_space<vmem>>, vector<8x8xf32>
    tpu.vector_store %arg22[%c0_115, %c0_116], %138 {strides = array<i32>} : memref<32x160xf32, #tpu.memory_space<vmem>>, vector<8x8xf32>,
    %c0_117 = arith.constant 0 : index
    %c8_118 = arith.constant 8 : index
    %202 = vector.load %arg22[%c0_117, %c8_118] : memref<32x160xf32, #tpu.memory_space<vmem>>, vector<8x8xf32>
    tpu.vector_store %arg22[%c0_117, %c8_118], %139 {strides = array<i32>} : memref<32x160xf32, #tpu.memory_space<vmem>>, vector<8x8xf32>,
    %c0_119 = arith.constant 0 : index
    %c0_120 = arith.constant 0 : index
    %203 = vector.load %arg22[%c0_119, %c0_120] : memref<32x160xf32, #tpu.memory_space<vmem>>, vector<8x16xf32>
    %cst_121 = arith.constant dense<0.000000e+00> : vector<4x16xf32>
    %204 = tpu.matmul %199, %203, %cst_121 {dimension_numbers = #tpu.dot_dimension_numbers<[1], [0], [0], [1], [0, 0, 1, 1], [], []>} : vector<4x8xf32>, vector<8x16xf32>, vector<4x16xf32> -> vector<4x16xf32>
    %cst_122 = arith.constant dense<0.000000e+00> : vector<4x8xf32>
    %205 = tpu.matmul %204, %200, %cst_122 {dimension_numbers = #tpu.dot_dimension_numbers<[1], [0], [0], [1], [0, 0, 1, 1], [], []>} : vector<4x16xf32>, vector<16x8xf32>, vector<4x8xf32> -> vector<4x8xf32>
    %206 = vector.extract_strided_slice %205 {offsets = [0, 0], sizes = [4, 4], strides = [1, 1]} : vector<4x8xf32> to vector<4x4xf32>
    %207 = vector.extract_strided_slice %205 {offsets = [0, 4], sizes = [4, 4], strides = [1, 1]} : vector<4x8xf32> to vector<4x4xf32>
    %c0_123 = arith.constant 0 : index
    %c0_124 = arith.constant 0 : index
    %208 = vector.load %arg6[%c0_123, %c0_124] : memref<1x4xf32, #tpu.memory_space<vmem>>, vector<1x4xf32>
    %c0_125 = arith.constant 0 : index
    %c0_126 = arith.constant 0 : index
    %209 = vector.load %arg11[%c0_125, %c0_126] : memref<20x5xf32, #tpu.memory_space<vmem>>, vector<20x5xf32>
    %c0_127 = arith.constant 0 : index
    %c0_128 = arith.constant 0 : index
    %210 = vector.load %arg22[%c0_127, %c0_128] : memref<32x160xf32, #tpu.memory_space<vmem>>, vector<4x4xf32>
    tpu.vector_store %arg22[%c0_127, %c0_128], %206 {strides = array<i32>} : memref<32x160xf32, #tpu.memory_space<vmem>>, vector<4x4xf32>,
    %c0_129 = arith.constant 0 : index
    %c4_130 = arith.constant 4 : index
    %211 = vector.load %arg22[%c0_129, %c4_130] : memref<32x160xf32, #tpu.memory_space<vmem>>, vector<4x4xf32>
    tpu.vector_store %arg22[%c0_129, %c4_130], %207 {strides = array<i32>} : memref<32x160xf32, #tpu.memory_space<vmem>>, vector<4x4xf32>,
    %212 = arith.mulf %206, %206 : vector<4x4xf32>
    %c0_131 = arith.constant 0 : index
    %c8_132 = arith.constant 8 : index
    %213 = vector.load %arg22[%c0_131, %c8_132] : memref<32x160xf32, #tpu.memory_space<vmem>>, vector<4x4xf32>
    tpu.vector_store %arg22[%c0_131, %c8_132], %212 {strides = array<i32>} : memref<32x160xf32, #tpu.memory_space<vmem>>, vector<4x4xf32>,
    %214 = arith.mulf %207, %207 : vector<4x4xf32>
    %c0_133 = arith.constant 0 : index
    %c12 = arith.constant 12 : index
    %215 = vector.load %arg22[%c0_133, %c12] : memref<32x160xf32, #tpu.memory_space<vmem>>, vector<4x4xf32>
    tpu.vector_store %arg22[%c0_133, %c12], %214 {strides = array<i32>} : memref<32x160xf32, #tpu.memory_space<vmem>>, vector<4x4xf32>,
    %216 = arith.mulf %206, %207 : vector<4x4xf32>
    %c0_134 = arith.constant 0 : index
    %c16_135 = arith.constant 16 : index
    %217 = vector.load %arg22[%c0_134, %c16_135] : memref<32x160xf32, #tpu.memory_space<vmem>>, vector<4x4xf32>
    tpu.vector_store %arg22[%c0_134, %c16_135], %216 {strides = array<i32>} : memref<32x160xf32, #tpu.memory_space<vmem>>, vector<4x4xf32>,
    %c0_136 = arith.constant 0 : index
    %c0_137 = arith.constant 0 : index
    %218 = vector.load %arg22[%c0_136, %c0_137] : memref<32x160xf32, #tpu.memory_space<vmem>>, vector<4x20xf32>
    %cst_138 = arith.constant dense<0.000000e+00> : vector<1x20xf32>
    %219 = tpu.matmul %208, %218, %cst_138 {dimension_numbers = #tpu.dot_dimension_numbers<[1], [0], [0], [1], [0, 0, 1, 1], [], []>} : vector<1x4xf32>, vector<4x20xf32>, vector<1x20xf32> -> vector<1x20xf32>
    %cst_139 = arith.constant dense<0.000000e+00> : vector<1x5xf32>
    %220 = tpu.matmul %219, %209, %cst_139 {dimension_numbers = #tpu.dot_dimension_numbers<[1], [0], [0], [1], [0, 0, 1, 1], [], []>} : vector<1x20xf32>, vector<20x5xf32>, vector<1x5xf32> -> vector<1x5xf32>
    %221 = vector.extract_strided_slice %220 {offsets = [0, 0], sizes = [1, 1], strides = [1, 1]} : vector<1x5xf32> to vector<1x1xf32>
    %222 = vector.extract_strided_slice %220 {offsets = [0, 1], sizes = [1, 1], strides = [1, 1]} : vector<1x5xf32> to vector<1x1xf32>
    %223 = vector.extract_strided_slice %220 {offsets = [0, 2], sizes = [1, 1], strides = [1, 1]} : vector<1x5xf32> to vector<1x1xf32>
    %224 = vector.extract_strided_slice %220 {offsets = [0, 3], sizes = [1, 1], strides = [1, 1]} : vector<1x5xf32> to vector<1x1xf32>
    %225 = vector.extract_strided_slice %220 {offsets = [0, 4], sizes = [1, 1], strides = [1, 1]} : vector<1x5xf32> to vector<1x1xf32>
    %226 = arith.mulf %221, %221 : vector<1x1xf32>
    %227 = arith.mulf %222, %222 : vector<1x1xf32>
    %228 = arith.mulf %221, %222 : vector<1x1xf32>
    %229 = arith.subf %223, %226 : vector<1x1xf32>
    %230 = arith.subf %224, %227 : vector<1x1xf32>
    %231 = arith.subf %225, %228 : vector<1x1xf32>
    %cst_140 = arith.constant 2.000000e+00 : f32
    %232 = vector.broadcast %cst_140 : f32 to vector<1x1xf32>
    %233 = arith.mulf %232, %231 : vector<1x1xf32>
    %cst_141 = arith.constant 2.250000e-02 : f32
    %234 = vector.broadcast %cst_141 : f32 to vector<1x1xf32>
    %235 = arith.addf %233, %234 : vector<1x1xf32>
    %236 = arith.addf %229, %230 : vector<1x1xf32>
    %cst_142 = arith.constant 2.250000e-02 : f32
    %237 = vector.broadcast %cst_142 : f32 to vector<1x1xf32>
    %238 = arith.addf %236, %237 : vector<1x1xf32>
    %239 = tpu.reciprocal %238 : vector<1x1xf32> -> vector<1x1xf32>
    %240 = arith.mulf %235, %239 : vector<1x1xf32>
    %cst_143 = arith.constant 2.000000e+00 : f32
    %241 = vector.broadcast %cst_143 : f32 to vector<1x1xf32>
    %242 = arith.mulf %241, %228 : vector<1x1xf32>
    %cst_144 = arith.constant 2.500000e-03 : f32
    %243 = vector.broadcast %cst_144 : f32 to vector<1x1xf32>
    %244 = arith.addf %242, %243 : vector<1x1xf32>
    %245 = arith.mulf %244, %240 : vector<1x1xf32>
    %246 = arith.addf %226, %227 : vector<1x1xf32>
    %cst_145 = arith.constant 2.500000e-03 : f32
    %247 = vector.broadcast %cst_145 : f32 to vector<1x1xf32>
    %248 = arith.addf %246, %247 : vector<1x1xf32>
    %249 = tpu.reciprocal %248 : vector<1x1xf32> -> vector<1x1xf32>
    %250 = arith.mulf %245, %249 : vector<1x1xf32>
    %251 = vector.shape_cast %250 : vector<1x1xf32> to vector<1x1x1xf32>
    %cst_146 = arith.constant dense<0.000000e+00> : vector<1xf32>
    %252 = vector.multi_reduction <add>, %251, %cst_146 [1, 2] : vector<1x1x1xf32> to vector<1xf32>
    %253 = vector.shape_cast %252 : vector<1xf32> to vector<1x1x1xf32>
    %254 = vector.extract %253[0, 0, 0] : f32 from vector<1x1x1xf32>
    %255 = vector.broadcast %254 : f32 to vector<1x1xf32>
    %c0_147 = arith.constant 0 : index
    %c0_148 = arith.constant 0 : index
    %c6 = arith.constant 6 : index
    %256 = vector.load %arg21[%c0_147, %c0_148, %c6] : memref<1x1x10xf32, #tpu.memory_space<vmem>>, vector<1x1x1xf32>
    %257 = vector.shape_cast %256 : vector<1x1x1xf32> to vector<1x1xf32>
    %258 = vector.shape_cast %255 : vector<1x1xf32> to vector<1x1x1xf32>
    tpu.vector_store %arg21[%c0_147, %c0_148, %c6], %258 {strides = array<i32>} : memref<1x1x10xf32, #tpu.memory_space<vmem>>, vector<1x1x1xf32>,
    %259 = vector.shape_cast %240 : vector<1x1xf32> to vector<1x1x1xf32>
    %cst_149 = arith.constant dense<0.000000e+00> : vector<1xf32>
    %260 = vector.multi_reduction <add>, %259, %cst_149 [1, 2] : vector<1x1x1xf32> to vector<1xf32>
    %261 = vector.shape_cast %260 : vector<1xf32> to vector<1x1x1xf32>
    %262 = vector.extract %261[0, 0, 0] : f32 from vector<1x1x1xf32>
    %263 = vector.broadcast %262 : f32 to vector<1x1xf32>
    %c0_150 = arith.constant 0 : index
    %c0_151 = arith.constant 0 : index
    %c7 = arith.constant 7 : index
    %264 = vector.load %arg21[%c0_150, %c0_151, %c7] : memref<1x1x10xf32, #tpu.memory_space<vmem>>, vector<1x1x1xf32>
    %265 = vector.shape_cast %264 : vector<1x1x1xf32> to vector<1x1xf32>
    %266 = vector.shape_cast %263 : vector<1x1xf32> to vector<1x1x1xf32>
    tpu.vector_store %arg21[%c0_150, %c0_151, %c7], %266 {strides = array<i32>} : memref<1x1x10xf32, #tpu.memory_space<vmem>>, vector<1x1x1xf32>,
    %c0_152 = arith.constant 0 : index
    %c0_153 = arith.constant 0 : index
    %267 = vector.load %arg16[%c0_152, %c0_153] : memref<2x4xf32, #tpu.memory_space<vmem>>, vector<2x4xf32>
    %c0_154 = arith.constant 0 : index
    %c0_155 = arith.constant 0 : index
    %268 = vector.load %arg20[%c0_154, %c0_155] : memref<8x4xf32, #tpu.memory_space<vmem>>, vector<8x4xf32>
    %c0_156 = arith.constant 0 : index
    %c0_157 = arith.constant 0 : index
    %269 = vector.load %arg22[%c0_156, %c0_157] : memref<32x160xf32, #tpu.memory_space<vmem>>, vector<4x4xf32>
    tpu.vector_store %arg22[%c0_156, %c0_157], %206 {strides = array<i32>} : memref<32x160xf32, #tpu.memory_space<vmem>>, vector<4x4xf32>,
    %c0_158 = arith.constant 0 : index
    %c4_159 = arith.constant 4 : index
    %270 = vector.load %arg22[%c0_158, %c4_159] : memref<32x160xf32, #tpu.memory_space<vmem>>, vector<4x4xf32>
    tpu.vector_store %arg22[%c0_158, %c4_159], %207 {strides = array<i32>} : memref<32x160xf32, #tpu.memory_space<vmem>>, vector<4x4xf32>,
    %c0_160 = arith.constant 0 : index
    %c0_161 = arith.constant 0 : index
    %271 = vector.load %arg22[%c0_160, %c0_161] : memref<32x160xf32, #tpu.memory_space<vmem>>, vector<4x8xf32>
    %cst_162 = arith.constant dense<0.000000e+00> : vector<2x8xf32>
    %272 = tpu.matmul %267, %271, %cst_162 {dimension_numbers = #tpu.dot_dimension_numbers<[1], [0], [0], [1], [0, 0, 1, 1], [], []>} : vector<2x4xf32>, vector<4x8xf32>, vector<2x8xf32> -> vector<2x8xf32>
    %cst_163 = arith.constant dense<0.000000e+00> : vector<2x4xf32>
    %273 = tpu.matmul %272, %268, %cst_163 {dimension_numbers = #tpu.dot_dimension_numbers<[1], [0], [0], [1], [0, 0, 1, 1], [], []>} : vector<2x8xf32>, vector<8x4xf32>, vector<2x4xf32> -> vector<2x4xf32>
    %274 = vector.extract_strided_slice %273 {offsets = [0, 0], sizes = [2, 2], strides = [1, 1]} : vector<2x4xf32> to vector<2x2xf32>
    %275 = vector.extract_strided_slice %273 {offsets = [0, 2], sizes = [2, 2], strides = [1, 1]} : vector<2x4xf32> to vector<2x2xf32>
    %c0_164 = arith.constant 0 : index
    %c0_165 = arith.constant 0 : index
    %276 = vector.load %arg7[%c0_164, %c0_165] : memref<1x2xf32, #tpu.memory_space<vmem>>, vector<1x2xf32>
    %c0_166 = arith.constant 0 : index
    %c0_167 = arith.constant 0 : index
    %277 = vector.load %arg12[%c0_166, %c0_167] : memref<10x5xf32, #tpu.memory_space<vmem>>, vector<10x5xf32>
    %c0_168 = arith.constant 0 : index
    %c0_169 = arith.constant 0 : index
    %278 = vector.load %arg22[%c0_168, %c0_169] : memref<32x160xf32, #tpu.memory_space<vmem>>, vector<2x2xf32>
    tpu.vector_store %arg22[%c0_168, %c0_169], %274 {strides = array<i32>} : memref<32x160xf32, #tpu.memory_space<vmem>>, vector<2x2xf32>,
    %c0_170 = arith.constant 0 : index
    %c2_171 = arith.constant 2 : index
    %279 = vector.load %arg22[%c0_170, %c2_171] : memref<32x160xf32, #tpu.memory_space<vmem>>, vector<2x2xf32>
    tpu.vector_store %arg22[%c0_170, %c2_171], %275 {strides = array<i32>} : memref<32x160xf32, #tpu.memory_space<vmem>>, vector<2x2xf32>,
    %280 = arith.mulf %274, %274 : vector<2x2xf32>
    %c0_172 = arith.constant 0 : index
    %c4_173 = arith.constant 4 : index
    %281 = vector.load %arg22[%c0_172, %c4_173] : memref<32x160xf32, #tpu.memory_space<vmem>>, vector<2x2xf32>
    tpu.vector_store %arg22[%c0_172, %c4_173], %280 {strides = array<i32>} : memref<32x160xf32, #tpu.memory_space<vmem>>, vector<2x2xf32>,
    %282 = arith.mulf %275, %275 : vector<2x2xf32>
    %c0_174 = arith.constant 0 : index
    %c6_175 = arith.constant 6 : index
    %283 = vector.load %arg22[%c0_174, %c6_175] : memref<32x160xf32, #tpu.memory_space<vmem>>, vector<2x2xf32>
    tpu.vector_store %arg22[%c0_174, %c6_175], %282 {strides = array<i32>} : memref<32x160xf32, #tpu.memory_space<vmem>>, vector<2x2xf32>,
    %284 = arith.mulf %274, %275 : vector<2x2xf32>
    %c0_176 = arith.constant 0 : index
    %c8_177 = arith.constant 8 : index
    %285 = vector.load %arg22[%c0_176, %c8_177] : memref<32x160xf32, #tpu.memory_space<vmem>>, vector<2x2xf32>
    tpu.vector_store %arg22[%c0_176, %c8_177], %284 {strides = array<i32>} : memref<32x160xf32, #tpu.memory_space<vmem>>, vector<2x2xf32>,
    %c0_178 = arith.constant 0 : index
    %c0_179 = arith.constant 0 : index
    %286 = vector.load %arg22[%c0_178, %c0_179] : memref<32x160xf32, #tpu.memory_space<vmem>>, vector<2x10xf32>
    %cst_180 = arith.constant dense<0.000000e+00> : vector<1x10xf32>
    %287 = tpu.matmul %276, %286, %cst_180 {dimension_numbers = #tpu.dot_dimension_numbers<[1], [0], [0], [1], [0, 0, 1, 1], [], []>} : vector<1x2xf32>, vector<2x10xf32>, vector<1x10xf32> -> vector<1x10xf32>
    %cst_181 = arith.constant dense<0.000000e+00> : vector<1x5xf32>
    %288 = tpu.matmul %287, %277, %cst_181 {dimension_numbers = #tpu.dot_dimension_numbers<[1], [0], [0], [1], [0, 0, 1, 1], [], []>} : vector<1x10xf32>, vector<10x5xf32>, vector<1x5xf32> -> vector<1x5xf32>
    %289 = vector.extract_strided_slice %288 {offsets = [0, 0], sizes = [1, 1], strides = [1, 1]} : vector<1x5xf32> to vector<1x1xf32>
    %290 = vector.extract_strided_slice %288 {offsets = [0, 1], sizes = [1, 1], strides = [1, 1]} : vector<1x5xf32> to vector<1x1xf32>
    %291 = vector.extract_strided_slice %288 {offsets = [0, 2], sizes = [1, 1], strides = [1, 1]} : vector<1x5xf32> to vector<1x1xf32>
    %292 = vector.extract_strided_slice %288 {offsets = [0, 3], sizes = [1, 1], strides = [1, 1]} : vector<1x5xf32> to vector<1x1xf32>
    %293 = vector.extract_strided_slice %288 {offsets = [0, 4], sizes = [1, 1], strides = [1, 1]} : vector<1x5xf32> to vector<1x1xf32>
    %294 = arith.mulf %289, %289 : vector<1x1xf32>
    %295 = arith.mulf %290, %290 : vector<1x1xf32>
    %296 = arith.mulf %289, %290 : vector<1x1xf32>
    %297 = arith.subf %291, %294 : vector<1x1xf32>
    %298 = arith.subf %292, %295 : vector<1x1xf32>
    %299 = arith.subf %293, %296 : vector<1x1xf32>
    %cst_182 = arith.constant 2.000000e+00 : f32
    %300 = vector.broadcast %cst_182 : f32 to vector<1x1xf32>
    %301 = arith.mulf %300, %299 : vector<1x1xf32>
    %cst_183 = arith.constant 2.250000e-02 : f32
    %302 = vector.broadcast %cst_183 : f32 to vector<1x1xf32>
    %303 = arith.addf %301, %302 : vector<1x1xf32>
    %304 = arith.addf %297, %298 : vector<1x1xf32>
    %cst_184 = arith.constant 2.250000e-02 : f32
    %305 = vector.broadcast %cst_184 : f32 to vector<1x1xf32>
    %306 = arith.addf %304, %305 : vector<1x1xf32>
    %307 = tpu.reciprocal %306 : vector<1x1xf32> -> vector<1x1xf32>
    %308 = arith.mulf %303, %307 : vector<1x1xf32>
    %cst_185 = arith.constant 2.000000e+00 : f32
    %309 = vector.broadcast %cst_185 : f32 to vector<1x1xf32>
    %310 = arith.mulf %309, %296 : vector<1x1xf32>
    %cst_186 = arith.constant 2.500000e-03 : f32
    %311 = vector.broadcast %cst_186 : f32 to vector<1x1xf32>
    %312 = arith.addf %310, %311 : vector<1x1xf32>
    %313 = arith.mulf %312, %308 : vector<1x1xf32>
    %314 = arith.addf %294, %295 : vector<1x1xf32>
    %cst_187 = arith.constant 2.500000e-03 : f32
    %315 = vector.broadcast %cst_187 : f32 to vector<1x1xf32>
    %316 = arith.addf %314, %315 : vector<1x1xf32>
    %317 = tpu.reciprocal %316 : vector<1x1xf32> -> vector<1x1xf32>
    %318 = arith.mulf %313, %317 : vector<1x1xf32>
    %319 = vector.shape_cast %318 : vector<1x1xf32> to vector<1x1x1xf32>
    %cst_188 = arith.constant dense<0.000000e+00> : vector<1xf32>
    %320 = vector.multi_reduction <add>, %319, %cst_188 [1, 2] : vector<1x1x1xf32> to vector<1xf32>
    %321 = vector.shape_cast %320 : vector<1xf32> to vector<1x1x1xf32>
    %322 = vector.extract %321[0, 0, 0] : f32 from vector<1x1x1xf32>
    %323 = vector.broadcast %322 : f32 to vector<1x1xf32>
    %c0_189 = arith.constant 0 : index
    %c0_190 = arith.constant 0 : index
    %c8_191 = arith.constant 8 : index
    %324 = vector.load %arg21[%c0_189, %c0_190, %c8_191] : memref<1x1x10xf32, #tpu.memory_space<vmem>>, vector<1x1x1xf32>
    %325 = vector.shape_cast %324 : vector<1x1x1xf32> to vector<1x1xf32>
    %326 = vector.shape_cast %323 : vector<1x1xf32> to vector<1x1x1xf32>
    tpu.vector_store %arg21[%c0_189, %c0_190, %c8_191], %326 {strides = array<i32>} : memref<1x1x10xf32, #tpu.memory_space<vmem>>, vector<1x1x1xf32>,
    %327 = vector.shape_cast %308 : vector<1x1xf32> to vector<1x1x1xf32>
    %cst_192 = arith.constant dense<0.000000e+00> : vector<1xf32>
    %328 = vector.multi_reduction <add>, %327, %cst_192 [1, 2] : vector<1x1x1xf32> to vector<1xf32>
    %329 = vector.shape_cast %328 : vector<1xf32> to vector<1x1x1xf32>
    %330 = vector.extract %329[0, 0, 0] : f32 from vector<1x1x1xf32>
    %331 = vector.broadcast %330 : f32 to vector<1x1xf32>
    %c0_193 = arith.constant 0 : index
    %c0_194 = arith.constant 0 : index
    %c9 = arith.constant 9 : index
    %332 = vector.load %arg21[%c0_193, %c0_194, %c9] : memref<1x1x10xf32, #tpu.memory_space<vmem>>, vector<1x1x1xf32>
    %333 = vector.shape_cast %332 : vector<1x1x1xf32> to vector<1x1xf32>
    %334 = vector.shape_cast %331 : vector<1x1xf32> to vector<1x1x1xf32>
    tpu.vector_store %arg21[%c0_193, %c0_194, %c9], %334 {strides = array<i32>} : memref<1x1x10xf32, #tpu.memory_space<vmem>>, vector<1x1x1xf32>,
    return
  }
  func.func @transform_0(%arg0: i32) -> (i32, i32, i32) {
    %c0_i32 = arith.constant 0 : i32
    %c0_i32_0 = arith.constant 0 : i32
    %c0_i32_1 = arith.constant 0 : i32
    return %arg0, %c0_i32, %c0_i32_0 : i32, i32, i32
  }
  func.func @transform_1(%arg0: i32) -> (i32, i32, i32) {
    %c0_i32 = arith.constant 0 : i32
    %c0_i32_0 = arith.constant 0 : i32
    %c0_i32_1 = arith.constant 0 : i32
    return %arg0, %c0_i32, %c0_i32_0 : i32, i32, i32
  }
  func.func @transform_2(%arg0: i32) -> (i32, i32) {
    %c0_i32 = arith.constant 0 : i32
    %c0_i32_0 = arith.constant 0 : i32
    %c0_i32_1 = arith.constant 0 : i32
    return %c0_i32, %c0_i32_0 : i32, i32
  }
  func.func @transform_3(%arg0: i32) -> (i32, i32) {
    %c0_i32 = arith.constant 0 : i32
    %c0_i32_0 = arith.constant 0 : i32
    %c0_i32_1 = arith.constant 0 : i32
    return %c0_i32, %c0_i32_0 : i32, i32
  }
  func.func @transform_4(%arg0: i32) -> (i32, i32) {
    %c0_i32 = arith.constant 0 : i32
    %c0_i32_0 = arith.constant 0 : i32
    %c0_i32_1 = arith.constant 0 : i32
    return %c0_i32, %c0_i32_0 : i32, i32
  }
  func.func @transform_5(%arg0: i32) -> (i32, i32) {
    %c0_i32 = arith.constant 0 : i32
    %c0_i32_0 = arith.constant 0 : i32
    %c0_i32_1 = arith.constant 0 : i32
    return %c0_i32, %c0_i32_0 : i32, i32
  }
  func.func @transform_6(%arg0: i32) -> (i32, i32) {
    %c0_i32 = arith.constant 0 : i32
    %c0_i32_0 = arith.constant 0 : i32
    %c0_i32_1 = arith.constant 0 : i32
    return %c0_i32, %c0_i32_0 : i32, i32
  }
  func.func @transform_7(%arg0: i32) -> (i32, i32) {
    %c0_i32 = arith.constant 0 : i32
    %c0_i32_0 = arith.constant 0 : i32
    %c0_i32_1 = arith.constant 0 : i32
    return %c0_i32, %c0_i32_0 : i32, i32
  }
  func.func @transform_8(%arg0: i32) -> (i32, i32) {
    %c0_i32 = arith.constant 0 : i32
    %c0_i32_0 = arith.constant 0 : i32
    %c0_i32_1 = arith.constant 0 : i32
    return %c0_i32, %c0_i32_0 : i32, i32
  }
  func.func @transform_9(%arg0: i32) -> (i32, i32) {
    %c0_i32 = arith.constant 0 : i32
    %c0_i32_0 = arith.constant 0 : i32
    %c0_i32_1 = arith.constant 0 : i32
    return %c0_i32, %c0_i32_0 : i32, i32
  }
  func.func @transform_10(%arg0: i32) -> (i32, i32) {
    %c0_i32 = arith.constant 0 : i32
    %c0_i32_0 = arith.constant 0 : i32
    %c0_i32_1 = arith.constant 0 : i32
    return %c0_i32, %c0_i32_0 : i32, i32
  }
  func.func @transform_11(%arg0: i32) -> (i32, i32) {
    %c0_i32 = arith.constant 0 : i32
    %c0_i32_0 = arith.constant 0 : i32
    %c0_i32_1 = arith.constant 0 : i32
    return %c0_i32, %c0_i32_0 : i32, i32
  }
  func.func @transform_12(%arg0: i32) -> (i32, i32) {
    %c0_i32 = arith.constant 0 : i32
    %c0_i32_0 = arith.constant 0 : i32
    %c0_i32_1 = arith.constant 0 : i32
    return %c0_i32, %c0_i32_0 : i32, i32
  }
  func.func @transform_13(%arg0: i32) -> (i32, i32) {
    %c0_i32 = arith.constant 0 : i32
    %c0_i32_0 = arith.constant 0 : i32
    %c0_i32_1 = arith.constant 0 : i32
    return %c0_i32, %c0_i32_0 : i32, i32
  }
  func.func @transform_14(%arg0: i32) -> (i32, i32) {
    %c0_i32 = arith.constant 0 : i32
    %c0_i32_0 = arith.constant 0 : i32
    %c0_i32_1 = arith.constant 0 : i32
    return %c0_i32, %c0_i32_0 : i32, i32
  }
  func.func @transform_15(%arg0: i32) -> (i32, i32) {
    %c0_i32 = arith.constant 0 : i32
    %c0_i32_0 = arith.constant 0 : i32
    %c0_i32_1 = arith.constant 0 : i32
    return %c0_i32, %c0_i32_0 : i32, i32
  }
  func.func @transform_16(%arg0: i32) -> (i32, i32) {
    %c0_i32 = arith.constant 0 : i32
    %c0_i32_0 = arith.constant 0 : i32
    %c0_i32_1 = arith.constant 0 : i32
    return %c0_i32, %c0_i32_0 : i32, i32
  }
  func.func @transform_17(%arg0: i32) -> (i32, i32) {
    %c0_i32 = arith.constant 0 : i32
    %c0_i32_0 = arith.constant 0 : i32
    %c0_i32_1 = arith.constant 0 : i32
    return %c0_i32, %c0_i32_0 : i32, i32
  }
  func.func @transform_18(%arg0: i32) -> (i32, i32) {
    %c0_i32 = arith.constant 0 : i32
    %c0_i32_0 = arith.constant 0 : i32
    %c0_i32_1 = arith.constant 0 : i32
    return %c0_i32, %c0_i32_0 : i32, i32
  }
  func.func @transform_19(%arg0: i32) -> (i32, i32) {
    %c0_i32 = arith.constant 0 : i32
    %c0_i32_0 = arith.constant 0 : i32
    %c0_i32_1 = arith.constant 0 : i32
    return %c0_i32, %c0_i32_0 : i32, i32
  }
  func.func @transform_20(%arg0: i32) -> (i32, i32, i32) {
    %c0_i32 = arith.constant 0 : i32
    %c0_i32_0 = arith.constant 0 : i32
    %c0_i32_1 = arith.constant 0 : i32
    return %arg0, %c0_i32, %c0_i32_0 : i32, i32, i32
  }
}

</mosaic_0001>

<llo_original>
// kernel: _lambda_.1
$region0: #{_lambda_.1}
  #allocation0 [shape = 'u32[]', space=smem, size = 0x4, offset = 0x4, fixed_abs, tag = 'smem constant byte address 0x4 - core index']
  #allocation1 [shape = 'u32[144,128]{1,0:T(1,128)}', space=vmem, size = 0x12000, scoped, tag = 'internal scratch']
  #allocation2 [shape = 'f32[32,160]{1,0:T(8,128)}', space=vmem, size = 0x8000, scoped, tag = 'scratch operand']
  %s0 = inlined_call_operand.hbm [shape: f32[6,32,32], index: 0, kind: input, shape index: {}]
  %s1 = inlined_call_operand.hbm [shape: f32[6,32,32], index: 1, kind: input, shape index: {}]
  %s2 = inlined_call_operand.hbm [shape: f32[22,32], index: 2, kind: input, shape index: {}]
  %s3 = inlined_call_operand.hbm [shape: f32[6,16], index: 3, kind: input, shape index: {}]
  %s4 = inlined_call_operand.hbm [shape: f32[1,8], index: 4, kind: input, shape index: {}]
  %s5 = inlined_call_operand.hbm [shape: f32[1,4], index: 5, kind: input, shape index: {}]
  %s6 = inlined_call_operand.hbm [shape: f32[1,2], index: 6, kind: input, shape index: {}]
  %s7 = inlined_call_operand.hbm [shape: f32[160,110], index: 7, kind: input, shape index: {}]
  %s8 = inlined_call_operand.hbm [shape: f32[80,30], index: 8, kind: input, shape index: {}]
  %s9 = inlined_call_operand.hbm [shape: f32[40,5], index: 9, kind: input, shape index: {}]
  %s10 = inlined_call_operand.vmem [shape: f32[20,5], index: 10, kind: input, shape index: {}]
  %s11 = inlined_call_operand.hbm [shape: f32[10,5], index: 11, kind: input, shape index: {}]
  %s12 = inlined_call_operand.hbm [shape: f32[16,32], index: 12, kind: input, shape index: {}]
  %s13 = inlined_call_operand.hbm [shape: f32[8,16], index: 13, kind: input, shape index: {}]
  %s14 = inlined_call_operand.hbm [shape: f32[4,8], index: 14, kind: input, shape index: {}]
  %s15 = inlined_call_operand.vmem [shape: f32[2,4], index: 15, kind: input, shape index: {}]
  %s16 = inlined_call_operand.vmem [shape: f32[64,32], index: 16, kind: input, shape index: {}]
  %s17 = inlined_call_operand.hbm [shape: f32[32,16], index: 17, kind: input, shape index: {}]
  %s18 = inlined_call_operand.hbm [shape: f32[16,8], index: 18, kind: input, shape index: {}]
  %s19 = inlined_call_operand.vmem [shape: f32[8,4], index: 19, kind: input, shape index: {}]
  %s20 = inlined_call_operand.vmem [shape: f32[6,1,10], index: 20, kind: output, shape index: {}]
  %s21 = sld [smem:[#allocation0]]
  $region177: #{_lambda_.1} parent=0
    _
  %s23 = ssub.s32 1, %s21
  %s24 = scalar_select 0, %s23, %s21
  $region1: #{_lambda_.1} parent=0
    #allocation3 [shape = 'u8[32768]{0}', space=vmem, size = 0x8000, scoped, tag = 'input window, operand 0']
    #allocation4 [shape = 's32[2]{0}', space=sflag, size = 0x8, scoped, tag = 'scoped memory for _lambda_.1']
    #allocation5 [shape = 'u8[32768]{0}', space=vmem, size = 0x8000, scoped, tag = 'input window, operand 1']
    #allocation6 [shape = 's32[2]{0}', space=sflag, size = 0x8, scoped, tag = 'scoped memory for _lambda_.1']
    #allocation7 [shape = 'u8[12288]{0}', space=vmem, size = 0x3000, scoped, tag = 'input window, operand 2, single buffered']
    #allocation8 [shape = 'u8[4096]{0}', space=vmem, size = 0x1000, scoped, tag = 'input window, operand 3, single buffered']
    #allocation9 [shape = 's32[1]{0}', space=sflag, size = 0x4, scoped, tag = 'scoped memory for _lambda_.1']
    #allocation10 [shape = 'u8[512]{0}', space=vmem, size = 0x400, scoped, tag = 'input window, operand 4, single buffered']
    #allocation11 [shape = 'u8[512]{0}', space=vmem, size = 0x400, scoped, tag = 'input window, operand 5, single buffered']
    #allocation12 [shape = 's32[1]{0}', space=sflag, size = 0x4, scoped, tag = 'scoped memory for _lambda_.1']
    #allocation13 [shape = 'u8[512]{0}', space=vmem, size = 0x400, scoped, tag = 'input window, operand 6, single buffered']
    #allocation14 [shape = 'u8[81920]{0}', space=vmem, size = 0x14000, scoped, tag = 'input window, operand 7, single buffered']
    #allocation15 [shape = 's32[1]{0}', space=sflag, size = 0x4, scoped, tag = 'scoped memory for _lambda_.1']
    #allocation16 [shape = 'u8[40960]{0}', space=vmem, size = 0xa000, scoped, tag = 'input window, operand 8, single buffered']
    #allocation17 [shape = 'u8[20480]{0}', space=vmem, size = 0x5000, scoped, tag = 'input window, operand 9, single buffered']
    #allocation18 [shape = 's32[1]{0}', space=sflag, size = 0x4, scoped, tag = 'scoped memory for _lambda_.1']
    #allocation19 [shape = 'u8[8192]{0}', space=vmem, size = 0x2000, scoped, tag = 'input window, operand 11, single buffered']
    #allocation20 [shape = 'u8[8192]{0}', space=vmem, size = 0x2000, scoped, tag = 'input window, operand 12, single buffered']
    #allocation21 [shape = 's32[1]{0}', space=sflag, size = 0x4, scoped, tag = 'scoped memory for _lambda_.1']
    #allocation22 [shape = 'u8[4096]{0}', space=vmem, size = 0x1000, scoped, tag = 'input window, operand 13, single buffered']
    #allocation23 [shape = 'u8[2048]{0}', space=vmem, size = 0x800, scoped, tag = 'input window, operand 14, single buffered']
    #allocation24 [shape = 's32[1]{0}', space=sflag, size = 0x4, scoped, tag = 'scoped memory for _lambda_.1']
    #allocation25 [shape = 'u8[16384]{0}', space=vmem, size = 0x4000, scoped, tag = 'input window, operand 17, single buffered']
    #allocation26 [shape = 'u8[8192]{0}', space=vmem, size = 0x2000, scoped, tag = 'input window, operand 18, single buffered']
    #allocation27 [shape = 's32[1]{0}', space=sflag, size = 0x4, scoped, tag = 'scoped memory for _lambda_.1']
    %25 = vsyncpa [#allocation4], 0
    %s26 = scalar_lea.sflag [#allocation4], 1
    %27 = vsyncpa %s26, 0
    %28 = vsyncpa [#allocation6], 0
    %s29 = scalar_lea.sflag [#allocation6], 1
    %30 = vsyncpa %s29, 0
    %31 = vsyncpa [#allocation9], 0
    %32 = vsyncpa [#allocation12], 0
    %33 = vsyncpa [#allocation15], 0
    %34 = vsyncpa [#allocation18], 0
    %35 = vsyncpa [#allocation21], 0
    %36 = vsyncpa [#allocation24], 0
    %37 = vsyncpa [#allocation27], 0
    loop: start=0, step=1, limit=8
    $region2: #{_lambda_.1} parent=1 // loop_pre_header
      _
    $region3: #{_lambda_.1} parent=1 // loop_header
      %s39 = sphi 0, %s43
      %p40 = scmp.ge.s32.totalorder %s39, 8
      %s49 = sphi 0, %s51
      %s52 = sphi 0, %s49
      %s53 = sphi 0, %s52
      %s69 = sphi 0, %s53
      %s75 = sphi 0, %s77
      %s78 = sphi 0, %s75
      %s79 = sphi 0, %s78
      %s95 = sphi 0, %s79
      %s99 = sphi 0, %s99
      %s101 = sphi 0, %s99
      %s102 = sphi 0, %s101
      %s116 = sphi 0, %s102
      %s120 = sphi 0, %s120
      %s122 = sphi 0, %s120
      %s123 = sphi 0, %s122
      %s137 = sphi 0, %s123
      %s141 = sphi 0, %s141
      %s143 = sphi 0, %s141
      %s144 = sphi 0, %s143
      %s158 = sphi 0, %s144
      %s162 = sphi 0, %s162
      %s164 = sphi 0, %s162
      %s165 = sphi 0, %s164
      %s179 = sphi 0, %s165
      %s183 = sphi 0, %s183
      %s185 = sphi 0, %s183
      %s186 = sphi 0, %s185
      %s200 = sphi 0, %s186
      %s204 = sphi 0, %s204
      %s206 = sphi 0, %s204
      %s207 = sphi 0, %s206
      %s221 = sphi 0, %s207
      %s225 = sphi 0, %s225
      %s227 = sphi 0, %s225
      %s228 = sphi 0, %s227
      %s242 = sphi 0, %s228
      %s246 = sphi 0, %s246
      %s248 = sphi 0, %s246
      %s249 = sphi 0, %s248
      %s263 = sphi 0, %s249
      %s267 = sphi 0, %s267
      %s269 = sphi 0, %s267
      %s270 = sphi 0, %s269
      %s284 = sphi 0, %s270
      %s288 = sphi 0, %s288
      %s290 = sphi 0, %s288
      %s291 = sphi 0, %s290
      %s305 = sphi 0, %s291
      %s309 = sphi 0, %s309
      %s311 = sphi 0, %s309
      %s312 = sphi 0, %s311
      %s326 = sphi 0, %s312
      %s330 = sphi 0, %s330
      %s332 = sphi 0, %s330
      %s333 = sphi 0, %s332
      %s347 = sphi 0, %s333
      %s351 = sphi 0, %s351
      %s353 = sphi 0, %s351
      %s354 = sphi 0, %s353
      %s368 = sphi 0, %s354
      %s372 = sphi 0, %s372
      %s374 = sphi 0, %s372
      %s375 = sphi 0, %s374
      %s389 = sphi 0, %s375
      %s393 = sphi 0, %s393
      %s395 = sphi 0, %s393
      %s396 = sphi 0, %s395
      %s410 = sphi 0, %s396
      %s414 = sphi 0, %s414
      %s416 = sphi 0, %s414
      %s417 = sphi 0, %s416
      %s431 = sphi 0, %s417
      %s435 = sphi 0, %s435
      %s437 = sphi 0, %s435
      %s438 = sphi 0, %s437
      %s452 = sphi 0, %s438
      %s456 = sphi 0, %s456
      %s458 = sphi 0, %s456
      %s459 = sphi 0, %s458
      %s473 = sphi 0, %s459
      %s479 = sphi 0, %s481
      %s482 = sphi 0, %s479
      %s483 = sphi 0, %s482
      %s499 = sphi 0, %s483
    $region4: #{_lambda_.1} parent=1 // loop_header_branch
      %42 = sbr.rel (%p40) target = $region8
    $region5: #{_lambda_.1} parent=1 // loop_body
      %s44 = ssub.s32 %s39, 1
      %s45 = ssub.s32 %s39, 2
      %s46 = sadd.s32 %s39, 1
      %s47 = ssub.s32 %s39, %s46
      %p48 = scmp.eq.s32.totalorder %s47, 0
      %s50 = sadd.s32 %s49, 1
      %s51 = scalar_select %p48, %s49, %s50
      %p54 = pneg %p48
      %p55 = scmp.eq.s32.totalorder %s39, 5
      %p56 = por %p54, %p55
      %p57 = scmp.ne.s32.totalorder %s49, %s52
      %p58 = scmp.eq.s32.totalorder %s39, 0
      %p59 = por %p57, %p58
      %p60 = scmp.ne.s32.totalorder %s49, %s52
      %p61 = scmp.eq.s32.totalorder %s44, 5
      %p62 = por %p60, %p61
      %p63 = scmp.ne.s32.totalorder %s52, %s53
      %p64 = scmp.eq.s32.totalorder %s44, 0
      %p65 = por %p63, %p64
      %p66 = scmp.ne.s32.totalorder %s52, %s53
      %p67 = scmp.eq.s32.totalorder %s45, 5
      %p68 = por %p66, %p67
      %p70 = scmp.ne.s32.totalorder %s53, %s69
      %p71 = scmp.eq.s32.totalorder %s45, 0
      %p72 = por %p70, %p71
      %s73 = ssub.s32 %s39, %s46
      %p74 = scmp.eq.s32.totalorder %s73, 0
      %s76 = sadd.s32 %s75, 1
      %s77 = scalar_select %p74, %s75, %s76
      %p80 = pneg %p74
      %p81 = scmp.eq.s32.totalorder %s39, 5
      %p82 = por %p80, %p81
      %p83 = scmp.ne.s32.totalorder %s75, %s78
      %p84 = scmp.eq.s32.totalorder %s39, 0
      %p85 = por %p83, %p84
      %p86 = scmp.ne.s32.totalorder %s75, %s78
      %p87 = scmp.eq.s32.totalorder %s44, 5
      %p88 = por %p86, %p87
      %p89 = scmp.ne.s32.totalorder %s78, %s79
      %p90 = scmp.eq.s32.totalorder %s44, 0
      %p91 = por %p89, %p90
      %p92 = scmp.ne.s32.totalorder %s78, %s79
      %p93 = scmp.eq.s32.totalorder %s45, 5
      %p94 = por %p92, %p93
      %p96 = scmp.ne.s32.totalorder %s79, %s95
      %p97 = scmp.eq.s32.totalorder %s45, 0
      %p98 = por %p96, %p97
      %s100 = sadd.s32 %s99, 1
      %p103 = scmp.eq.s32.totalorder %s39, 5
      %p104 = scmp.ne.s32.totalorder %s99, %s101
      %p105 = scmp.eq.s32.totalorder %s39, 0
      %p106 = por %p104, %p105
      %p107 = scmp.ne.s32.totalorder %s99, %s101
      %p108 = scmp.eq.s32.totalorder %s44, 5
      %p109 = por %p107, %p108
      %p110 = scmp.ne.s32.totalorder %s101, %s102
      %p111 = scmp.eq.s32.totalorder %s44, 0
      %p112 = por %p110, %p111
      %p113 = scmp.ne.s32.totalorder %s101, %s102
      %p114 = scmp.eq.s32.totalorder %s45, 5
      %p115 = por %p113, %p114
      %p117 = scmp.ne.s32.totalorder %s102, %s116
      %p118 = scmp.eq.s32.totalorder %s45, 0
      %p119 = por %p117, %p118
      %s121 = sadd.s32 %s120, 1
      %p124 = scmp.eq.s32.totalorder %s39, 5
      %p125 = scmp.ne.s32.totalorder %s120, %s122
      %p126 = scmp.eq.s32.totalorder %s39, 0
      %p127 = por %p125, %p126
      %p128 = scmp.ne.s32.totalorder %s120, %s122
      %p129 = scmp.eq.s32.totalorder %s44, 5
      %p130 = por %p128, %p129
      %p131 = scmp.ne.s32.totalorder %s122, %s123
      %p132 = scmp.eq.s32.totalorder %s44, 0
      %p133 = por %p131, %p132
      %p134 = scmp.ne.s32.totalorder %s122, %s123
      %p135 = scmp.eq.s32.totalorder %s45, 5
      %p136 = por %p134, %p135
      %p138 = scmp.ne.s32.totalorder %s123, %s137
      %p139 = scmp.eq.s32.totalorder %s45, 0
      %p140 = por %p138, %p139
      %s142 = sadd.s32 %s141, 1
      %p145 = scmp.eq.s32.totalorder %s39, 5
      %p146 = scmp.ne.s32.totalorder %s141, %s143
      %p147 = scmp.eq.s32.totalorder %s39, 0
      %p148 = por %p146, %p147
      %p149 = scmp.ne.s32.totalorder %s141, %s143
      %p150 = scmp.eq.s32.totalorder %s44, 5
      %p151 = por %p149, %p150
      %p152 = scmp.ne.s32.totalorder %s143, %s144
      %p153 = scmp.eq.s32.totalorder %s44, 0
      %p154 = por %p152, %p153
      %p155 = scmp.ne.s32.totalorder %s143, %s144
      %p156 = scmp.eq.s32.totalorder %s45, 5
      %p157 = por %p155, %p156
      %p159 = scmp.ne.s32.totalorder %s144, %s158
      %p160 = scmp.eq.s32.totalorder %s45, 0
      %p161 = por %p159, %p160
      %s163 = sadd.s32 %s162, 1
      %p166 = scmp.eq.s32.totalorder %s39, 5
      %p167 = scmp.ne.s32.totalorder %s162, %s164
      %p168 = scmp.eq.s32.totalorder %s39, 0
      %p169 = por %p167, %p168
      %p170 = scmp.ne.s32.totalorder %s162, %s164
      %p171 = scmp.eq.s32.totalorder %s44, 5
      %p172 = por %p170, %p171
      %p173 = scmp.ne.s32.totalorder %s164, %s165
      %p174 = scmp.eq.s32.totalorder %s44, 0
      %p175 = por %p173, %p174
      %p176 = scmp.ne.s32.totalorder %s164, %s165
      %p177 = scmp.eq.s32.totalorder %s45, 5
      %p178 = por %p176, %p177
      %p180 = scmp.ne.s32.totalorder %s165, %s179
      %p181 = scmp.eq.s32.totalorder %s45, 0
      %p182 = por %p180, %p181
      %s184 = sadd.s32 %s183, 1
      %p187 = scmp.eq.s32.totalorder %s39, 5
      %p188 = scmp.ne.s32.totalorder %s183, %s185
      %p189 = scmp.eq.s32.totalorder %s39, 0
      %p190 = por %p188, %p189
      %p191 = scmp.ne.s32.totalorder %s183, %s185
      %p192 = scmp.eq.s32.totalorder %s44, 5
      %p193 = por %p191, %p192
      %p194 = scmp.ne.s32.totalorder %s185, %s186
      %p195 = scmp.eq.s32.totalorder %s44, 0
      %p196 = por %p194, %p195
      %p197 = scmp.ne.s32.totalorder %s185, %s186
      %p198 = scmp.eq.s32.totalorder %s45, 5
      %p199 = por %p197, %p198
      %p201 = scmp.ne.s32.totalorder %s186, %s200
      %p202 = scmp.eq.s32.totalorder %s45, 0
      %p203 = por %p201, %p202
      %s205 = sadd.s32 %s204, 1
      %p208 = scmp.eq.s32.totalorder %s39, 5
      %p209 = scmp.ne.s32.totalorder %s204, %s206
      %p210 = scmp.eq.s32.totalorder %s39, 0
      %p211 = por %p209, %p210
      %p212 = scmp.ne.s32.totalorder %s204, %s206
      %p213 = scmp.eq.s32.totalorder %s44, 5
      %p214 = por %p212, %p213
      %p215 = scmp.ne.s32.totalorder %s206, %s207
      %p216 = scmp.eq.s32.totalorder %s44, 0
      %p217 = por %p215, %p216
      %p218 = scmp.ne.s32.totalorder %s206, %s207
      %p219 = scmp.eq.s32.totalorder %s45, 5
      %p220 = por %p218, %p219
      %p222 = scmp.ne.s32.totalorder %s207, %s221
      %p223 = scmp.eq.s32.totalorder %s45, 0
      %p224 = por %p222, %p223
      %s226 = sadd.s32 %s225, 1
      %p229 = scmp.eq.s32.totalorder %s39, 5
      %p230 = scmp.ne.s32.totalorder %s225, %s227
      %p231 = scmp.eq.s32.totalorder %s39, 0
      %p232 = por %p230, %p231
      %p233 = scmp.ne.s32.totalorder %s225, %s227
      %p234 = scmp.eq.s32.totalorder %s44, 5
      %p235 = por %p233, %p234
      %p236 = scmp.ne.s32.totalorder %s227, %s228
      %p237 = scmp.eq.s32.totalorder %s44, 0
      %p238 = por %p236, %p237
      %p239 = scmp.ne.s32.totalorder %s227, %s228
      %p240 = scmp.eq.s32.totalorder %s45, 5
      %p241 = por %p239, %p240
      %p243 = scmp.ne.s32.totalorder %s228, %s242
      %p244 = scmp.eq.s32.totalorder %s45, 0
      %p245 = por %p243, %p244
      %s247 = sadd.s32 %s246, 1
      %p250 = scmp.eq.s32.totalorder %s39, 5
      %p251 = scmp.ne.s32.totalorder %s246, %s248
      %p252 = scmp.eq.s32.totalorder %s39, 0
      %p253 = por %p251, %p252
      %p254 = scmp.ne.s32.totalorder %s246, %s248
      %p255 = scmp.eq.s32.totalorder %s44, 5
      %p256 = por %p254, %p255
      %p257 = scmp.ne.s32.totalorder %s248, %s249
      %p258 = scmp.eq.s32.totalorder %s44, 0
      %p259 = por %p257, %p258
      %p260 = scmp.ne.s32.totalorder %s248, %s249
      %p261 = scmp.eq.s32.totalorder %s45, 5
      %p262 = por %p260, %p261
      %p264 = scmp.ne.s32.totalorder %s249, %s263
      %p265 = scmp.eq.s32.totalorder %s45, 0
      %p266 = por %p264, %p265
      %s268 = sadd.s32 %s267, 1
      %p271 = scmp.eq.s32.totalorder %s39, 5
      %p272 = scmp.ne.s32.totalorder %s267, %s269
      %p273 = scmp.eq.s32.totalorder %s39, 0
      %p274 = por %p272, %p273
      %p275 = scmp.ne.s32.totalorder %s267, %s269
      %p276 = scmp.eq.s32.totalorder %s44, 5
      %p277 = por %p275, %p276
      %p278 = scmp.ne.s32.totalorder %s269, %s270
      %p279 = scmp.eq.s32.totalorder %s44, 0
      %p280 = por %p278, %p279
      %p281 = scmp.ne.s32.totalorder %s269, %s270
      %p282 = scmp.eq.s32.totalorder %s45, 5
      %p283 = por %p281, %p282
      %p285 = scmp.ne.s32.totalorder %s270, %s284
      %p286 = scmp.eq.s32.totalorder %s45, 0
      %p287 = por %p285, %p286
      %s289 = sadd.s32 %s288, 1
      %p292 = scmp.eq.s32.totalorder %s39, 5
      %p293 = scmp.ne.s32.totalorder %s288, %s290
      %p294 = scmp.eq.s32.totalorder %s39, 0
      %p295 = por %p293, %p294
      %p296 = scmp.ne.s32.totalorder %s288, %s290
      %p297 = scmp.eq.s32.totalorder %s44, 5
      %p298 = por %p296, %p297
      %p299 = scmp.ne.s32.totalorder %s290, %s291
      %p300 = scmp.eq.s32.totalorder %s44, 0
      %p301 = por %p299, %p300
      %p302 = scmp.ne.s32.totalorder %s290, %s291
      %p303 = scmp.eq.s32.totalorder %s45, 5
      %p304 = por %p302, %p303
      %p306 = scmp.ne.s32.totalorder %s291, %s305
      %p307 = scmp.eq.s32.totalorder %s45, 0
      %p308 = por %p306, %p307
      %s310 = sadd.s32 %s309, 1
      %p313 = scmp.eq.s32.totalorder %s39, 5
      %p314 = scmp.ne.s32.totalorder %s309, %s311
      %p315 = scmp.eq.s32.totalorder %s39, 0
      %p316 = por %p314, %p315
      %p317 = scmp.ne.s32.totalorder %s309, %s311
      %p318 = scmp.eq.s32.totalorder %s44, 5
      %p319 = por %p317, %p318
      %p320 = scmp.ne.s32.totalorder %s311, %s312
      %p321 = scmp.eq.s32.totalorder %s44, 0
      %p322 = por %p320, %p321
      %p323 = scmp.ne.s32.totalorder %s311, %s312
      %p324 = scmp.eq.s32.totalorder %s45, 5
      %p325 = por %p323, %p324
      %p327 = scmp.ne.s32.totalorder %s312, %s326
      %p328 = scmp.eq.s32.totalorder %s45, 0
      %p329 = por %p327, %p328
      %s331 = sadd.s32 %s330, 1
      %p334 = scmp.eq.s32.totalorder %s39, 5
      %p335 = scmp.ne.s32.totalorder %s330, %s332
      %p336 = scmp.eq.s32.totalorder %s39, 0
      %p337 = por %p335, %p336
      %p338 = scmp.ne.s32.totalorder %s330, %s332
      %p339 = scmp.eq.s32.totalorder %s44, 5
      %p340 = por %p338, %p339
      %p341 = scmp.ne.s32.totalorder %s332, %s333
      %p342 = scmp.eq.s32.totalorder %s44, 0
      %p343 = por %p341, %p342
      %p344 = scmp.ne.s32.totalorder %s332, %s333
      %p345 = scmp.eq.s32.totalorder %s45, 5
      %p346 = por %p344, %p345
      %p348 = scmp.ne.s32.totalorder %s333, %s347
      %p349 = scmp.eq.s32.totalorder %s45, 0
      %p350 = por %p348, %p349
      %s352 = sadd.s32 %s351, 1
      %p355 = scmp.eq.s32.totalorder %s39, 5
      %p356 = scmp.ne.s32.totalorder %s351, %s353
      %p357 = scmp.eq.s32.totalorder %s39, 0
      %p358 = por %p356, %p357
      %p359 = scmp.ne.s32.totalorder %s351, %s353
      %p360 = scmp.eq.s32.totalorder %s44, 5
      %p361 = por %p359, %p360
      %p362 = scmp.ne.s32.totalorder %s353, %s354
      %p363 = scmp.eq.s32.totalorder %s44, 0
      %p364 = por %p362, %p363
      %p365 = scmp.ne.s32.totalorder %s353, %s354
      %p366 = scmp.eq.s32.totalorder %s45, 5
      %p367 = por %p365, %p366
      %p369 = scmp.ne.s32.totalorder %s354, %s368
      %p370 = scmp.eq.s32.totalorder %s45, 0
      %p371 = por %p369, %p370
      %s373 = sadd.s32 %s372, 1
      %p376 = scmp.eq.s32.totalorder %s39, 5
      %p377 = scmp.ne.s32.totalorder %s372, %s374
      %p378 = scmp.eq.s32.totalorder %s39, 0
      %p379 = por %p377, %p378
      %p380 = scmp.ne.s32.totalorder %s372, %s374
      %p381 = scmp.eq.s32.totalorder %s44, 5
      %p382 = por %p380, %p381
      %p383 = scmp.ne.s32.totalorder %s374, %s375
      %p384 = scmp.eq.s32.totalorder %s44, 0
      %p385 = por %p383, %p384
      %p386 = scmp.ne.s32.totalorder %s374, %s375
      %p387 = scmp.eq.s32.totalorder %s45, 5
      %p388 = por %p386, %p387
      %p390 = scmp.ne.s32.totalorder %s375, %s389
      %p391 = scmp.eq.s32.totalorder %s45, 0
      %p392 = por %p390, %p391
      %s394 = sadd.s32 %s393, 1
      %p397 = scmp.eq.s32.totalorder %s39, 5
      %p398 = scmp.ne.s32.totalorder %s393, %s395
      %p399 = scmp.eq.s32.totalorder %s39, 0
      %p400 = por %p398, %p399
      %p401 = scmp.ne.s32.totalorder %s393, %s395
      %p402 = scmp.eq.s32.totalorder %s44, 5
      %p403 = por %p401, %p402
      %p404 = scmp.ne.s32.totalorder %s395, %s396
      %p405 = scmp.eq.s32.totalorder %s44, 0
      %p406 = por %p404, %p405
      %p407 = scmp.ne.s32.totalorder %s395, %s396
      %p408 = scmp.eq.s32.totalorder %s45, 5
      %p409 = por %p407, %p408
      %p411 = scmp.ne.s32.totalorder %s396, %s410
      %p412 = scmp.eq.s32.totalorder %s45, 0
      %p413 = por %p411, %p412
      %s415 = sadd.s32 %s414, 1
      %p418 = scmp.eq.s32.totalorder %s39, 5
      %p419 = scmp.ne.s32.totalorder %s414, %s416
      %p420 = scmp.eq.s32.totalorder %s39, 0
      %p421 = por %p419, %p420
      %p422 = scmp.ne.s32.totalorder %s414, %s416
      %p423 = scmp.eq.s32.totalorder %s44, 5
      %p424 = por %p422, %p423
      %p425 = scmp.ne.s32.totalorder %s416, %s417
      %p426 = scmp.eq.s32.totalorder %s44, 0
      %p427 = por %p425, %p426
      %p428 = scmp.ne.s32.totalorder %s416, %s417
      %p429 = scmp.eq.s32.totalorder %s45, 5
      %p430 = por %p428, %p429
      %p432 = scmp.ne.s32.totalorder %s417, %s431
      %p433 = scmp.eq.s32.totalorder %s45, 0
      %p434 = por %p432, %p433
      %s436 = sadd.s32 %s435, 1
      %p439 = scmp.eq.s32.totalorder %s39, 5
      %p440 = scmp.ne.s32.totalorder %s435, %s437
      %p441 = scmp.eq.s32.totalorder %s39, 0
      %p442 = por %p440, %p441
      %p443 = scmp.ne.s32.totalorder %s435, %s437
      %p444 = scmp.eq.s32.totalorder %s44, 5
      %p445 = por %p443, %p444
      %p446 = scmp.ne.s32.totalorder %s437, %s438
      %p447 = scmp.eq.s32.totalorder %s44, 0
      %p448 = por %p446, %p447
      %p449 = scmp.ne.s32.totalorder %s437, %s438
      %p450 = scmp.eq.s32.totalorder %s45, 5
      %p451 = por %p449, %p450
      %p453 = scmp.ne.s32.totalorder %s438, %s452
      %p454 = scmp.eq.s32.totalorder %s45, 0
      %p455 = por %p453, %p454
      %s457 = sadd.s32 %s456, 1
      %p460 = scmp.eq.s32.totalorder %s39, 5
      %p461 = scmp.ne.s32.totalorder %s456, %s458
      %p462 = scmp.eq.s32.totalorder %s39, 0
      %p463 = por %p461, %p462
      %p464 = scmp.ne.s32.totalorder %s456, %s458
      %p465 = scmp.eq.s32.totalorder %s44, 5
      %p466 = por %p464, %p465
      %p467 = scmp.ne.s32.totalorder %s458, %s459
      %p468 = scmp.eq.s32.totalorder %s44, 0
      %p469 = por %p467, %p468
      %p470 = scmp.ne.s32.totalorder %s458, %s459
      %p471 = scmp.eq.s32.totalorder %s45, 5
      %p472 = por %p470, %p471
      %p474 = scmp.ne.s32.totalorder %s459, %s473
      %p475 = scmp.eq.s32.totalorder %s45, 0
      %p476 = por %p474, %p475
      %s477 = ssub.s32 %s39, %s46
      %p478 = scmp.eq.s32.totalorder %s477, 0
      %s480 = sadd.s32 %s479, 1
      %s481 = scalar_select %p478, %s479, %s480
      %p484 = pneg %p478
      %p485 = scmp.eq.s32.totalorder %s39, 5
      %p486 = por %p484, %p485
      %p487 = scmp.ne.s32.totalorder %s479, %s482
      %p488 = scmp.eq.s32.totalorder %s39, 0
      %p489 = por %p487, %p488
      %p490 = scmp.ne.s32.totalorder %s479, %s482
      %p491 = scmp.eq.s32.totalorder %s44, 5
      %p492 = por %p490, %p491
      %p493 = scmp.ne.s32.totalorder %s482, %s483
      %p494 = scmp.eq.s32.totalorder %s44, 0
      %p495 = por %p493, %p494
      %p496 = scmp.ne.s32.totalorder %s482, %s483
      %p497 = scmp.eq.s32.totalorder %s45, 5
      %p498 = por %p496, %p497
      %p500 = scmp.ne.s32.totalorder %s483, %s499
      %p501 = scmp.eq.s32.totalorder %s45, 0
      %p502 = por %p500, %p501
      %p503 = scmp.le.s32.totalorder 1, %s39
      %p504 = scmp.lt.s32.totalorder %s39, 7
      %p505 = pnand %p503, %p504
      %p506 = pneg %p505
      // Predicated region
      $region9: #{_lambda_.1} parent=5 // pred_check
        _
      $region10: #{_lambda_.1} parent=5 // pred_check_branch
        %508 = sbr.rel (%p505) target = $region12
      $region11: #{_lambda_.1} parent=5 // pred_region
        %s509 = ssub.s32 %s39, 1
        // Predicated region
        $region13: #{_lambda_.1} parent=11 // pred_check
          %p510 = pneg %p112
        $region14: #{_lambda_.1} parent=11 // pred_check_branch
          %512 = sbr.rel (%p510) target = $region16
        $region15: #{_lambda_.1} parent=11 // pred_region
          %s514 = ssub.s32 384, 384
          %515 = vsyncadd [#allocation6], %s514
          %s516 = sshll.u32 [#allocation7], 4
          %s517 = int_to_ptr.vmem [resolvable:$true] %s516
          %522 = dma.hbm_to_vmem [thread:$0]  %s2, 384, %s517, [#allocation6], 128, 128, 8
        $region16: #{_lambda_.1} parent=11 // pred_fallthru
          _
        // Predicated region
        $region17: #{_lambda_.1} parent=11 // pred_check
          %p523 = pneg %p133
        $region18: #{_lambda_.1} parent=11 // pred_check_branch
          %525 = sbr.rel (%p523) target = $region20
        $region19: #{_lambda_.1} parent=11 // pred_region
          %s527 = ssub.s32 128, 128
          %528 = vsyncadd [#allocation9], %s527
          %s530 = sshll.u32 [#allocation8], 4
          %s531 = int_to_ptr.vmem [resolvable:$true] %s530
          %533 = dma.hbm_to_vmem [thread:$0]  %s3, 128, %s531, [#allocation9]
        $region20: #{_lambda_.1} parent=11 // pred_fallthru
          _
        // Predicated region
        $region21: #{_lambda_.1} parent=11 // pred_check
          %p534 = pneg %p154
        $region22: #{_lambda_.1} parent=11 // pred_check_branch
          %536 = sbr.rel (%p534) target = $region24
        $region23: #{_lambda_.1} parent=11 // pred_region
          %s538 = ssub.s32 16, 16
          %539 = vsyncadd [#allocation9], %s538
          %s541 = sshll.u32 [#allocation10], 4
          %s542 = int_to_ptr.vmem [resolvable:$true] %s541
          %544 = dma.hbm_to_vmem [thread:$0]  %s4, 16, %s542, [#allocation9]
        $region24: #{_lambda_.1} parent=11 // pred_fallthru
          _
        // Predicated region
        $region25: #{_lambda_.1} parent=11 // pred_check
          %p545 = pneg %p175
        $region26: #{_lambda_.1} parent=11 // pred_check_branch
          %547 = sbr.rel (%p545) target = $region28
        $region27: #{_lambda_.1} parent=11 // pred_region
          %s549 = ssub.s32 16, 16
          %550 = vsyncadd [#allocation12], %s549
          %s552 = sshll.u32 [#allocation11], 4
          %s553 = int_to_ptr.vmem [resolvable:$true] %s552
          %555 = dma.hbm_to_vmem [thread:$0]  %s5, 16, %s553, [#allocation12]
        $region28: #{_lambda_.1} parent=11 // pred_fallthru
          _
        // Predicated region
        $region29: #{_lambda_.1} parent=11 // pred_check
          %p556 = pneg %p196
        $region30: #{_lambda_.1} parent=11 // pred_check_branch
          %558 = sbr.rel (%p556) target = $region32
        $region31: #{_lambda_.1} parent=11 // pred_region
          %s560 = ssub.s32 16, 16
          %561 = vsyncadd [#allocation12], %s560
          %s563 = sshll.u32 [#allocation13], 4
          %s564 = int_to_ptr.vmem [resolvable:$true] %s563
          %566 = dma.hbm_to_vmem [thread:$0]  %s6, 16, %s564, [#allocation12]
        $region32: #{_lambda_.1} parent=11 // pred_fallthru
          _
        // Predicated region
        $region33: #{_lambda_.1} parent=11 // pred_check
          %p567 = pneg %p217
        $region34: #{_lambda_.1} parent=11 // pred_check_branch
          %569 = sbr.rel (%p567) target = $region36
        $region35: #{_lambda_.1} parent=11 // pred_region
          %s571 = ssub.s32 2560, 2560
          %572 = vsyncadd [#allocation15], %s571
          %s573 = sshll.u32 [#allocation14], 4
          %s574 = int_to_ptr.vmem [resolvable:$true] %s573
          %579 = dma.hbm_to_vmem [thread:$0]  %s7, 2560, %s574, [#allocation15], 128, 128, 8
        $region36: #{_lambda_.1} parent=11 // pred_fallthru
          _
        // Predicated region
        $region37: #{_lambda_.1} parent=11 // pred_check
          %p580 = pneg %p238
        $region38: #{_lambda_.1} parent=11 // pred_check_branch
          %582 = sbr.rel (%p580) target = $region40
        $region39: #{_lambda_.1} parent=11 // pred_region
          %s584 = ssub.s32 1280, 1280
          %585 = vsyncadd [#allocation15], %s584
          %s586 = sshll.u32 [#allocation16], 4
          %s587 = int_to_ptr.vmem [resolvable:$true] %s586
          %592 = dma.hbm_to_vmem [thread:$0]  %s8, 1280, %s587, [#allocation15], 128, 128, 8
        $region40: #{_lambda_.1} parent=11 // pred_fallthru
          _
        // Predicated region
        $region41: #{_lambda_.1} parent=11 // pred_check
          %p593 = pneg %p259
        $region42: #{_lambda_.1} parent=11 // pred_check_branch
          %595 = sbr.rel (%p593) target = $region44
        $region43: #{_lambda_.1} parent=11 // pred_region
          %s597 = ssub.s32 640, 640
          %598 = vsyncadd [#allocation18], %s597
          %s599 = sshll.u32 [#allocation17], 4
          %s600 = int_to_ptr.vmem [resolvable:$true] %s599
          %605 = dma.hbm_to_vmem [thread:$0]  %s9, 640, %s600, [#allocation18], 128, 128, 8
        $region44: #{_lambda_.1} parent=11 // pred_fallthru
          _
        // Predicated region
        $region45: #{_lambda_.1} parent=11 // pred_check
          %p606 = pneg %p280
        $region46: #{_lambda_.1} parent=11 // pred_check_branch
          %608 = sbr.rel (%p606) target = $region48
        $region47: #{_lambda_.1} parent=11 // pred_region
          _
        $region48: #{_lambda_.1} parent=11 // pred_fallthru
          _
        // Predicated region
        $region49: #{_lambda_.1} parent=11 // pred_check
          %p609 = pneg %p301
        $region50: #{_lambda_.1} parent=11 // pred_check_branch
          %611 = sbr.rel (%p609) target = $region52
        $region51: #{_lambda_.1} parent=11 // pred_region
          %s613 = ssub.s32 256, 256
          %614 = vsyncadd [#allocation18], %s613
          %s615 = sshll.u32 [#allocation19], 4
          %s616 = int_to_ptr.vmem [resolvable:$true] %s615
          %621 = dma.hbm_to_vmem [thread:$0]  %s11, 256, %s616, [#allocation18], 128, 128, 8
        $region52: #{_lambda_.1} parent=11 // pred_fallthru
          _
        // Predicated region
        $region53: #{_lambda_.1} parent=11 // pred_check
          %p622 = pneg %p322
        $region54: #{_lambda_.1} parent=11 // pred_check_branch
          %624 = sbr.rel (%p622) target = $region56
        $region55: #{_lambda_.1} parent=11 // pred_region
          %s626 = ssub.s32 256, 256
          %627 = vsyncadd [#allocation21], %s626
          %s628 = sshll.u32 [#allocation20], 4
          %s629 = int_to_ptr.vmem [resolvable:$true] %s628
          %634 = dma.hbm_to_vmem [thread:$0]  %s12, 256, %s629, [#allocation21], 128, 128, 8
        $region56: #{_lambda_.1} parent=11 // pred_fallthru
          _
        // Predicated region
        $region57: #{_lambda_.1} parent=11 // pred_check
          %p635 = pneg %p343
        $region58: #{_lambda_.1} parent=11 // pred_check_branch
          %637 = sbr.rel (%p635) target = $region60
        $region59: #{_lambda_.1} parent=11 // pred_region
          %s639 = ssub.s32 128, 128
          %640 = vsyncadd [#allocation21], %s639
          %s642 = sshll.u32 [#allocation22], 4
          %s643 = int_to_ptr.vmem [resolvable:$true] %s642
          %645 = dma.hbm_to_vmem [thread:$0]  %s13, 128, %s643, [#allocation21]
        $region60: #{_lambda_.1} parent=11 // pred_fallthru
          _
        // Predicated region
        $region61: #{_lambda_.1} parent=11 // pred_check
          %p646 = pneg %p364
        $region62: #{_lambda_.1} parent=11 // pred_check_branch
          %648 = sbr.rel (%p646) target = $region64
        $region63: #{_lambda_.1} parent=11 // pred_region
          %s650 = ssub.s32 64, 64
          %651 = vsyncadd [#allocation24], %s650
          %s653 = sshll.u32 [#allocation23], 4
          %s654 = int_to_ptr.vmem [resolvable:$true] %s653
          %656 = dma.hbm_to_vmem [thread:$0]  %s14, 64, %s654, [#allocation24]
        $region64: #{_lambda_.1} parent=11 // pred_fallthru
          _
        // Predicated region
        $region65: #{_lambda_.1} parent=11 // pred_check
          %p657 = pneg %p385
        $region66: #{_lambda_.1} parent=11 // pred_check_branch
          %659 = sbr.rel (%p657) target = $region68
        $region67: #{_lambda_.1} parent=11 // pred_region
          _
        $region68: #{_lambda_.1} parent=11 // pred_fallthru
          _
        // Predicated region
        $region69: #{_lambda_.1} parent=11 // pred_check
          %p660 = pneg %p406
        $region70: #{_lambda_.1} parent=11 // pred_check_branch
          %662 = sbr.rel (%p660) target = $region72
        $region71: #{_lambda_.1} parent=11 // pred_region
          _
        $region72: #{_lambda_.1} parent=11 // pred_fallthru
          _
        // Predicated region
        $region73: #{_lambda_.1} parent=11 // pred_check
          %p663 = pneg %p427
        $region74: #{_lambda_.1} parent=11 // pred_check_branch
          %665 = sbr.rel (%p663) target = $region76
        $region75: #{_lambda_.1} parent=11 // pred_region
          %s667 = ssub.s32 512, 512
          %668 = vsyncadd [#allocation24], %s667
          %s669 = sshll.u32 [#allocation25], 4
          %s670 = int_to_ptr.vmem [resolvable:$true] %s669
          %675 = dma.hbm_to_vmem [thread:$0]  %s17, 512, %s670, [#allocation24], 128, 128, 8
        $region76: #{_lambda_.1} parent=11 // pred_fallthru
          _
        // Predicated region
        $region77: #{_lambda_.1} parent=11 // pred_check
          %p676 = pneg %p448
        $region78: #{_lambda_.1} parent=11 // pred_check_branch
          %678 = sbr.rel (%p676) target = $region80
        $region79: #{_lambda_.1} parent=11 // pred_region
          %s680 = ssub.s32 256, 256
          %681 = vsyncadd [#allocation27], %s680
          %s682 = sshll.u32 [#allocation26], 4
          %s683 = int_to_ptr.vmem [resolvable:$true] %s682
          %688 = dma.hbm_to_vmem [thread:$0]  %s18, 256, %s683, [#allocation27], 128, 128, 8
        $region80: #{_lambda_.1} parent=11 // pred_fallthru
          _
        // Predicated region
        $region81: #{_lambda_.1} parent=11 // pred_check
          %p689 = pneg %p469
        $region82: #{_lambda_.1} parent=11 // pred_check_branch
          %691 = sbr.rel (%p689) target = $region84
        $region83: #{_lambda_.1} parent=11 // pred_region
          _
        $region84: #{_lambda_.1} parent=11 // pred_fallthru
          _
      $region12: #{_lambda_.1} parent=5 // pred_fallthru
        _
      %p692 = scmp.lt.s32.totalorder %s39, 6
      // Predicated region
      $region85: #{_lambda_.1} parent=5 // pred_check
        %p693 = pneg %p692
      $region86: #{_lambda_.1} parent=5 // pred_check_branch
        %695 = sbr.rel (%p693) target = $region88
      $region87: #{_lambda_.1} parent=5 // pred_region
        // Predicated region
        $region89: #{_lambda_.1} parent=87 // pred_check
          %p696 = pneg %p59
        $region90: #{_lambda_.1} parent=87 // pred_check_branch
          %698 = sbr.rel (%p696) target = $region92
        $region91: #{_lambda_.1} parent=87 // pred_region
          %s699 = sand.u32 %s49, 1
          %s700 = scalar_lea.sflag [#allocation4], %s699
          %s701 = sand.u32 %s49, 1
          %s702 = smul.addr %s701, 32
          %s703 = scalar_lea.vmem [#allocation3], %s702
          %s705 = ssub.s32 512, 512
          %706 = vsyncadd %s700, %s705
          %s707 = smul.addr %s39, 4
          %s708 = smul.addr %s707, 128
          %s709 = scalar_lea.hbm %s0, %s708
          %s710 = sshll.u32 %s703, 4
          %s711 = int_to_ptr.vmem [resolvable:$true] %s710
          %716 = dma.hbm_to_vmem [thread:$0]  %s709, 512, %s711, %s700, 128, 128, 8
        $region92: #{_lambda_.1} parent=87 // pred_fallthru
          _
        // Predicated region
        $region93: #{_lambda_.1} parent=87 // pred_check
          %p717 = pneg %p85
        $region94: #{_lambda_.1} parent=87 // pred_check_branch
          %719 = sbr.rel (%p717) target = $region96
        $region95: #{_lambda_.1} parent=87 // pred_region
          %s720 = sand.u32 %s39, 1
          %s721 = scalar_lea.sflag [#allocation6], %s720
          %s722 = sand.u32 %s75, 1
          %s723 = smul.addr %s722, 32
          %s724 = scalar_lea.vmem [#allocation5], %s723
          %s726 = ssub.s32 512, 512
          %727 = vsyncadd %s721, %s726
          %s728 = smul.addr %s39, 4
          %s729 = smul.addr %s728, 128
          %s730 = scalar_lea.hbm %s1, %s729
          %s731 = sshll.u32 %s724, 4
          %s732 = int_to_ptr.vmem [resolvable:$true] %s731
          %737 = dma.hbm_to_vmem [thread:$0]  %s730, 512, %s732, %s721, 128, 128, 8
        $region96: #{_lambda_.1} parent=87 // pred_fallthru
          _
      $region88: #{_lambda_.1} parent=5 // pred_fallthru
        _
      %p738 = scmp.le.s32.totalorder 1, %s39
      %p739 = scmp.lt.s32.totalorder %s39, 7
      %p740 = pnand %p738, %p739
      %p741 = pneg %p740
      // Predicated region
      $region97: #{_lambda_.1} parent=5 // pred_check
        _
      $region98: #{_lambda_.1} parent=5 // pred_check_branch
        %743 = sbr.rel (%p740) target = $region100
      $region99: #{_lambda_.1} parent=5 // pred_region
        %s744 = ssub.s32 %s39, 1
        %s745 = sand.u32 %s52, 1
        %s746 = scalar_lea.sflag [#allocation4], %s745
        %s747 = sand.u32 %s52, 1
        %s748 = smul.addr %s747, 32
        %s749 = scalar_lea.vmem [#allocation3], %s748
        // Predicated region
        $region101: #{_lambda_.1} parent=99 // pred_check
          %p750 = pneg %p65
        $region102: #{_lambda_.1} parent=99 // pred_check_branch
          %752 = sbr.rel (%p750) target = $region104
        $region103: #{_lambda_.1} parent=99 // pred_region
          %753 = dma.done %s746, 512
        $region104: #{_lambda_.1} parent=99 // pred_fallthru
          _
        %s754 = sand.u32 %s44, 1
        %s755 = scalar_lea.sflag [#allocation6], %s754
        %s756 = sand.u32 %s78, 1
        %s757 = smul.addr %s756, 32
        %s758 = scalar_lea.vmem [#allocation5], %s757
        // Predicated region
        $region105: #{_lambda_.1} parent=99 // pred_check
          %p759 = pneg %p91
        $region106: #{_lambda_.1} parent=99 // pred_check_branch
          %761 = sbr.rel (%p759) target = $region108
        $region107: #{_lambda_.1} parent=99 // pred_region
          %762 = dma.done %s755, 512
        $region108: #{_lambda_.1} parent=99 // pred_fallthru
          _
        // Predicated region
        $region109: #{_lambda_.1} parent=99 // pred_check
          %p763 = pneg %p112
        $region110: #{_lambda_.1} parent=99 // pred_check_branch
          %765 = sbr.rel (%p763) target = $region112
        $region111: #{_lambda_.1} parent=99 // pred_region
          %766 = dma.done [#allocation6], 384
        $region112: #{_lambda_.1} parent=99 // pred_fallthru
          _
        // Predicated region
        $region113: #{_lambda_.1} parent=99 // pred_check
          %p767 = pneg %p133
        $region114: #{_lambda_.1} parent=99 // pred_check_branch
          %769 = sbr.rel (%p767) target = $region116
        $region115: #{_lambda_.1} parent=99 // pred_region
          %770 = dma.done [#allocation9], 128
        $region116: #{_lambda_.1} parent=99 // pred_fallthru
          _
        // Predicated region
        $region117: #{_lambda_.1} parent=99 // pred_check
          %p771 = pneg %p154
        $region118: #{_lambda_.1} parent=99 // pred_check_branch
          %773 = sbr.rel (%p771) target = $region120
        $region119: #{_lambda_.1} parent=99 // pred_region
          %774 = dma.done [#allocation9], 16
        $region120: #{_lambda_.1} parent=99 // pred_fallthru
          _
        // Predicated region
        $region121: #{_lambda_.1} parent=99 // pred_check
          %p775 = pneg %p175
        $region122: #{_lambda_.1} parent=99 // pred_check_branch
          %777 = sbr.rel (%p775) target = $region124
        $region123: #{_lambda_.1} parent=99 // pred_region
          %778 = dma.done [#allocation12], 16
        $region124: #{_lambda_.1} parent=99 // pred_fallthru
          _
        // Predicated region
        $region125: #{_lambda_.1} parent=99 // pred_check
          %p779 = pneg %p196
        $region126: #{_lambda_.1} parent=99 // pred_check_branch
          %781 = sbr.rel (%p779) target = $region128
        $region127: #{_lambda_.1} parent=99 // pred_region
          %782 = dma.done [#allocation12], 16
        $region128: #{_lambda_.1} parent=99 // pred_fallthru
          _
        // Predicated region
        $region129: #{_lambda_.1} parent=99 // pred_check
          %p783 = pneg %p217
        $region130: #{_lambda_.1} parent=99 // pred_check_branch
          %785 = sbr.rel (%p783) target = $region132
        $region131: #{_lambda_.1} parent=99 // pred_region
          %786 = dma.done [#allocation15], 2560
        $region132: #{_lambda_.1} parent=99 // pred_fallthru
          _
        // Predicated region
        $region133: #{_lambda_.1} parent=99 // pred_check
          %p787 = pneg %p238
        $region134: #{_lambda_.1} parent=99 // pred_check_branch
          %789 = sbr.rel (%p787) target = $region136
        $region135: #{_lambda_.1} parent=99 // pred_region
          %790 = dma.done [#allocation15], 1280
        $region136: #{_lambda_.1} parent=99 // pred_fallthru
          _
        // Predicated region
        $region137: #{_lambda_.1} parent=99 // pred_check
          %p791 = pneg %p259
        $region138: #{_lambda_.1} parent=99 // pred_check_branch
          %793 = sbr.rel (%p791) target = $region140
        $region139: #{_lambda_.1} parent=99 // pred_region
          %794 = dma.done [#allocation18], 640
        $region140: #{_lambda_.1} parent=99 // pred_fallthru
          _
        // Predicated region
        $region141: #{_lambda_.1} parent=99 // pred_check
          %p795 = pneg %p301
        $region142: #{_lambda_.1} parent=99 // pred_check_branch
          %797 = sbr.rel (%p795) target = $region144
        $region143: #{_lambda_.1} parent=99 // pred_region
          %798 = dma.done [#allocation18], 256
        $region144: #{_lambda_.1} parent=99 // pred_fallthru
          _
        // Predicated region
        $region145: #{_lambda_.1} parent=99 // pred_check
          %p799 = pneg %p322
        $region146: #{_lambda_.1} parent=99 // pred_check_branch
          %801 = sbr.rel (%p799) target = $region148
        $region147: #{_lambda_.1} parent=99 // pred_region
          %802 = dma.done [#allocation21], 256
        $region148: #{_lambda_.1} parent=99 // pred_fallthru
          _
        // Predicated region
        $region149: #{_lambda_.1} parent=99 // pred_check
          %p803 = pneg %p343
        $region150: #{_lambda_.1} parent=99 // pred_check_branch
          %805 = sbr.rel (%p803) target = $region152
        $region151: #{_lambda_.1} parent=99 // pred_region
          %806 = dma.done [#allocation21], 128
        $region152: #{_lambda_.1} parent=99 // pred_fallthru
          _
        // Predicated region
        $region153: #{_lambda_.1} parent=99 // pred_check
          %p807 = pneg %p364
        $region154: #{_lambda_.1} parent=99 // pred_check_branch
          %809 = sbr.rel (%p807) target = $region156
        $region155: #{_lambda_.1} parent=99 // pred_region
          %810 = dma.done [#allocation24], 64
        $region156: #{_lambda_.1} parent=99 // pred_fallthru
          _
        // Predicated region
        $region157: #{_lambda_.1} parent=99 // pred_check
          %p811 = pneg %p427
        $region158: #{_lambda_.1} parent=99 // pred_check_branch
          %813 = sbr.rel (%p811) target = $region160
        $region159: #{_lambda_.1} parent=99 // pred_region
          %814 = dma.done [#allocation24], 512
        $region160: #{_lambda_.1} parent=99 // pred_fallthru
          _
        // Predicated region
        $region161: #{_lambda_.1} parent=99 // pred_check
          %p815 = pneg %p448
        $region162: #{_lambda_.1} parent=99 // pred_check_branch
          %817 = sbr.rel (%p815) target = $region164
        $region163: #{_lambda_.1} parent=99 // pred_region
          %818 = dma.done [#allocation27], 256
        $region164: #{_lambda_.1} parent=99 // pred_fallthru
          _
        %s819 = sand.u32 %s52, 1
        %s820 = scalar_lea.sflag [#allocation4], %s819
        %s821 = sand.u32 %s52, 1
        %s822 = smul.addr %s821, 32
        %s823 = scalar_lea.vmem [#allocation3], %s822
        %p824 = pneg %p65
        %p825 = pneg %p62
        %s826 = sand.u32 %s44, 1
        %s827 = scalar_lea.sflag [#allocation6], %s826
        %s828 = sand.u32 %s78, 1
        %s829 = smul.addr %s828, 32
        %s830 = scalar_lea.vmem [#allocation5], %s829
        %p831 = pneg %p91
        %p832 = pneg %p88
        %p833 = pneg %p112
        %p834 = pneg %p109
        %p835 = pneg %p133
        %p836 = pneg %p130
        %p837 = pneg %p154
        %p838 = pneg %p151
        %p839 = pneg %p175
        %p840 = pneg %p172
        %p841 = pneg %p196
        %p842 = pneg %p193
        %p843 = pneg %p217
        %p844 = pneg %p214
        %p845 = pneg %p238
        %p846 = pneg %p235
        %p847 = pneg %p259
        %p848 = pneg %p256
        %p849 = pneg %p280
        %p850 = pneg %p277
        %p851 = pneg %p301
        %p852 = pneg %p298
        %p853 = pneg %p322
        %p854 = pneg %p319
        %p855 = pneg %p343
        %p856 = pneg %p340
        %p857 = pneg %p364
        %p858 = pneg %p361
        %p859 = pneg %p385
        %p860 = pneg %p382
        %p861 = pneg %p406
        %p862 = pneg %p403
        %p863 = pneg %p427
        %p864 = pneg %p424
        %p865 = pneg %p448
        %p866 = pneg %p445
        %p867 = pneg %p469
        %p868 = pneg %p466
        %p869 = pneg %p495
        %p870 = pneg %p492
        %p871 = scmp.lt.s32.totalorder %s44, 5
        %s872 = scalar_select %p871, %s44, 5
        %s873 = scalar_lea.vmem %s20, %s872
        %p874 = scmp.lt.s32.totalorder %s44, 5
        %s875 = scalar_select %p874, %s44, 5
        %s876 = scalar_lea.vmem %s20, %s875
        %v877 = vld [vmem:[%s749] sm:$0xff]
        %v878 = vld [vmem:[%s749 + $0x8] sm:$0xff]
        %v879 = vld [vmem:[%s749 + $0x10] sm:$0xff]
        %v880 = vld [vmem:[%s749 + $0x18] sm:$0xff]
        %v881 = vld [vmem:[%s758] sm:$0xff]
        %v882 = vld [vmem:[%s758 + $0x8] sm:$0xff]
        %v883 = vld [vmem:[%s758 + $0x10] sm:$0xff]
        %v884 = vld [vmem:[%s758 + $0x18] sm:$0xff]
        %v885 = vld [vmem:[#allocation7] sm:$0xff]
        %v886 = vld [vmem:[#allocation7 + $0x8] sm:$0xff]
        %v887 = vld [vmem:[#allocation7 + $0x10] sm:$0x3f]
        %v888 = vld [vmem:[#allocation14] sm:$0xff]
        %v889 = vld [vmem:[#allocation14 + $0x8] sm:$0xff]
        %v890 = vld [vmem:[#allocation14 + $0x10] sm:$0xff]
        %v891 = vld [vmem:[#allocation14 + $0x18] sm:$0xff]
        %v892 = vld [vmem:[#allocation14 + $0x20] sm:$0xff]
        %v893 = vld [vmem:[#allocation14 + $0x28] sm:$0xff]
        %v894 = vld [vmem:[#allocation14 + $0x30] sm:$0xff]
        %v895 = vld [vmem:[#allocation14 + $0x38] sm:$0xff]
        %v896 = vld [vmem:[#allocation14 + $0x40] sm:$0xff]
        %v897 = vld [vmem:[#allocation14 + $0x48] sm:$0xff]
        %v898 = vld [vmem:[#allocation14 + $0x50] sm:$0xff]
        %v899 = vld [vmem:[#allocation14 + $0x58] sm:$0xff]
        %v900 = vld [vmem:[#allocation14 + $0x60] sm:$0xff]
        %v901 = vld [vmem:[#allocation14 + $0x68] sm:$0xff]
        %v902 = vld [vmem:[#allocation14 + $0x70] sm:$0xff]
        %v903 = vld [vmem:[#allocation14 + $0x78] sm:$0xff]
        %v904 = vld [vmem:[#allocation14 + $0x80] sm:$0xff]
        %v905 = vld [vmem:[#allocation14 + $0x88] sm:$0xff]
        %v906 = vld [vmem:[#allocation14 + $0x90] sm:$0xff]
        %v907 = vld [vmem:[#allocation14 + $0x98] sm:$0xff]
        %vm908 = vcmask 261120
        %909 = vst.msk [vmem:[#allocation2] sm:$0xff] %vm908, %v877
        %910 = vst.msk [vmem:[#allocation2 + $0x10] sm:$0xff] %vm908, %v878
        %911 = vst.msk [vmem:[#allocation2 + $0x20] sm:$0xff] %vm908, %v879
        %912 = vst.msk [vmem:[#allocation2 + $0x30] sm:$0xff] %vm908, %v880
        %917 = vrot.lane.b32.xlu0 %v881, 32
        %v918 = vpop.permute.xlu0 %917
        %919 = vrot.lane.b32.xlu0 %v882, 32
        %v920 = vpop.permute.xlu0 %919
        %921 = vrot.lane.b32.xlu0 %v883, 32
        %v922 = vpop.permute.xlu0 %921
        %923 = vrot.lane.b32.xlu0 %v884, 32
        %v924 = vpop.permute.xlu0 %923
        %vm929 = vcmask 523520
        %930 = vst.msk [vmem:[#allocation2] sm:$0xff] %vm929, %v918
        %931 = vst.msk [vmem:[#allocation2 + $0x10] sm:$0xff] %vm929, %v920
        %932 = vst.msk [vmem:[#allocation2 + $0x20] sm:$0xff] %vm929, %v922
        %933 = vst.msk [vmem:[#allocation2 + $0x30] sm:$0xff] %vm929, %v924
        %v934 = vmul.f32 %v877, %v877
        %v935 = vmul.f32 %v878, %v878
        %v936 = vmul.f32 %v879, %v879
        %v937 = vmul.f32 %v880, %v880
        %942 = vrot.lane.b32.xlu0 %v934, 64
        %v943 = vpop.permute.xlu0 %942
        %944 = vrot.lane.b32.xlu0 %v935, 64
        %v945 = vpop.permute.xlu0 %944
        %946 = vrot.lane.b32.xlu0 %v936, 64
        %v947 = vpop.permute.xlu0 %946
        %948 = vrot.lane.b32.xlu0 %v937, 64
        %v949 = vpop.permute.xlu0 %948
        %vm954 = vcmask 785920
        %955 = vst.msk [vmem:[#allocation2] sm:$0xff] %vm954, %v943
        %956 = vst.msk [vmem:[#allocation2 + $0x10] sm:$0xff] %vm954, %v945
        %957 = vst.msk [vmem:[#allocation2 + $0x20] sm:$0xff] %vm954, %v947
        %958 = vst.msk [vmem:[#allocation2 + $0x30] sm:$0xff] %vm954, %v949
        %v959 = vmul.f32 %v881, %v881
        %v960 = vmul.f32 %v882, %v882
        %v961 = vmul.f32 %v883, %v883
        %v962 = vmul.f32 %v884, %v884
        %967 = vrot.lane.b32.xlu0 %v959, 96
        %v968 = vpop.permute.xlu0 %967
        %969 = vrot.lane.b32.xlu0 %v960, 96
        %v970 = vpop.permute.xlu0 %969
        %971 = vrot.lane.b32.xlu0 %v961, 96
        %v972 = vpop.permute.xlu0 %971
        %973 = vrot.lane.b32.xlu0 %v962, 96
        %v974 = vpop.permute.xlu0 %973
        %vm979 = vcmask 1048320
        %980 = vst.msk [vmem:[#allocation2] sm:$0xff] %vm979, %v968
        %981 = vst.msk [vmem:[#allocation2 + $0x10] sm:$0xff] %vm979, %v970
        %982 = vst.msk [vmem:[#allocation2 + $0x20] sm:$0xff] %vm979, %v972
        %983 = vst.msk [vmem:[#allocation2 + $0x30] sm:$0xff] %vm979, %v974
        %v984 = vmul.f32 %v877, %v881
        %v985 = vmul.f32 %v878, %v882
        %v986 = vmul.f32 %v879, %v883
        %v987 = vmul.f32 %v880, %v884
        %988 = vst.msk [vmem:[#allocation2 + $0x8] sm:$0xff] %vm908, %v984
        %989 = vst.msk [vmem:[#allocation2 + $0x18] sm:$0xff] %vm908, %v985
        %990 = vst.msk [vmem:[#allocation2 + $0x28] sm:$0xff] %vm908, %v986
        %991 = vst.msk [vmem:[#allocation2 + $0x38] sm:$0xff] %vm908, %v987
        %v992 = vld [vmem:[#allocation2] sm:$0xff]
        %v993 = vld [vmem:[#allocation2 + $0x8] sm:$0xff]
        %v994 = vld [vmem:[#allocation2 + $0x10] sm:$0xff]
        %v995 = vld [vmem:[#allocation2 + $0x18] sm:$0xff]
        %v996 = vld [vmem:[#allocation2 + $0x20] sm:$0xff]
        %v997 = vld [vmem:[#allocation2 + $0x28] sm:$0xff]
        %v998 = vld [vmem:[#allocation2 + $0x30] sm:$0xff]
        %v999 = vld [vmem:[#allocation2 + $0x38] sm:$0xff]
        %v1001 = vsel %vm908, %v885, 0
        %v1004 = vsel %vm908, %v886, 0
        %v1007 = vsel %vm908, %v887, 0
        %1009 = vmatprep.subr.mxu0 %v993
        %1010 = vmatpush1.msra.mxu0 %v992
        %1011 = vmatprep.subr.mxu0 %v995
        %1012 = vmatpush1.msra.mxu0 %v994
        %1013 = vmatprep.subr.mxu0 %v997
        %1014 = vmatpush1.msra.mxu0 %v996
        %1015 = vmatprep.subr.mxu0 %v999
        %1016 = vmatpush1.msra.mxu0 %v998
        %1017 = vmatprep.subr.mxu0 0.0
        %1018 = vmatpush1.msra.mxu0 0.0
        %1019 = vmatprep.subr.mxu0 0.0
        %1020 = vmatpush1.msra.mxu0 0.0
        %1021 = vmatprep.subr.mxu0 0.0
        %1022 = vmatpush1.msra.mxu0 0.0
        %1023 = vmatprep.subr.mxu0 0.0
        %1024 = vmatpush1.msra.mxu0 0.0
        %1025 = vmatprep.subr.mxu0 0.0
        %1026 = vmatpush1.msra.mxu0 0.0
        %1027 = vmatprep.subr.mxu0 0.0
        %1028 = vmatpush1.msra.mxu0 0.0
        %1029 = vmatprep.subr.mxu0 0.0
        %1030 = vmatpush1.msra.mxu0 0.0
        %1031 = vmatprep.subr.mxu0 0.0
        %1032 = vmatpush1.msra.mxu0 0.0
        %1033 = vmatprep.subr.mxu0 0.0
        %1034 = vmatpush1.msra.mxu0 0.0
        %1035 = vmatprep.subr.mxu0 0.0
        %1036 = vmatpush1.msra.mxu0 0.0
        %1037 = vmatprep.subr.mxu0 0.0
        %1038 = vmatpush1.msra.mxu0 0.0
        %1039 = vmatprep.subr.mxu0 0.0
        %1040 = vmatpush1.msra.mxu0 0.0
        %1041 = vmatprep.subr.mxu0 0.0
        %1042 = vmatpush1.msra.mxu0 0.0
        %1043 = vmatprep.subr.mxu0 0.0
        %1044 = vmatpush1.msra.mxu0 0.0
        %1045 = vmatprep.subr.mxu0 0.0
        %1046 = vmatpush1.msra.mxu0 0.0
        %1047 = vmatprep.subr.mxu0 0.0
        %1048 = vmatpush1.msra.mxu0 0.0
        %1049 = vmatprep.subr.mxu0 0.0
        %1050 = vmatpush1.msra.mxu0 0.0
        %1051 = vmatprep.subr.mxu0 0.0
        %1052 = vmatpush1.msra.mxu0 0.0
        %1053 = vmatprep.subr.mxu0 0.0
        %1054 = vmatpush1.msra.mxu0 0.0
        %1055 = vmatprep.subr.mxu0 0.0
        %1056 = vmatpush1.msra.mxu0 0.0
        %1057 = vmatprep.subr.mxu0 0.0
        %1058 = vmatpush1.msra.mxu0 0.0
        %1059 = vmatprep.subr.mxu0 0.0
        %1060 = vmatpush1.msra.mxu0 0.0
        %1061 = vmatprep.subr.mxu0 0.0
        %1062 = vmatpush1.msra.mxu0 0.0
        %1063 = vmatprep.subr.mxu0 0.0
        %1064 = vmatpush1.msra.mxu0 0.0
        %1065 = vmatprep.subr.mxu0 0.0
        %1066 = vmatpush1.msra.mxu0 0.0
        %1067 = vmatprep.subr.mxu0 0.0
        %1068 = vmatpush1.msra.mxu0 0.0
        %1069 = vmatprep.subr.mxu0 0.0
        %1070 = vmatpush1.msra.mxu0 0.0
        %1071 = vmatprep.subr.mxu0 0.0
        %1072 = vmatpush1.msra.mxu0 0.0
        %1073 = vmatprep.mubr.f32.mxu0 0.0
        %1074 = vmatmul.mubr.f32.gmra.mrb[0].mxu0 %v1001
        %v1075 = vpop.f32.mrb[0].mxu0
        %v1076 = vadd.f32 0.0, %v1075
        %v1077 = vpop.f32.mrb[0].mxu0
        %v1078 = vadd.f32 0.0, %v1077
        %1079 = vmatprep.mubr.f32.mxu0 0.0
        %1080 = vmatmul.mubr.f32.gmra.mrb[0].mxu0 %v1004
        %v1081 = vpop.f32.mrb[0].mxu0
        %v1082 = vadd.f32 0.0, %v1081
        %v1083 = vpop.f32.mrb[0].mxu0
        %v1084 = vadd.f32 0.0, %v1083
        %1085 = vmatprep.mubr.f32.mxu0 0.0
        %1086 = vmatmul.mubr.f32.gmra.mrb[0].mxu0 %v1007
        %v1087 = vpop.f32.mrb[0].mxu0
        %v1088 = vadd.f32 0.0, %v1087
        %v1089 = vpop.f32.mrb[0].mxu0
        %v1090 = vadd.f32 0.0, %v1089
        %1091 = vdwg.mxu0
        %v1093 = vsel %vm908, %v1078, 0
        %v1096 = vsel %vm908, %v1084, 0
        %v1099 = vsel %vm908, %v1090, 0
        %1101 = vmatprep.subr.mxu0 0.0
        %1102 = vmatpush1.msra.mxu0 %v888
        %1103 = vmatprep.subr.mxu0 0.0
        %1104 = vmatpush1.msra.mxu0 %v889
        %1105 = vmatprep.subr.mxu0 0.0
        %1106 = vmatpush1.msra.mxu0 %v890
        %1107 = vmatprep.subr.mxu0 0.0
        %1108 = vmatpush1.msra.mxu0 %v891
        %1109 = vmatprep.subr.mxu0 0.0
        %1110 = vmatpush1.msra.mxu0 %v892
        %1111 = vmatprep.subr.mxu0 0.0
        %1112 = vmatpush1.msra.mxu0 %v893
        %1113 = vmatprep.subr.mxu0 0.0
        %1114 = vmatpush1.msra.mxu0 %v894
        %1115 = vmatprep.subr.mxu0 0.0
        %1116 = vmatpush1.msra.mxu0 %v895
        %1117 = vmatprep.subr.mxu0 0.0
        %1118 = vmatpush1.msra.mxu0 %v896
        %1119 = vmatprep.subr.mxu0 0.0
        %1120 = vmatpush1.msra.mxu0 %v897
        %1121 = vmatprep.subr.mxu0 0.0
        %1122 = vmatpush1.msra.mxu0 %v898
        %1123 = vmatprep.subr.mxu0 0.0
        %1124 = vmatpush1.msra.mxu0 %v899
        %1125 = vmatprep.subr.mxu0 0.0
        %1126 = vmatpush1.msra.mxu0 %v900
        %1127 = vmatprep.subr.mxu0 0.0
        %1128 = vmatpush1.msra.mxu0 %v901
        %1129 = vmatprep.subr.mxu0 0.0
        %1130 = vmatpush1.msra.mxu0 %v902
        %1131 = vmatprep.subr.mxu0 0.0
        %1132 = vmatpush1.msra.mxu0 %v903
        %1133 = vmatprep.subr.mxu0 0.0
        %1134 = vmatpush1.msra.mxu0 %v904
        %1135 = vmatprep.subr.mxu0 0.0
        %1136 = vmatpush1.msra.mxu0 %v905
        %1137 = vmatprep.subr.mxu0 0.0
        %1138 = vmatpush1.msra.mxu0 %v906
        %1139 = vmatprep.subr.mxu0 0.0
        %1140 = vmatpush1.msra.mxu0 %v907
        %1141 = vmatprep.subr.mxu0 0.0
        %1142 = vmatpush1.msra.mxu0 0.0
        %1143 = vmatprep.subr.mxu0 0.0
        %1144 = vmatpush1.msra.mxu0 0.0
        %1145 = vmatprep.subr.mxu0 0.0
        %1146 = vmatpush1.msra.mxu0 0.0
        %1147 = vmatprep.subr.mxu0 0.0
        %1148 = vmatpush1.msra.mxu0 0.0
        %1149 = vmatprep.subr.mxu0 0.0
        %1150 = vmatpush1.msra.mxu0 0.0
        %1151 = vmatprep.subr.mxu0 0.0
        %1152 = vmatpush1.msra.mxu0 0.0
        %1153 = vmatprep.subr.mxu0 0.0
        %1154 = vmatpush1.msra.mxu0 0.0
        %1155 = vmatprep.subr.mxu0 0.0
        %1156 = vmatpush1.msra.mxu0 0.0
        %1157 = vmatprep.subr.mxu0 0.0
        %1158 = vmatpush1.msra.mxu0 0.0
        %1159 = vmatprep.subr.mxu0 0.0
        %1160 = vmatpush1.msra.mxu0 0.0
        %1161 = vmatprep.subr.mxu0 0.0
        %1162 = vmatpush1.msra.mxu0 0.0
        %1163 = vmatprep.subr.mxu0 0.0
        %1164 = vmatpush1.msra.mxu0 0.0
        %1165 = vmatprep.mubr.f32.mxu0 %v1093
        %1166 = vmatmul.mubr.f32.gmra.mrb[0].mxu0 %v1076
        %v1167 = vpop.f32.mrb[0].mxu0
        %v1168 = vadd.f32 0.0, %v1167
        %v1169 = vpop.f32.mrb[0].mxu0
        %1170 = vmatprep.mubr.f32.mxu0 %v1096
        %1171 = vmatmul.mubr.f32.gmra.mrb[0].mxu0 %v1082
        %v1172 = vpop.f32.mrb[0].mxu0
        %v1173 = vadd.f32 0.0, %v1172
        %v1174 = vpop.f32.mrb[0].mxu0
        %1175 = vmatprep.mubr.f32.mxu0 %v1099
        %1176 = vmatmul.mubr.f32.gmra.mrb[0].mxu0 %v1088
        %v1177 = vpop.f32.mrb[0].mxu0
        %v1178 = vadd.f32 0.0, %v1177
        %v1179 = vpop.f32.mrb[0].mxu0
        %1180 = vdwg.mxu0
        %v1181 = vmul.f32 %v1168, %v1168
        %v1182 = vmul.f32 %v1173, %v1173
        %v1183 = vmul.f32 %v1178, %v1178
        %1187 = vrot.lane.b32.xlu0 %v1168, 106
        %v1188 = vpop.permute.xlu0 %1187
        %1189 = vrot.lane.b32.xlu0 %v1173, 106
        %v1190 = vpop.permute.xlu0 %1189
        %1191 = vrot.lane.b32.xlu0 %v1178, 106
        %v1192 = vpop.permute.xlu0 %1191
        %v1196 = vmul.f32 %v1168, %v1188
        %v1197 = vmul.f32 %v1173, %v1190
        %v1198 = vmul.f32 %v1178, %v1192
        %1202 = vrot.lane.b32.xlu0 %v1181, 44
        %v1203 = vpop.permute.xlu0 %1202
        %1204 = vrot.lane.b32.xlu0 %v1182, 44
        %v1205 = vpop.permute.xlu0 %1204
        %1206 = vrot.lane.b32.xlu0 %v1183, 44
        %v1207 = vpop.permute.xlu0 %1206
        %v1211 = vsub.f32 %v1168, %v1203
        %v1212 = vsub.f32 %v1173, %v1205
        %v1213 = vsub.f32 %v1178, %v1207
        %1217 = vrot.lane.b32.xlu0 %v1196, 88
        %v1218 = vpop.permute.xlu0 %1217
        %1219 = vrot.lane.b32.xlu0 %v1197, 88
        %v1220 = vpop.permute.xlu0 %1219
        %1221 = vrot.lane.b32.xlu0 %v1198, 88
        %v1222 = vpop.permute.xlu0 %1221
        %v1226 = vsub.f32 %v1168, %v1218
        %v1227 = vsub.f32 %v1173, %v1220
        %v1228 = vsub.f32 %v1178, %v1222
        %v1229 = vmul.f32 %v1226, 2.0
        %v1230 = vmul.f32 %v1227, 2.0
        %v1231 = vmul.f32 %v1228, 2.0
        %v1232 = vadd.f32 %v1229, 0.0225
        %v1233 = vadd.f32 %v1230, 0.0225
        %v1234 = vadd.f32 %v1231, 0.0225
        %1238 = vrot.lane.b32.xlu0 %v1211, 106
        %v1239 = vpop.permute.xlu0 %1238
        %1240 = vrot.lane.b32.xlu0 %v1212, 106
        %v1241 = vpop.permute.xlu0 %1240
        %1242 = vrot.lane.b32.xlu0 %v1213, 106
        %v1243 = vpop.permute.xlu0 %1242
        %v1247 = vadd.f32 %v1211, %v1239
        %v1248 = vadd.f32 %v1212, %v1241
        %v1249 = vadd.f32 %v1213, %v1243
        %v1250 = vadd.f32 %v1247, 0.0225
        %v1251 = vadd.f32 %v1248, 0.0225
        %v1252 = vadd.f32 %v1249, 0.0225
        %v1253 = vrcp.pop %v1250
        %v1254 = vrcp.pop %v1251
        %v1255 = vrcp.pop %v1252
        %1259 = vrot.lane.b32.xlu0 %v1253, 44
        %v1260 = vpop.permute.xlu0 %1259
        %1261 = vrot.lane.b32.xlu0 %v1254, 44
        %v1262 = vpop.permute.xlu0 %1261
        %1263 = vrot.lane.b32.xlu0 %v1255, 44
        %v1264 = vpop.permute.xlu0 %1263
        %v1268 = vmul.f32 %v1232, %v1260
        %v1269 = vmul.f32 %v1233, %v1262
        %v1270 = vmul.f32 %v1234, %v1264
        %v1271 = vmul.f32 %v1196, 2.0
        %v1272 = vmul.f32 %v1197, 2.0
        %v1273 = vmul.f32 %v1198, 2.0
        %v1274 = vadd.f32 %v1271, 0.0025
        %v1275 = vadd.f32 %v1272, 0.0025
        %v1276 = vadd.f32 %v1273, 0.0025
        %1280 = vrot.lane.b32.xlu0 %v1268, 40
        %v1281 = vpop.permute.xlu0 %1280
        %1282 = vrot.lane.b32.xlu0 %v1269, 40
        %v1283 = vpop.permute.xlu0 %1282
        %1284 = vrot.lane.b32.xlu0 %v1270, 40
        %v1285 = vpop.permute.xlu0 %1284
        %v1289 = vmul.f32 %v1274, %v1281
        %v1290 = vmul.f32 %v1275, %v1283
        %v1291 = vmul.f32 %v1276, %v1285
        %1292 = vrot.lane.b32.xlu0 %v1181, 106
        %v1293 = vpop.permute.xlu0 %1292
        %1294 = vrot.lane.b32.xlu0 %v1182, 106
        %v1295 = vpop.permute.xlu0 %1294
        %1296 = vrot.lane.b32.xlu0 %v1183, 106
        %v1297 = vpop.permute.xlu0 %1296
        %v1301 = vadd.f32 %v1181, %v1293
        %v1302 = vadd.f32 %v1182, %v1295
        %v1303 = vadd.f32 %v1183, %v1297
        %v1304 = vadd.f32 %v1301, 0.0025
        %v1305 = vadd.f32 %v1302, 0.0025
        %v1306 = vadd.f32 %v1303, 0.0025
        %v1307 = vrcp.pop %v1304
        %v1308 = vrcp.pop %v1305
        %v1309 = vrcp.pop %v1306
        %v1310 = vmul.f32 %v1289, %v1307
        %v1311 = vmul.f32 %v1290, %v1308
        %v1312 = vmul.f32 %v1291, %v1309
        %vm1313 = vcmask 179200
        %v1314 = vsel %vm1313, %v1310, 0.0
        %v1315 = vsel %vm1313, %v1311, 0.0
        %v1316 = vadd.f32 %v1314, %v1315
        %vm1317 = vcmask 177152
        %v1318 = vsel %vm1317, %v1312, 0.0
        %v1319 = vadd.f32 %v1316, %v1318
        %1320 = vadd.xlane.f32.xlu0 %v1319
        %v1321 = vpop.xlane.xlu0 %1320
        %v1322 = vrot.slane %v1321, 4
        %v1323 = vadd.f32 %v1321, %v1322
        %v1324 = vrot.slane %v1323, 2
        %v1325 = vadd.f32 %v1323, %v1324
        %v1326 = vrot.slane %v1325, 1
        %v1327 = vadd.f32 %v1325, %v1326
        %s1328 = vtos %v1327
        %v1329 = vstv %s1328
        %vm1330 = vcmask 0
        %1331 = vst.msk [vmem:[%s876] sm:$0x1] %vm1330, %v1329
        %v1332 = vsel %vm1313, %v1281, 0.0
        %v1333 = vsel %vm1313, %v1283, 0.0
        %v1334 = vadd.f32 %v1332, %v1333
        %v1335 = vsel %vm1317, %v1285, 0.0
        %v1336 = vadd.f32 %v1334, %v1335
        %1337 = vadd.xlane.f32.xlu0 %v1336
        %v1338 = vpop.xlane.xlu0 %1337
        %v1339 = vrot.slane %v1338, 4
        %v1340 = vadd.f32 %v1338, %v1339
        %v1341 = vrot.slane %v1340, 2
        %v1342 = vadd.f32 %v1340, %v1341
        %v1343 = vrot.slane %v1342, 1
        %v1344 = vadd.f32 %v1342, %v1343
        %s1345 = vtos %v1344
        %v1346 = vstv %s1345
        %vm1347 = vcmask 8200
        %1348 = vst.msk [vmem:[%s876] sm:$0x1] %vm1347, %v1346
        %v1349 = vld [vmem:[#allocation20] sm:$0xff]
        %v1350 = vld [vmem:[#allocation20 + $0x8] sm:$0xff]
        %v1351 = vld [vmem:[%s16] sm:$0xff]
        %v1352 = vld [vmem:[%s16 + $0x8] sm:$0xff]
        %v1353 = vld [vmem:[%s16 + $0x10] sm:$0xff]
        %v1354 = vld [vmem:[%s16 + $0x18] sm:$0xff]
        %v1355 = vld [vmem:[%s16 + $0x20] sm:$0xff]
        %v1356 = vld [vmem:[%s16 + $0x28] sm:$0xff]
        %v1357 = vld [vmem:[%s16 + $0x30] sm:$0xff]
        %v1358 = vld [vmem:[%s16 + $0x38] sm:$0xff]
        %1359 = vst.msk [vmem:[#allocation2] sm:$0xff] %vm908, %v877
        %1360 = vst.msk [vmem:[#allocation2 + $0x10] sm:$0xff] %vm908, %v878
        %1361 = vst.msk [vmem:[#allocation2 + $0x20] sm:$0xff] %vm908, %v879
        %1362 = vst.msk [vmem:[#allocation2 + $0x30] sm:$0xff] %vm908, %v880
        %1363 = vst.msk [vmem:[#allocation2] sm:$0xff] %vm929, %v918
        %1364 = vst.msk [vmem:[#allocation2 + $0x10] sm:$0xff] %vm929, %v920
        %1365 = vst.msk [vmem:[#allocation2 + $0x20] sm:$0xff] %vm929, %v922
        %1366 = vst.msk [vmem:[#allocation2 + $0x30] sm:$0xff] %vm929, %v924
        %v1367 = vld [vmem:[#allocation2] sm:$0xff]
        %v1368 = vld [vmem:[#allocation2 + $0x10] sm:$0xff]
        %v1369 = vld [vmem:[#allocation2 + $0x20] sm:$0xff]
        %v1370 = vld [vmem:[#allocation2 + $0x30] sm:$0xff]
        %v1372 = vsel %vm908, %v1349, 0
        %v1375 = vsel %vm908, %v1350, 0
        %1377 = vmatprep.subr.mxu0 0.0
        %1378 = vmatpush1.msra.mxu0 %v1367
        %1379 = vmatprep.subr.mxu0 0.0
        %1380 = vmatpush1.msra.mxu0 %v1368
        %1381 = vmatprep.subr.mxu0 0.0
        %1382 = vmatpush1.msra.mxu0 %v1369
        %1383 = vmatprep.subr.mxu0 0.0
        %1384 = vmatpush1.msra.mxu0 %v1370
        %1385 = vmatprep.subr.mxu0 0.0
        %1386 = vmatpush1.msra.mxu0 0.0
        %1387 = vmatprep.subr.mxu0 0.0
        %1388 = vmatpush1.msra.mxu0 0.0
        %1389 = vmatprep.subr.mxu0 0.0
        %1390 = vmatpush1.msra.mxu0 0.0
        %1391 = vmatprep.subr.mxu0 0.0
        %1392 = vmatpush1.msra.mxu0 0.0
        %1393 = vmatprep.subr.mxu0 0.0
        %1394 = vmatpush1.msra.mxu0 0.0
        %1395 = vmatprep.subr.mxu0 0.0
        %1396 = vmatpush1.msra.mxu0 0.0
        %1397 = vmatprep.subr.mxu0 0.0
        %1398 = vmatpush1.msra.mxu0 0.0
        %1399 = vmatprep.subr.mxu0 0.0
        %1400 = vmatpush1.msra.mxu0 0.0
        %1401 = vmatprep.subr.mxu0 0.0
        %1402 = vmatpush1.msra.mxu0 0.0
        %1403 = vmatprep.subr.mxu0 0.0
        %1404 = vmatpush1.msra.mxu0 0.0
        %1405 = vmatprep.subr.mxu0 0.0
        %1406 = vmatpush1.msra.mxu0 0.0
        %1407 = vmatprep.subr.mxu0 0.0
        %1408 = vmatpush1.msra.mxu0 0.0
        %1409 = vmatprep.subr.mxu0 0.0
        %1410 = vmatpush1.msra.mxu0 0.0
        %1411 = vmatprep.subr.mxu0 0.0
        %1412 = vmatpush1.msra.mxu0 0.0
        %1413 = vmatprep.subr.mxu0 0.0
        %1414 = vmatpush1.msra.mxu0 0.0
        %1415 = vmatprep.subr.mxu0 0.0
        %1416 = vmatpush1.msra.mxu0 0.0
        %1417 = vmatprep.subr.mxu0 0.0
        %1418 = vmatpush1.msra.mxu0 0.0
        %1419 = vmatprep.subr.mxu0 0.0
        %1420 = vmatpush1.msra.mxu0 0.0
        %1421 = vmatprep.subr.mxu0 0.0
        %1422 = vmatpush1.msra.mxu0 0.0
        %1423 = vmatprep.subr.mxu0 0.0
        %1424 = vmatpush1.msra.mxu0 0.0
        %1425 = vmatprep.subr.mxu0 0.0
        %1426 = vmatpush1.msra.mxu0 0.0
        %1427 = vmatprep.subr.mxu0 0.0
        %1428 = vmatpush1.msra.mxu0 0.0
        %1429 = vmatprep.subr.mxu0 0.0
        %1430 = vmatpush1.msra.mxu0 0.0
        %1431 = vmatprep.subr.mxu0 0.0
        %1432 = vmatpush1.msra.mxu0 0.0
        %1433 = vmatprep.subr.mxu0 0.0
        %1434 = vmatpush1.msra.mxu0 0.0
        %1435 = vmatprep.subr.mxu0 0.0
        %1436 = vmatpush1.msra.mxu0 0.0
        %1437 = vmatprep.subr.mxu0 0.0
        %1438 = vmatpush1.msra.mxu0 0.0
        %1439 = vmatprep.subr.mxu0 0.0
        %1440 = vmatpush1.msra.mxu0 0.0
        %1441 = vmatprep.mubr.f32.mxu0 0.0
        %1442 = vmatmul.mubr.f32.gmra.mrb[0].mxu0 %v1372
        %v1443 = vpop.f32.mrb[0].mxu0
        %v1444 = vadd.f32 0.0, %v1443
        %v1445 = vpop.f32.mrb[0].mxu0
        %1446 = vmatprep.mubr.f32.mxu0 0.0
        %1447 = vmatmul.mubr.f32.gmra.mrb[0].mxu0 %v1375
        %v1448 = vpop.f32.mrb[0].mxu0
        %v1449 = vadd.f32 0.0, %v1448
        %v1450 = vpop.f32.mrb[0].mxu0
        %1451 = vdwg.mxu0
        %vm1452 = vcmask 523264
        %v1454 = vsel %vm1452, %v1444, 0
        %v1457 = vsel %vm1452, %v1449, 0
        %1459 = vmatprep.subr.mxu0 0.0
        %1460 = vmatpush1.msra.mxu0 %v1351
        %1461 = vmatprep.subr.mxu0 0.0
        %1462 = vmatpush1.msra.mxu0 %v1352
        %1463 = vmatprep.subr.mxu0 0.0
        %1464 = vmatpush1.msra.mxu0 %v1353
        %1465 = vmatprep.subr.mxu0 0.0
        %1466 = vmatpush1.msra.mxu0 %v1354
        %1467 = vmatprep.subr.mxu0 0.0
        %1468 = vmatpush1.msra.mxu0 %v1355
        %1469 = vmatprep.subr.mxu0 0.0
        %1470 = vmatpush1.msra.mxu0 %v1356
        %1471 = vmatprep.subr.mxu0 0.0
        %1472 = vmatpush1.msra.mxu0 %v1357
        %1473 = vmatprep.subr.mxu0 0.0
        %1474 = vmatpush1.msra.mxu0 %v1358
        %1475 = vmatprep.subr.mxu0 0.0
        %1476 = vmatpush1.msra.mxu0 0.0
        %1477 = vmatprep.subr.mxu0 0.0
        %1478 = vmatpush1.msra.mxu0 0.0
        %1479 = vmatprep.subr.mxu0 0.0
        %1480 = vmatpush1.msra.mxu0 0.0
        %1481 = vmatprep.subr.mxu0 0.0
        %1482 = vmatpush1.msra.mxu0 0.0
        %1483 = vmatprep.subr.mxu0 0.0
        %1484 = vmatpush1.msra.mxu0 0.0
        %1485 = vmatprep.subr.mxu0 0.0
        %1486 = vmatpush1.msra.mxu0 0.0
        %1487 = vmatprep.subr.mxu0 0.0
        %1488 = vmatpush1.msra.mxu0 0.0
        %1489 = vmatprep.subr.mxu0 0.0
        %1490 = vmatpush1.msra.mxu0 0.0
        %1491 = vmatprep.subr.mxu0 0.0
        %1492 = vmatpush1.msra.mxu0 0.0
        %1493 = vmatprep.subr.mxu0 0.0
        %1494 = vmatpush1.msra.mxu0 0.0
        %1495 = vmatprep.subr.mxu0 0.0
        %1496 = vmatpush1.msra.mxu0 0.0
        %1497 = vmatprep.subr.mxu0 0.0
        %1498 = vmatpush1.msra.mxu0 0.0
        %1499 = vmatprep.subr.mxu0 0.0
        %1500 = vmatpush1.msra.mxu0 0.0
        %1501 = vmatprep.subr.mxu0 0.0
        %1502 = vmatpush1.msra.mxu0 0.0
        %1503 = vmatprep.subr.mxu0 0.0
        %1504 = vmatpush1.msra.mxu0 0.0
        %1505 = vmatprep.subr.mxu0 0.0
        %1506 = vmatpush1.msra.mxu0 0.0
        %1507 = vmatprep.subr.mxu0 0.0
        %1508 = vmatpush1.msra.mxu0 0.0
        %1509 = vmatprep.subr.mxu0 0.0
        %1510 = vmatpush1.msra.mxu0 0.0
        %1511 = vmatprep.subr.mxu0 0.0
        %1512 = vmatpush1.msra.mxu0 0.0
        %1513 = vmatprep.subr.mxu0 0.0
        %1514 = vmatpush1.msra.mxu0 0.0
        %1515 = vmatprep.subr.mxu0 0.0
        %1516 = vmatpush1.msra.mxu0 0.0
        %1517 = vmatprep.subr.mxu0 0.0
        %1518 = vmatpush1.msra.mxu0 0.0
        %1519 = vmatprep.subr.mxu0 0.0
        %1520 = vmatpush1.msra.mxu0 0.0
        %1521 = vmatprep.subr.mxu0 0.0
        %1522 = vmatpush1.msra.mxu0 0.0
        %1523 = vmatprep.mubr.f32.mxu0 0.0
        %1524 = vmatmul.mubr.f32.gmra.mrb[0].mxu0 %v1454
        %v1525 = vpop.f32.mrb[0].mxu0
        %v1526 = vadd.f32 0.0, %v1525
        %v1527 = vpop.f32.mrb[0].mxu0
        %1528 = vmatprep.mubr.f32.mxu0 0.0
        %1529 = vmatmul.mubr.f32.gmra.mrb[0].mxu0 %v1457
        %v1530 = vpop.f32.mrb[0].mxu0
        %v1531 = vadd.f32 0.0, %v1530
        %v1532 = vpop.f32.mrb[0].mxu0
        %1533 = vdwg.mxu0
        %v1534 = vld [vmem:[#allocation8] sm:$0x3f]
        %v1535 = vld [vmem:[#allocation16] sm:$0xff]
        %v1536 = vld [vmem:[#allocation16 + $0x8] sm:$0xff]
        %v1537 = vld [vmem:[#allocation16 + $0x10] sm:$0xff]
        %v1538 = vld [vmem:[#allocation16 + $0x18] sm:$0xff]
        %v1539 = vld [vmem:[#allocation16 + $0x20] sm:$0xff]
        %v1540 = vld [vmem:[#allocation16 + $0x28] sm:$0xff]
        %v1541 = vld [vmem:[#allocation16 + $0x30] sm:$0xff]
        %v1542 = vld [vmem:[#allocation16 + $0x38] sm:$0xff]
        %v1543 = vld [vmem:[#allocation16 + $0x40] sm:$0xff]
        %v1544 = vld [vmem:[#allocation16 + $0x48] sm:$0xff]
        %vm1545 = vcmask 130048
        %1546 = vst.msk [vmem:[#allocation2] sm:$0xff] %vm1545, %v1526
        %1547 = vst.msk [vmem:[#allocation2 + $0x10] sm:$0xff] %vm1545, %v1531
        %vm1548 = vcmask 261248
        %1549 = vst.msk [vmem:[#allocation2] sm:$0xff] %vm1548, %v1526
        %1550 = vst.msk [vmem:[#allocation2 + $0x10] sm:$0xff] %vm1548, %v1531
        %v1551 = vmul.f32 %v1526, %v1526
        %v1552 = vmul.f32 %v1531, %v1531
        %1555 = vrot.lane.b32.xlu0 %v1551, 32
        %v1556 = vpop.permute.xlu0 %1555
        %1557 = vrot.lane.b32.xlu0 %v1552, 32
        %v1558 = vpop.permute.xlu0 %1557
        %vm1561 = vcmask 392448
        %1562 = vst.msk [vmem:[#allocation2] sm:$0xff] %vm1561, %v1556
        %1563 = vst.msk [vmem:[#allocation2 + $0x10] sm:$0xff] %vm1561, %v1558
        %vm1564 = vcmask 523648
        %1565 = vst.msk [vmem:[#allocation2] sm:$0xff] %vm1564, %v1556
        %1566 = vst.msk [vmem:[#allocation2 + $0x10] sm:$0xff] %vm1564, %v1558
        %1569 = vrot.lane.b32.xlu0 %v1526, 112
        %v1570 = vpop.permute.xlu0 %1569
        %1571 = vrot.lane.b32.xlu0 %v1531, 112
        %v1572 = vpop.permute.xlu0 %1571
        %v1575 = vmul.f32 %v1526, %v1570
        %v1576 = vmul.f32 %v1531, %v1572
        %1579 = vrot.lane.b32.xlu0 %v1575, 64
        %v1580 = vpop.permute.xlu0 %1579
        %1581 = vrot.lane.b32.xlu0 %v1576, 64
        %v1582 = vpop.permute.xlu0 %1581
        %vm1585 = vcmask 654848
        %1586 = vst.msk [vmem:[#allocation2] sm:$0xff] %vm1585, %v1580
        %1587 = vst.msk [vmem:[#allocation2 + $0x10] sm:$0xff] %vm1585, %v1582
        %v1588 = vld [vmem:[#allocation2] sm:$0xff]
        %v1589 = vld [vmem:[#allocation2 + $0x10] sm:$0xff]
        %v1591 = vsel %vm1545, %v1534, 0
        %1593 = vmatprep.subr.mxu0 0.0
        %1594 = vmatpush1.msra.mxu0 %v1588
        %1595 = vmatprep.subr.mxu0 0.0
        %1596 = vmatpush1.msra.mxu0 %v1589
        %1597 = vmatprep.subr.mxu0 0.0
        %1598 = vmatpush1.msra.mxu0 0.0
        %1599 = vmatprep.subr.mxu0 0.0
        %1600 = vmatpush1.msra.mxu0 0.0
        %1601 = vmatprep.subr.mxu0 0.0
        %1602 = vmatpush1.msra.mxu0 0.0
        %1603 = vmatprep.subr.mxu0 0.0
        %1604 = vmatpush1.msra.mxu0 0.0
        %1605 = vmatprep.subr.mxu0 0.0
        %1606 = vmatpush1.msra.mxu0 0.0
        %1607 = vmatprep.subr.mxu0 0.0
        %1608 = vmatpush1.msra.mxu0 0.0
        %1609 = vmatprep.subr.mxu0 0.0
        %1610 = vmatpush1.msra.mxu0 0.0
        %1611 = vmatprep.subr.mxu0 0.0
        %1612 = vmatpush1.msra.mxu0 0.0
        %1613 = vmatprep.subr.mxu0 0.0
        %1614 = vmatpush1.msra.mxu0 0.0
        %1615 = vmatprep.subr.mxu0 0.0
        %1616 = vmatpush1.msra.mxu0 0.0
        %1617 = vmatprep.subr.mxu0 0.0
        %1618 = vmatpush1.msra.mxu0 0.0
        %1619 = vmatprep.subr.mxu0 0.0
        %1620 = vmatpush1.msra.mxu0 0.0
        %1621 = vmatprep.subr.mxu0 0.0
        %1622 = vmatpush1.msra.mxu0 0.0
        %1623 = vmatprep.subr.mxu0 0.0
        %1624 = vmatpush1.msra.mxu0 0.0
        %1625 = vmatprep.subr.mxu0 0.0
        %1626 = vmatpush1.msra.mxu0 0.0
        %1627 = vmatprep.subr.mxu0 0.0
        %1628 = vmatpush1.msra.mxu0 0.0
        %1629 = vmatprep.subr.mxu0 0.0
        %1630 = vmatpush1.msra.mxu0 0.0
        %1631 = vmatprep.subr.mxu0 0.0
        %1632 = vmatpush1.msra.mxu0 0.0
        %1633 = vmatprep.subr.mxu0 0.0
        %1634 = vmatpush1.msra.mxu0 0.0
        %1635 = vmatprep.subr.mxu0 0.0
        %1636 = vmatpush1.msra.mxu0 0.0
        %1637 = vmatprep.subr.mxu0 0.0
        %1638 = vmatpush1.msra.mxu0 0.0
        %1639 = vmatprep.subr.mxu0 0.0
        %1640 = vmatpush1.msra.mxu0 0.0
        %1641 = vmatprep.subr.mxu0 0.0
        %1642 = vmatpush1.msra.mxu0 0.0
        %1643 = vmatprep.subr.mxu0 0.0
        %1644 = vmatpush1.msra.mxu0 0.0
        %1645 = vmatprep.subr.mxu0 0.0
        %1646 = vmatpush1.msra.mxu0 0.0
        %1647 = vmatprep.subr.mxu0 0.0
        %1648 = vmatpush1.msra.mxu0 0.0
        %1649 = vmatprep.subr.mxu0 0.0
        %1650 = vmatpush1.msra.mxu0 0.0
        %1651 = vmatprep.subr.mxu0 0.0
        %1652 = vmatpush1.msra.mxu0 0.0
        %1653 = vmatprep.subr.mxu0 0.0
        %1654 = vmatpush1.msra.mxu0 0.0
        %1655 = vmatprep.subr.mxu0 0.0
        %1656 = vmatpush1.msra.mxu0 0.0
        %1657 = vmatprep.mubr.f32.mxu0 0.0
        %1658 = vmatmul.mubr.f32.gmra.mrb[0].mxu0 %v1591
        %v1659 = vpop.f32.mrb[0].mxu0
        %v1660 = vadd.f32 0.0, %v1659
        %v1661 = vpop.f32.mrb[0].mxu0
        %1662 = vdwg.mxu0
        %vm1663 = vcmask 654336
        %v1665 = vsel %vm1663, %v1660, 0
        %1667 = vmatprep.subr.mxu0 0.0
        %1668 = vmatpush1.msra.mxu0 %v1535
        %1669 = vmatprep.subr.mxu0 0.0
        %1670 = vmatpush1.msra.mxu0 %v1536
        %1671 = vmatprep.subr.mxu0 0.0
        %1672 = vmatpush1.msra.mxu0 %v1537
        %1673 = vmatprep.subr.mxu0 0.0
        %1674 = vmatpush1.msra.mxu0 %v1538
        %1675 = vmatprep.subr.mxu0 0.0
        %1676 = vmatpush1.msra.mxu0 %v1539
        %1677 = vmatprep.subr.mxu0 0.0
        %1678 = vmatpush1.msra.mxu0 %v1540
        %1679 = vmatprep.subr.mxu0 0.0
        %1680 = vmatpush1.msra.mxu0 %v1541
        %1681 = vmatprep.subr.mxu0 0.0
        %1682 = vmatpush1.msra.mxu0 %v1542
        %1683 = vmatprep.subr.mxu0 0.0
        %1684 = vmatpush1.msra.mxu0 %v1543
        %1685 = vmatprep.subr.mxu0 0.0
        %1686 = vmatpush1.msra.mxu0 %v1544
        %1687 = vmatprep.subr.mxu0 0.0
        %1688 = vmatpush1.msra.mxu0 0.0
        %1689 = vmatprep.subr.mxu0 0.0
        %1690 = vmatpush1.msra.mxu0 0.0
        %1691 = vmatprep.subr.mxu0 0.0
        %1692 = vmatpush1.msra.mxu0 0.0
        %1693 = vmatprep.subr.mxu0 0.0
        %1694 = vmatpush1.msra.mxu0 0.0
        %1695 = vmatprep.subr.mxu0 0.0
        %1696 = vmatpush1.msra.mxu0 0.0
        %1697 = vmatprep.subr.mxu0 0.0
        %1698 = vmatpush1.msra.mxu0 0.0
        %1699 = vmatprep.subr.mxu0 0.0
        %1700 = vmatpush1.msra.mxu0 0.0
        %1701 = vmatprep.subr.mxu0 0.0
        %1702 = vmatpush1.msra.mxu0 0.0
        %1703 = vmatprep.subr.mxu0 0.0
        %1704 = vmatpush1.msra.mxu0 0.0
        %1705 = vmatprep.subr.mxu0 0.0
        %1706 = vmatpush1.msra.mxu0 0.0
        %1707 = vmatprep.subr.mxu0 0.0
        %1708 = vmatpush1.msra.mxu0 0.0
        %1709 = vmatprep.subr.mxu0 0.0
        %1710 = vmatpush1.msra.mxu0 0.0
        %1711 = vmatprep.subr.mxu0 0.0
        %1712 = vmatpush1.msra.mxu0 0.0
        %1713 = vmatprep.subr.mxu0 0.0
        %1714 = vmatpush1.msra.mxu0 0.0
        %1715 = vmatprep.subr.mxu0 0.0
        %1716 = vmatpush1.msra.mxu0 0.0
        %1717 = vmatprep.subr.mxu0 0.0
        %1718 = vmatpush1.msra.mxu0 0.0
        %1719 = vmatprep.subr.mxu0 0.0
        %1720 = vmatpush1.msra.mxu0 0.0
        %1721 = vmatprep.subr.mxu0 0.0
        %1722 = vmatpush1.msra.mxu0 0.0
        %1723 = vmatprep.subr.mxu0 0.0
        %1724 = vmatpush1.msra.mxu0 0.0
        %1725 = vmatprep.subr.mxu0 0.0
        %1726 = vmatpush1.msra.mxu0 0.0
        %1727 = vmatprep.subr.mxu0 0.0
        %1728 = vmatpush1.msra.mxu0 0.0
        %1729 = vmatprep.subr.mxu0 0.0
        %1730 = vmatpush1.msra.mxu0 0.0
        %1731 = vmatprep.mubr.f32.mxu0 0.0
        %1732 = vmatmul.mubr.f32.gmra.mrb[0].mxu0 %v1665
        %v1733 = vpop.f32.mrb[0].mxu0
        %v1734 = vadd.f32 0.0, %v1733
        %v1735 = vpop.f32.mrb[0].mxu0
        %1736 = vdwg.mxu0
        %v1737 = vmul.f32 %v1734, %v1734
        %1739 = vrot.lane.b32.xlu0 %v1734, 122
        %v1740 = vpop.permute.xlu0 %1739
        %v1742 = vmul.f32 %v1734, %v1740
        %1744 = vrot.lane.b32.xlu0 %v1737, 12
        %v1745 = vpop.permute.xlu0 %1744
        %v1747 = vsub.f32 %v1734, %v1745
        %1749 = vrot.lane.b32.xlu0 %v1742, 24
        %v1750 = vpop.permute.xlu0 %1749
        %v1752 = vsub.f32 %v1734, %v1750
        %v1753 = vmul.f32 %v1752, 2.0
        %v1754 = vadd.f32 %v1753, 0.0225
        %1756 = vrot.lane.b32.xlu0 %v1747, 122
        %v1757 = vpop.permute.xlu0 %1756
        %v1759 = vadd.f32 %v1747, %v1757
        %v1760 = vadd.f32 %v1759, 0.0225
        %v1761 = vrcp.pop %v1760
        %1763 = vrot.lane.b32.xlu0 %v1761, 12
        %v1764 = vpop.permute.xlu0 %1763
        %v1766 = vmul.f32 %v1754, %v1764
        %v1767 = vmul.f32 %v1742, 2.0
        %v1768 = vadd.f32 %v1767, 0.0025
        %1770 = vrot.lane.b32.xlu0 %v1766, 104
        %v1771 = vpop.permute.xlu0 %1770
        %v1773 = vmul.f32 %v1768, %v1771
        %1774 = vrot.lane.b32.xlu0 %v1737, 122
        %v1775 = vpop.permute.xlu0 %1774
        %v1777 = vadd.f32 %v1737, %v1775
        %v1778 = vadd.f32 %v1777, 0.0025
        %v1779 = vrcp.pop %v1778
        %v1780 = vmul.f32 %v1773, %v1779
        %vm1781 = vcmask 46080
        %v1782 = vsel %vm1781, %v1780, 0.0
        %1783 = vadd.xlane.f32.xlu0 %v1782
        %v1784 = vpop.xlane.xlu0 %1783
        %v1785 = vrot.slane %v1784, 4
        %v1786 = vadd.f32 %v1784, %v1785
        %v1787 = vrot.slane %v1786, 2
        %v1788 = vadd.f32 %v1786, %v1787
        %v1789 = vrot.slane %v1788, 1
        %v1790 = vadd.f32 %v1788, %v1789
        %s1791 = vtos %v1790
        %v1792 = vstv %s1791
        %vm1793 = vcmask 16400
        %1794 = vst.msk [vmem:[%s876] sm:$0x1] %vm1793, %v1792
        %v1795 = vsel %vm1781, %v1771, 0.0
        %1796 = vadd.xlane.f32.xlu0 %v1795
        %v1797 = vpop.xlane.xlu0 %1796
        %v1798 = vrot.slane %v1797, 4
        %v1799 = vadd.f32 %v1797, %v1798
        %v1800 = vrot.slane %v1799, 2
        %v1801 = vadd.f32 %v1799, %v1800
        %v1802 = vrot.slane %v1801, 1
        %v1803 = vadd.f32 %v1801, %v1802
        %s1804 = vtos %v1803
        %v1805 = vstv %s1804
        %vm1806 = vcmask 24600
        %1807 = vst.msk [vmem:[%s876] sm:$0x1] %vm1806, %v1805
        %v1808 = vld [vmem:[#allocation22] sm:$0xff]
        %v1809 = vld [vmem:[#allocation25] sm:$0xff]
        %v1810 = vld [vmem:[#allocation25 + $0x8] sm:$0xff]
        %v1811 = vld [vmem:[#allocation25 + $0x10] sm:$0xff]
        %v1812 = vld [vmem:[#allocation25 + $0x18] sm:$0xff]
        %1813 = vst.msk [vmem:[#allocation2] sm:$0xff] %vm1545, %v1526
        %1814 = vst.msk [vmem:[#allocation2 + $0x10] sm:$0xff] %vm1545, %v1531
        %1815 = vst.msk [vmem:[#allocation2] sm:$0xff] %vm1548, %v1526
        %1816 = vst.msk [vmem:[#allocation2 + $0x10] sm:$0xff] %vm1548, %v1531
        %v1817 = vld [vmem:[#allocation2] sm:$0xff]
        %v1818 = vld [vmem:[#allocation2 + $0x10] sm:$0xff]
        %v1820 = vsel %vm1545, %v1808, 0
        %1822 = vmatprep.subr.mxu0 0.0
        %1823 = vmatpush1.msra.mxu0 %v1817
        %1824 = vmatprep.subr.mxu0 0.0
        %1825 = vmatpush1.msra.mxu0 %v1818
        %1826 = vmatprep.subr.mxu0 0.0
        %1827 = vmatpush1.msra.mxu0 0.0
        %1828 = vmatprep.subr.mxu0 0.0
        %1829 = vmatpush1.msra.mxu0 0.0
        %1830 = vmatprep.subr.mxu0 0.0
        %1831 = vmatpush1.msra.mxu0 0.0
        %1832 = vmatprep.subr.mxu0 0.0
        %1833 = vmatpush1.msra.mxu0 0.0
        %1834 = vmatprep.subr.mxu0 0.0
        %1835 = vmatpush1.msra.mxu0 0.0
        %1836 = vmatprep.subr.mxu0 0.0
        %1837 = vmatpush1.msra.mxu0 0.0
        %1838 = vmatprep.subr.mxu0 0.0
        %1839 = vmatpush1.msra.mxu0 0.0
        %1840 = vmatprep.subr.mxu0 0.0
        %1841 = vmatpush1.msra.mxu0 0.0
        %1842 = vmatprep.subr.mxu0 0.0
        %1843 = vmatpush1.msra.mxu0 0.0
        %1844 = vmatprep.subr.mxu0 0.0
        %1845 = vmatpush1.msra.mxu0 0.0
        %1846 = vmatprep.subr.mxu0 0.0
        %1847 = vmatpush1.msra.mxu0 0.0
        %1848 = vmatprep.subr.mxu0 0.0
        %1849 = vmatpush1.msra.mxu0 0.0
        %1850 = vmatprep.subr.mxu0 0.0
        %1851 = vmatpush1.msra.mxu0 0.0
        %1852 = vmatprep.subr.mxu0 0.0
        %1853 = vmatpush1.msra.mxu0 0.0
        %1854 = vmatprep.subr.mxu0 0.0
        %1855 = vmatpush1.msra.mxu0 0.0
        %1856 = vmatprep.subr.mxu0 0.0
        %1857 = vmatpush1.msra.mxu0 0.0
        %1858 = vmatprep.subr.mxu0 0.0
        %1859 = vmatpush1.msra.mxu0 0.0
        %1860 = vmatprep.subr.mxu0 0.0
        %1861 = vmatpush1.msra.mxu0 0.0
        %1862 = vmatprep.subr.mxu0 0.0
        %1863 = vmatpush1.msra.mxu0 0.0
        %1864 = vmatprep.subr.mxu0 0.0
        %1865 = vmatpush1.msra.mxu0 0.0
        %1866 = vmatprep.subr.mxu0 0.0
        %1867 = vmatpush1.msra.mxu0 0.0
        %1868 = vmatprep.subr.mxu0 0.0
        %1869 = vmatpush1.msra.mxu0 0.0
        %1870 = vmatprep.subr.mxu0 0.0
        %1871 = vmatpush1.msra.mxu0 0.0
        %1872 = vmatprep.subr.mxu0 0.0
        %1873 = vmatpush1.msra.mxu0 0.0
        %1874 = vmatprep.subr.mxu0 0.0
        %1875 = vmatpush1.msra.mxu0 0.0
        %1876 = vmatprep.subr.mxu0 0.0
        %1877 = vmatpush1.msra.mxu0 0.0
        %1878 = vmatprep.subr.mxu0 0.0
        %1879 = vmatpush1.msra.mxu0 0.0
        %1880 = vmatprep.subr.mxu0 0.0
        %1881 = vmatpush1.msra.mxu0 0.0
        %1882 = vmatprep.subr.mxu0 0.0
        %1883 = vmatpush1.msra.mxu0 0.0
        %1884 = vmatprep.subr.mxu0 0.0
        %1885 = vmatpush1.msra.mxu0 0.0
        %1886 = vmatprep.mubr.f32.mxu0 0.0
        %1887 = vmatmul.mubr.f32.gmra.mrb[0].mxu0 %v1820
        %v1888 = vpop.f32.mrb[0].mxu0
        %v1889 = vadd.f32 0.0, %v1888
        %v1890 = vpop.f32.mrb[0].mxu0
        %1891 = vdwg.mxu0
        %v1893 = vsel %vm908, %v1889, 0
        %1895 = vmatprep.subr.mxu0 0.0
        %1896 = vmatpush1.msra.mxu0 %v1809
        %1897 = vmatprep.subr.mxu0 0.0
        %1898 = vmatpush1.msra.mxu0 %v1810
        %1899 = vmatprep.subr.mxu0 0.0
        %1900 = vmatpush1.msra.mxu0 %v1811
        %1901 = vmatprep.subr.mxu0 0.0
        %1902 = vmatpush1.msra.mxu0 %v1812
        %1903 = vmatprep.subr.mxu0 0.0
        %1904 = vmatpush1.msra.mxu0 0.0
        %1905 = vmatprep.subr.mxu0 0.0
        %1906 = vmatpush1.msra.mxu0 0.0
        %1907 = vmatprep.subr.mxu0 0.0
        %1908 = vmatpush1.msra.mxu0 0.0
        %1909 = vmatprep.subr.mxu0 0.0
        %1910 = vmatpush1.msra.mxu0 0.0
        %1911 = vmatprep.subr.mxu0 0.0
        %1912 = vmatpush1.msra.mxu0 0.0
        %1913 = vmatprep.subr.mxu0 0.0
        %1914 = vmatpush1.msra.mxu0 0.0
        %1915 = vmatprep.subr.mxu0 0.0
        %1916 = vmatpush1.msra.mxu0 0.0
        %1917 = vmatprep.subr.mxu0 0.0
        %1918 = vmatpush1.msra.mxu0 0.0
        %1919 = vmatprep.subr.mxu0 0.0
        %1920 = vmatpush1.msra.mxu0 0.0
        %1921 = vmatprep.subr.mxu0 0.0
        %1922 = vmatpush1.msra.mxu0 0.0
        %1923 = vmatprep.subr.mxu0 0.0
        %1924 = vmatpush1.msra.mxu0 0.0
        %1925 = vmatprep.subr.mxu0 0.0
        %1926 = vmatpush1.msra.mxu0 0.0
        %1927 = vmatprep.subr.mxu0 0.0
        %1928 = vmatpush1.msra.mxu0 0.0
        %1929 = vmatprep.subr.mxu0 0.0
        %1930 = vmatpush1.msra.mxu0 0.0
        %1931 = vmatprep.subr.mxu0 0.0
        %1932 = vmatpush1.msra.mxu0 0.0
        %1933 = vmatprep.subr.mxu0 0.0
        %1934 = vmatpush1.msra.mxu0 0.0
        %1935 = vmatprep.subr.mxu0 0.0
        %1936 = vmatpush1.msra.mxu0 0.0
        %1937 = vmatprep.subr.mxu0 0.0
        %1938 = vmatpush1.msra.mxu0 0.0
        %1939 = vmatprep.subr.mxu0 0.0
        %1940 = vmatpush1.msra.mxu0 0.0
        %1941 = vmatprep.subr.mxu0 0.0
        %1942 = vmatpush1.msra.mxu0 0.0
        %1943 = vmatprep.subr.mxu0 0.0
        %1944 = vmatpush1.msra.mxu0 0.0
        %1945 = vmatprep.subr.mxu0 0.0
        %1946 = vmatpush1.msra.mxu0 0.0
        %1947 = vmatprep.subr.mxu0 0.0
        %1948 = vmatpush1.msra.mxu0 0.0
        %1949 = vmatprep.subr.mxu0 0.0
        %1950 = vmatpush1.msra.mxu0 0.0
        %1951 = vmatprep.subr.mxu0 0.0
        %1952 = vmatpush1.msra.mxu0 0.0
        %1953 = vmatprep.subr.mxu0 0.0
        %1954 = vmatpush1.msra.mxu0 0.0
        %1955 = vmatprep.subr.mxu0 0.0
        %1956 = vmatpush1.msra.mxu0 0.0
        %1957 = vmatprep.subr.mxu0 0.0
        %1958 = vmatpush1.msra.mxu0 0.0
        %1959 = vmatprep.mubr.f32.mxu0 0.0
        %1960 = vmatmul.mubr.f32.gmra.mrb[0].mxu0 %v1893
        %v1961 = vpop.f32.mrb[0].mxu0
        %v1962 = vadd.f32 0.0, %v1961
        %v1963 = vpop.f32.mrb[0].mxu0
        %1964 = vdwg.mxu0
        %v1965 = vld [vmem:[#allocation10] sm:$0x1]
        %v1966 = vld [vmem:[#allocation17] sm:$0xff]
        %v1967 = vld [vmem:[#allocation17 + $0x8] sm:$0xff]
        %v1968 = vld [vmem:[#allocation17 + $0x10] sm:$0xff]
        %v1969 = vld [vmem:[#allocation17 + $0x18] sm:$0xff]
        %v1970 = vld [vmem:[#allocation17 + $0x20] sm:$0xff]
        %vm1971 = vcmask 64512
        %1972 = vst.msk [vmem:[#allocation2] sm:$0xff] %vm1971, %v1962
        %vm1973 = vcmask 130112
        %1974 = vst.msk [vmem:[#allocation2] sm:$0xff] %vm1973, %v1962
        %v1975 = vmul.f32 %v1962, %v1962
        %1977 = vrot.lane.b32.xlu0 %v1975, 16
        %v1978 = vpop.permute.xlu0 %1977
        %vm1980 = vcmask 195712
        %1981 = vst.msk [vmem:[#allocation2] sm:$0xff] %vm1980, %v1978
        %vm1982 = vcmask 261312
        %1983 = vst.msk [vmem:[#allocation2] sm:$0xff] %vm1982, %v1978
        %1985 = vrot.lane.b32.xlu0 %v1962, 120
        %v1986 = vpop.permute.xlu0 %1985
        %v1988 = vmul.f32 %v1962, %v1986
        %1990 = vrot.lane.b32.xlu0 %v1988, 32
        %v1991 = vpop.permute.xlu0 %1990
        %vm1993 = vcmask 326912
        %1994 = vst.msk [vmem:[#allocation2] sm:$0xff] %vm1993, %v1991
        %v1995 = vld [vmem:[#allocation2] sm:$0xff]
        %v1997 = vsel %vm1971, %v1965, 0
        %1999 = vmatprep.subr.mxu0 0.0
        %2000 = vmatpush1.msra.mxu0 %v1995
        %2001 = vmatprep.subr.mxu0 0.0
        %2002 = vmatpush1.msra.mxu0 0.0
        %2003 = vmatprep.subr.mxu0 0.0
        %2004 = vmatpush1.msra.mxu0 0.0
        %2005 = vmatprep.subr.mxu0 0.0
        %2006 = vmatpush1.msra.mxu0 0.0
        %2007 = vmatprep.subr.mxu0 0.0
        %2008 = vmatpush1.msra.mxu0 0.0
        %2009 = vmatprep.subr.mxu0 0.0
        %2010 = vmatpush1.msra.mxu0 0.0
        %2011 = vmatprep.subr.mxu0 0.0
        %2012 = vmatpush1.msra.mxu0 0.0
        %2013 = vmatprep.subr.mxu0 0.0
        %2014 = vmatpush1.msra.mxu0 0.0
        %2015 = vmatprep.subr.mxu0 0.0
        %2016 = vmatpush1.msra.mxu0 0.0
        %2017 = vmatprep.subr.mxu0 0.0
        %2018 = vmatpush1.msra.mxu0 0.0
        %2019 = vmatprep.subr.mxu0 0.0
        %2020 = vmatpush1.msra.mxu0 0.0
        %2021 = vmatprep.subr.mxu0 0.0
        %2022 = vmatpush1.msra.mxu0 0.0
        %2023 = vmatprep.subr.mxu0 0.0
        %2024 = vmatpush1.msra.mxu0 0.0
        %2025 = vmatprep.subr.mxu0 0.0
        %2026 = vmatpush1.msra.mxu0 0.0
        %2027 = vmatprep.subr.mxu0 0.0
        %2028 = vmatpush1.msra.mxu0 0.0
        %2029 = vmatprep.subr.mxu0 0.0
        %2030 = vmatpush1.msra.mxu0 0.0
        %2031 = vmatprep.subr.mxu0 0.0
        %2032 = vmatpush1.msra.mxu0 0.0
        %2033 = vmatprep.subr.mxu0 0.0
        %2034 = vmatpush1.msra.mxu0 0.0
        %2035 = vmatprep.subr.mxu0 0.0
        %2036 = vmatpush1.msra.mxu0 0.0
        %2037 = vmatprep.subr.mxu0 0.0
        %2038 = vmatpush1.msra.mxu0 0.0
        %2039 = vmatprep.subr.mxu0 0.0
        %2040 = vmatpush1.msra.mxu0 0.0
        %2041 = vmatprep.subr.mxu0 0.0
        %2042 = vmatpush1.msra.mxu0 0.0
        %2043 = vmatprep.subr.mxu0 0.0
        %2044 = vmatpush1.msra.mxu0 0.0
        %2045 = vmatprep.subr.mxu0 0.0
        %2046 = vmatpush1.msra.mxu0 0.0
        %2047 = vmatprep.subr.mxu0 0.0
        %2048 = vmatpush1.msra.mxu0 0.0
        %2049 = vmatprep.subr.mxu0 0.0
        %2050 = vmatpush1.msra.mxu0 0.0
        %2051 = vmatprep.subr.mxu0 0.0
        %2052 = vmatpush1.msra.mxu0 0.0
        %2053 = vmatprep.subr.mxu0 0.0
        %2054 = vmatpush1.msra.mxu0 0.0
        %2055 = vmatprep.subr.mxu0 0.0
        %2056 = vmatpush1.msra.mxu0 0.0
        %2057 = vmatprep.subr.mxu0 0.0
        %2058 = vmatpush1.msra.mxu0 0.0
        %2059 = vmatprep.subr.mxu0 0.0
        %2060 = vmatpush1.msra.mxu0 0.0
        %2061 = vmatprep.subr.mxu0 0.0
        %2062 = vmatpush1.msra.mxu0 0.0
        %2063 = vmatprep.mubr.f32.mxu0 0.0
        %2064 = vmatmul.mubr.f32.gmra.mrb[0].mxu0 %v1997
        %v2065 = vpop.f32.mrb[0].mxu0
        %v2066 = vadd.f32 0.0, %v2065
        %v2067 = vpop.f32.mrb[0].mxu0
        %2068 = vdwg.mxu0
        %vm2069 = vcmask 326656
        %v2071 = vsel %vm2069, %v2066, 0
        %2073 = vmatprep.subr.mxu0 0.0
        %2074 = vmatpush1.msra.mxu0 %v1966
        %2075 = vmatprep.subr.mxu0 0.0
        %2076 = vmatpush1.msra.mxu0 %v1967
        %2077 = vmatprep.subr.mxu0 0.0
        %2078 = vmatpush1.msra.mxu0 %v1968
        %2079 = vmatprep.subr.mxu0 0.0
        %2080 = vmatpush1.msra.mxu0 %v1969
        %2081 = vmatprep.subr.mxu0 0.0
        %2082 = vmatpush1.msra.mxu0 %v1970
        %2083 = vmatprep.subr.mxu0 0.0
        %2084 = vmatpush1.msra.mxu0 0.0
        %2085 = vmatprep.subr.mxu0 0.0
        %2086 = vmatpush1.msra.mxu0 0.0
        %2087 = vmatprep.subr.mxu0 0.0
        %2088 = vmatpush1.msra.mxu0 0.0
        %2089 = vmatprep.subr.mxu0 0.0
        %2090 = vmatpush1.msra.mxu0 0.0
        %2091 = vmatprep.subr.mxu0 0.0
        %2092 = vmatpush1.msra.mxu0 0.0
        %2093 = vmatprep.subr.mxu0 0.0
        %2094 = vmatpush1.msra.mxu0 0.0
        %2095 = vmatprep.subr.mxu0 0.0
        %2096 = vmatpush1.msra.mxu0 0.0
        %2097 = vmatprep.subr.mxu0 0.0
        %2098 = vmatpush1.msra.mxu0 0.0
        %2099 = vmatprep.subr.mxu0 0.0
        %2100 = vmatpush1.msra.mxu0 0.0
        %2101 = vmatprep.subr.mxu0 0.0
        %2102 = vmatpush1.msra.mxu0 0.0
        %2103 = vmatprep.subr.mxu0 0.0
        %2104 = vmatpush1.msra.mxu0 0.0
        %2105 = vmatprep.subr.mxu0 0.0
        %2106 = vmatpush1.msra.mxu0 0.0
        %2107 = vmatprep.subr.mxu0 0.0
        %2108 = vmatpush1.msra.mxu0 0.0
        %2109 = vmatprep.subr.mxu0 0.0
        %2110 = vmatpush1.msra.mxu0 0.0
        %2111 = vmatprep.subr.mxu0 0.0
        %2112 = vmatpush1.msra.mxu0 0.0
        %2113 = vmatprep.subr.mxu0 0.0
        %2114 = vmatpush1.msra.mxu0 0.0
        %2115 = vmatprep.subr.mxu0 0.0
        %2116 = vmatpush1.msra.mxu0 0.0
        %2117 = vmatprep.subr.mxu0 0.0
        %2118 = vmatpush1.msra.mxu0 0.0
        %2119 = vmatprep.subr.mxu0 0.0
        %2120 = vmatpush1.msra.mxu0 0.0
        %2121 = vmatprep.subr.mxu0 0.0
        %2122 = vmatpush1.msra.mxu0 0.0
        %2123 = vmatprep.subr.mxu0 0.0
        %2124 = vmatpush1.msra.mxu0 0.0
        %2125 = vmatprep.subr.mxu0 0.0
        %2126 = vmatpush1.msra.mxu0 0.0
        %2127 = vmatprep.subr.mxu0 0.0
        %2128 = vmatpush1.msra.mxu0 0.0
        %2129 = vmatprep.subr.mxu0 0.0
        %2130 = vmatpush1.msra.mxu0 0.0
        %2131 = vmatprep.subr.mxu0 0.0
        %2132 = vmatpush1.msra.mxu0 0.0
        %2133 = vmatprep.subr.mxu0 0.0
        %2134 = vmatpush1.msra.mxu0 0.0
        %2135 = vmatprep.subr.mxu0 0.0
        %2136 = vmatpush1.msra.mxu0 0.0
        %2137 = vmatprep.mubr.f32.mxu0 0.0
        %2138 = vmatmul.mubr.f32.gmra.mrb[0].mxu0 %v2071
        %v2139 = vpop.f32.mrb[0].mxu0
        %v2140 = vadd.f32 0.0, %v2139
        %v2141 = vpop.f32.mrb[0].mxu0
        %2142 = vdwg.mxu0
        %v2143 = vmul.f32 %v2140, %v2140
        %2145 = vrot.lane.b32.xlu0 %v2140, 127
        %v2146 = vpop.permute.xlu0 %2145
        %v2148 = vmul.f32 %v2140, %v2146
        %2150 = vrot.lane.b32.xlu0 %v2143, 2
        %v2151 = vpop.permute.xlu0 %2150
        %v2153 = vsub.f32 %v2140, %v2151
        %2155 = vrot.lane.b32.xlu0 %v2148, 4
        %v2156 = vpop.permute.xlu0 %2155
        %v2158 = vsub.f32 %v2140, %v2156
        %v2159 = vmul.f32 %v2158, 2.0
        %v2160 = vadd.f32 %v2159, 0.0225
        %2162 = vrot.lane.b32.xlu0 %v2153, 127
        %v2163 = vpop.permute.xlu0 %2162
        %v2165 = vadd.f32 %v2153, %v2163
        %v2166 = vadd.f32 %v2165, 0.0225
        %v2167 = vrcp.pop %v2166
        %2169 = vrot.lane.b32.xlu0 %v2167, 2
        %v2170 = vpop.permute.xlu0 %2169
        %v2172 = vmul.f32 %v2160, %v2170
        %v2173 = vmul.f32 %v2148, 2.0
        %v2174 = vadd.f32 %v2173, 0.0025
        %2176 = vrot.lane.b32.xlu0 %v2172, 124
        %v2177 = vpop.permute.xlu0 %2176
        %v2179 = vmul.f32 %v2174, %v2177
        %2180 = vrot.lane.b32.xlu0 %v2143, 127
        %v2181 = vpop.permute.xlu0 %2180
        %v2183 = vadd.f32 %v2143, %v2181
        %v2184 = vadd.f32 %v2183, 0.0025
        %v2185 = vrcp.pop %v2184
        %v2186 = vmul.f32 %v2179, %v2185
        %v2187 = vadd.f32 %v2186, 0.0
        %s2188 = vtos %v2187
        %v2189 = vstv %s2188
        %vm2190 = vcmask 32800
        %2191 = vst.msk [vmem:[%s876] sm:$0x1] %vm2190, %v2189
        %v2192 = vadd.f32 %v2172, 0.0
        %2194 = vrot.lane.b32.xlu0 %v2192, 124
        %v2195 = vpop.permute.xlu0 %2194
        %s2197 = vtos %v2195
        %v2198 = vstv %s2197
        %vm2199 = vcmask 41000
        %2200 = vst.msk [vmem:[%s876] sm:$0x1] %vm2199, %v2198
        %v2201 = vld [vmem:[#allocation23] sm:$0xf]
        %v2202 = vld [vmem:[#allocation26] sm:$0xff]
        %v2203 = vld [vmem:[#allocation26 + $0x8] sm:$0xff]
        %2204 = vst.msk [vmem:[#allocation2] sm:$0xff] %vm1971, %v1962
        %2205 = vst.msk [vmem:[#allocation2] sm:$0xff] %vm1973, %v1962
        %v2206 = vld [vmem:[#allocation2] sm:$0xff]
        %v2208 = vsel %vm1971, %v2201, 0
        %2210 = vmatprep.subr.mxu0 0.0
        %2211 = vmatpush1.msra.mxu0 %v2206
        %2212 = vmatprep.subr.mxu0 0.0
        %2213 = vmatpush1.msra.mxu0 0.0
        %2214 = vmatprep.subr.mxu0 0.0
        %2215 = vmatpush1.msra.mxu0 0.0
        %2216 = vmatprep.subr.mxu0 0.0
        %2217 = vmatpush1.msra.mxu0 0.0
        %2218 = vmatprep.subr.mxu0 0.0
        %2219 = vmatpush1.msra.mxu0 0.0
        %2220 = vmatprep.subr.mxu0 0.0
        %2221 = vmatpush1.msra.mxu0 0.0
        %2222 = vmatprep.subr.mxu0 0.0
        %2223 = vmatpush1.msra.mxu0 0.0
        %2224 = vmatprep.subr.mxu0 0.0
        %2225 = vmatpush1.msra.mxu0 0.0
        %2226 = vmatprep.subr.mxu0 0.0
        %2227 = vmatpush1.msra.mxu0 0.0
        %2228 = vmatprep.subr.mxu0 0.0
        %2229 = vmatpush1.msra.mxu0 0.0
        %2230 = vmatprep.subr.mxu0 0.0
        %2231 = vmatpush1.msra.mxu0 0.0
        %2232 = vmatprep.subr.mxu0 0.0
        %2233 = vmatpush1.msra.mxu0 0.0
        %2234 = vmatprep.subr.mxu0 0.0
        %2235 = vmatpush1.msra.mxu0 0.0
        %2236 = vmatprep.subr.mxu0 0.0
        %2237 = vmatpush1.msra.mxu0 0.0
        %2238 = vmatprep.subr.mxu0 0.0
        %2239 = vmatpush1.msra.mxu0 0.0
        %2240 = vmatprep.subr.mxu0 0.0
        %2241 = vmatpush1.msra.mxu0 0.0
        %2242 = vmatprep.subr.mxu0 0.0
        %2243 = vmatpush1.msra.mxu0 0.0
        %2244 = vmatprep.subr.mxu0 0.0
        %2245 = vmatpush1.msra.mxu0 0.0
        %2246 = vmatprep.subr.mxu0 0.0
        %2247 = vmatpush1.msra.mxu0 0.0
        %2248 = vmatprep.subr.mxu0 0.0
        %2249 = vmatpush1.msra.mxu0 0.0
        %2250 = vmatprep.subr.mxu0 0.0
        %2251 = vmatpush1.msra.mxu0 0.0
        %2252 = vmatprep.subr.mxu0 0.0
        %2253 = vmatpush1.msra.mxu0 0.0
        %2254 = vmatprep.subr.mxu0 0.0
        %2255 = vmatpush1.msra.mxu0 0.0
        %2256 = vmatprep.subr.mxu0 0.0
        %2257 = vmatpush1.msra.mxu0 0.0
        %2258 = vmatprep.subr.mxu0 0.0
        %2259 = vmatpush1.msra.mxu0 0.0
        %2260 = vmatprep.subr.mxu0 0.0
        %2261 = vmatpush1.msra.mxu0 0.0
        %2262 = vmatprep.subr.mxu0 0.0
        %2263 = vmatpush1.msra.mxu0 0.0
        %2264 = vmatprep.subr.mxu0 0.0
        %2265 = vmatpush1.msra.mxu0 0.0
        %2266 = vmatprep.subr.mxu0 0.0
        %2267 = vmatpush1.msra.mxu0 0.0
        %2268 = vmatprep.subr.mxu0 0.0
        %2269 = vmatpush1.msra.mxu0 0.0
        %2270 = vmatprep.subr.mxu0 0.0
        %2271 = vmatpush1.msra.mxu0 0.0
        %2272 = vmatprep.subr.mxu0 0.0
        %2273 = vmatpush1.msra.mxu0 0.0
        %2274 = vmatprep.mubr.f32.mxu0 0.0
        %2275 = vmatmul.mubr.f32.gmra.mrb[0].mxu0 %v2208
        %v2276 = vpop.f32.mrb[0].mxu0
        %v2277 = vadd.f32 0.0, %v2276
        %v2278 = vpop.f32.mrb[0].mxu0
        %2279 = vdwg.mxu0
        %v2281 = vsel %vm1545, %v2277, 0
        %2283 = vmatprep.subr.mxu0 0.0
        %2284 = vmatpush1.msra.mxu0 %v2202
        %2285 = vmatprep.subr.mxu0 0.0
        %2286 = vmatpush1.msra.mxu0 %v2203
        %2287 = vmatprep.subr.mxu0 0.0
        %2288 = vmatpush1.msra.mxu0 0.0
        %2289 = vmatprep.subr.mxu0 0.0
        %2290 = vmatpush1.msra.mxu0 0.0
        %2291 = vmatprep.subr.mxu0 0.0
        %2292 = vmatpush1.msra.mxu0 0.0
        %2293 = vmatprep.subr.mxu0 0.0
        %2294 = vmatpush1.msra.mxu0 0.0
        %2295 = vmatprep.subr.mxu0 0.0
        %2296 = vmatpush1.msra.mxu0 0.0
        %2297 = vmatprep.subr.mxu0 0.0
        %2298 = vmatpush1.msra.mxu0 0.0
        %2299 = vmatprep.subr.mxu0 0.0
        %2300 = vmatpush1.msra.mxu0 0.0
        %2301 = vmatprep.subr.mxu0 0.0
        %2302 = vmatpush1.msra.mxu0 0.0
        %2303 = vmatprep.subr.mxu0 0.0
        %2304 = vmatpush1.msra.mxu0 0.0
        %2305 = vmatprep.subr.mxu0 0.0
        %2306 = vmatpush1.msra.mxu0 0.0
        %2307 = vmatprep.subr.mxu0 0.0
        %2308 = vmatpush1.msra.mxu0 0.0
        %2309 = vmatprep.subr.mxu0 0.0
        %2310 = vmatpush1.msra.mxu0 0.0
        %2311 = vmatprep.subr.mxu0 0.0
        %2312 = vmatpush1.msra.mxu0 0.0
        %2313 = vmatprep.subr.mxu0 0.0
        %2314 = vmatpush1.msra.mxu0 0.0
        %2315 = vmatprep.subr.mxu0 0.0
        %2316 = vmatpush1.msra.mxu0 0.0
        %2317 = vmatprep.subr.mxu0 0.0
        %2318 = vmatpush1.msra.mxu0 0.0
        %2319 = vmatprep.subr.mxu0 0.0
        %2320 = vmatpush1.msra.mxu0 0.0
        %2321 = vmatprep.subr.mxu0 0.0
        %2322 = vmatpush1.msra.mxu0 0.0
        %2323 = vmatprep.subr.mxu0 0.0
        %2324 = vmatpush1.msra.mxu0 0.0
        %2325 = vmatprep.subr.mxu0 0.0
        %2326 = vmatpush1.msra.mxu0 0.0
        %2327 = vmatprep.subr.mxu0 0.0
        %2328 = vmatpush1.msra.mxu0 0.0
        %2329 = vmatprep.subr.mxu0 0.0
        %2330 = vmatpush1.msra.mxu0 0.0
        %2331 = vmatprep.subr.mxu0 0.0
        %2332 = vmatpush1.msra.mxu0 0.0
        %2333 = vmatprep.subr.mxu0 0.0
        %2334 = vmatpush1.msra.mxu0 0.0
        %2335 = vmatprep.subr.mxu0 0.0
        %2336 = vmatpush1.msra.mxu0 0.0
        %2337 = vmatprep.subr.mxu0 0.0
        %2338 = vmatpush1.msra.mxu0 0.0
        %2339 = vmatprep.subr.mxu0 0.0
        %2340 = vmatpush1.msra.mxu0 0.0
        %2341 = vmatprep.subr.mxu0 0.0
        %2342 = vmatpush1.msra.mxu0 0.0
        %2343 = vmatprep.subr.mxu0 0.0
        %2344 = vmatpush1.msra.mxu0 0.0
        %2345 = vmatprep.subr.mxu0 0.0
        %2346 = vmatpush1.msra.mxu0 0.0
        %2347 = vmatprep.mubr.f32.mxu0 0.0
        %2348 = vmatmul.mubr.f32.gmra.mrb[0].mxu0 %v2281
        %v2349 = vpop.f32.mrb[0].mxu0
        %v2350 = vadd.f32 0.0, %v2349
        %v2351 = vpop.f32.mrb[0].mxu0
        %2352 = vdwg.mxu0
        %v2353 = vld [vmem:[#allocation11] sm:$0x1]
        %v2354 = vld [vmem:[%s10] sm:$0xff]
        %v2355 = vld [vmem:[%s10 + $0x8] sm:$0xff]
        %v2356 = vld [vmem:[%s10 + $0x10] sm:$0xf]
        %vm2357 = vcmask 27648
        %2358 = vst.msk [vmem:[#allocation2] sm:$0xf] %vm2357, %v2350
        %vm2359 = vcmask 60448
        %2360 = vst.msk [vmem:[#allocation2] sm:$0xf] %vm2359, %v2350
        %v2361 = vmul.f32 %v2350, %v2350
        %2363 = vrot.lane.b32.xlu0 %v2361, 8
        %v2364 = vpop.permute.xlu0 %2363
        %vm2366 = vcmask 93248
        %2367 = vst.msk [vmem:[#allocation2] sm:$0xf] %vm2366, %v2364
        %vm2368 = vcmask 126048
        %2369 = vst.msk [vmem:[#allocation2] sm:$0xf] %vm2368, %v2364
        %2371 = vrot.lane.b32.xlu0 %v2350, 124
        %v2372 = vpop.permute.xlu0 %2371
        %v2374 = vmul.f32 %v2350, %v2372
        %2376 = vrot.lane.b32.xlu0 %v2374, 16
        %v2377 = vpop.permute.xlu0 %2376
        %vm2379 = vcmask 158848
        %2380 = vst.msk [vmem:[#allocation2] sm:$0xf] %vm2379, %v2377
        %v2381 = vld [vmem:[#allocation2] sm:$0xf]
        %vm2382 = vcmask 31744
        %v2384 = vsel %vm2382, %v2353, 0
        %vm2386 = vcmask 1043456
        %v2388 = vsel %vm2386, %v2381, 0
        %2390 = vmatprep.subr.mxu0 0.0
        %2391 = vmatpush1.msra.mxu0 %v2388
        %2392 = vmatprep.subr.mxu0 0.0
        %2393 = vmatpush1.msra.mxu0 0.0
        %2394 = vmatprep.subr.mxu0 0.0
        %2395 = vmatpush1.msra.mxu0 0.0
        %2396 = vmatprep.subr.mxu0 0.0
        %2397 = vmatpush1.msra.mxu0 0.0
        %2398 = vmatprep.subr.mxu0 0.0
        %2399 = vmatpush1.msra.mxu0 0.0
        %2400 = vmatprep.subr.mxu0 0.0
        %2401 = vmatpush1.msra.mxu0 0.0
        %2402 = vmatprep.subr.mxu0 0.0
        %2403 = vmatpush1.msra.mxu0 0.0
        %2404 = vmatprep.subr.mxu0 0.0
        %2405 = vmatpush1.msra.mxu0 0.0
        %2406 = vmatprep.subr.mxu0 0.0
        %2407 = vmatpush1.msra.mxu0 0.0
        %2408 = vmatprep.subr.mxu0 0.0
        %2409 = vmatpush1.msra.mxu0 0.0
        %2410 = vmatprep.subr.mxu0 0.0
        %2411 = vmatpush1.msra.mxu0 0.0
        %2412 = vmatprep.subr.mxu0 0.0
        %2413 = vmatpush1.msra.mxu0 0.0
        %2414 = vmatprep.subr.mxu0 0.0
        %2415 = vmatpush1.msra.mxu0 0.0
        %2416 = vmatprep.subr.mxu0 0.0
        %2417 = vmatpush1.msra.mxu0 0.0
        %2418 = vmatprep.subr.mxu0 0.0
        %2419 = vmatpush1.msra.mxu0 0.0
        %2420 = vmatprep.subr.mxu0 0.0
        %2421 = vmatpush1.msra.mxu0 0.0
        %2422 = vmatprep.subr.mxu0 0.0
        %2423 = vmatpush1.msra.mxu0 0.0
        %2424 = vmatprep.subr.mxu0 0.0
        %2425 = vmatpush1.msra.mxu0 0.0
        %2426 = vmatprep.subr.mxu0 0.0
        %2427 = vmatpush1.msra.mxu0 0.0
        %2428 = vmatprep.subr.mxu0 0.0
        %2429 = vmatpush1.msra.mxu0 0.0
        %2430 = vmatprep.subr.mxu0 0.0
        %2431 = vmatpush1.msra.mxu0 0.0
        %2432 = vmatprep.subr.mxu0 0.0
        %2433 = vmatpush1.msra.mxu0 0.0
        %2434 = vmatprep.subr.mxu0 0.0
        %2435 = vmatpush1.msra.mxu0 0.0
        %2436 = vmatprep.subr.mxu0 0.0
        %2437 = vmatpush1.msra.mxu0 0.0
        %2438 = vmatprep.subr.mxu0 0.0
        %2439 = vmatpush1.msra.mxu0 0.0
        %2440 = vmatprep.subr.mxu0 0.0
        %2441 = vmatpush1.msra.mxu0 0.0
        %2442 = vmatprep.subr.mxu0 0.0
        %2443 = vmatpush1.msra.mxu0 0.0
        %2444 = vmatprep.subr.mxu0 0.0
        %2445 = vmatpush1.msra.mxu0 0.0
        %2446 = vmatprep.subr.mxu0 0.0
        %2447 = vmatpush1.msra.mxu0 0.0
        %2448 = vmatprep.subr.mxu0 0.0
        %2449 = vmatpush1.msra.mxu0 0.0
        %2450 = vmatprep.subr.mxu0 0.0
        %2451 = vmatpush1.msra.mxu0 0.0
        %2452 = vmatprep.subr.mxu0 0.0
        %2453 = vmatpush1.msra.mxu0 0.0
        %2454 = vmatprep.mubr.f32.mxu0 0.0
        %2455 = vmatmul.mubr.f32.gmra.mrb[0].mxu0 %v2384
        %v2456 = vpop.f32.mrb[0].mxu0
        %v2457 = vadd.f32 0.0, %v2456
        %v2458 = vpop.f32.mrb[0].mxu0
        %2459 = vdwg.mxu0
        %vm2460 = vcmask 162816
        %v2462 = vsel %vm2460, %v2457, 0
        %v2465 = vsel %vm2386, %v2356, 0
        %2467 = vmatprep.subr.mxu0 0.0
        %2468 = vmatpush1.msra.mxu0 %v2354
        %2469 = vmatprep.subr.mxu0 0.0
        %2470 = vmatpush1.msra.mxu0 %v2355
        %2471 = vmatprep.subr.mxu0 0.0
        %2472 = vmatpush1.msra.mxu0 %v2465
        %2473 = vmatprep.subr.mxu0 0.0
        %2474 = vmatpush1.msra.mxu0 0.0
        %2475 = vmatprep.subr.mxu0 0.0
        %2476 = vmatpush1.msra.mxu0 0.0
        %2477 = vmatprep.subr.mxu0 0.0
        %2478 = vmatpush1.msra.mxu0 0.0
        %2479 = vmatprep.subr.mxu0 0.0
        %2480 = vmatpush1.msra.mxu0 0.0
        %2481 = vmatprep.subr.mxu0 0.0
        %2482 = vmatpush1.msra.mxu0 0.0
        %2483 = vmatprep.subr.mxu0 0.0
        %2484 = vmatpush1.msra.mxu0 0.0
        %2485 = vmatprep.subr.mxu0 0.0
        %2486 = vmatpush1.msra.mxu0 0.0
        %2487 = vmatprep.subr.mxu0 0.0
        %2488 = vmatpush1.msra.mxu0 0.0
        %2489 = vmatprep.subr.mxu0 0.0
        %2490 = vmatpush1.msra.mxu0 0.0
        %2491 = vmatprep.subr.mxu0 0.0
        %2492 = vmatpush1.msra.mxu0 0.0
        %2493 = vmatprep.subr.mxu0 0.0
        %2494 = vmatpush1.msra.mxu0 0.0
        %2495 = vmatprep.subr.mxu0 0.0
        %2496 = vmatpush1.msra.mxu0 0.0
        %2497 = vmatprep.subr.mxu0 0.0
        %2498 = vmatpush1.msra.mxu0 0.0
        %2499 = vmatprep.subr.mxu0 0.0
        %2500 = vmatpush1.msra.mxu0 0.0
        %2501 = vmatprep.subr.mxu0 0.0
        %2502 = vmatpush1.msra.mxu0 0.0
        %2503 = vmatprep.subr.mxu0 0.0
        %2504 = vmatpush1.msra.mxu0 0.0
        %2505 = vmatprep.subr.mxu0 0.0
        %2506 = vmatpush1.msra.mxu0 0.0
        %2507 = vmatprep.subr.mxu0 0.0
        %2508 = vmatpush1.msra.mxu0 0.0
        %2509 = vmatprep.subr.mxu0 0.0
        %2510 = vmatpush1.msra.mxu0 0.0
        %2511 = vmatprep.subr.mxu0 0.0
        %2512 = vmatpush1.msra.mxu0 0.0
        %2513 = vmatprep.subr.mxu0 0.0
        %2514 = vmatpush1.msra.mxu0 0.0
        %2515 = vmatprep.subr.mxu0 0.0
        %2516 = vmatpush1.msra.mxu0 0.0
        %2517 = vmatprep.subr.mxu0 0.0
        %2518 = vmatpush1.msra.mxu0 0.0
        %2519 = vmatprep.subr.mxu0 0.0
        %2520 = vmatpush1.msra.mxu0 0.0
        %2521 = vmatprep.subr.mxu0 0.0
        %2522 = vmatpush1.msra.mxu0 0.0
        %2523 = vmatprep.subr.mxu0 0.0
        %2524 = vmatpush1.msra.mxu0 0.0
        %2525 = vmatprep.subr.mxu0 0.0
        %2526 = vmatpush1.msra.mxu0 0.0
        %2527 = vmatprep.subr.mxu0 0.0
        %2528 = vmatpush1.msra.mxu0 0.0
        %2529 = vmatprep.subr.mxu0 0.0
        %2530 = vmatpush1.msra.mxu0 0.0
        %2531 = vmatprep.mubr.f32.mxu0 0.0
        %2532 = vmatmul.mubr.f32.gmra.mrb[0].mxu0 %v2462
        %v2533 = vpop.f32.mrb[0].mxu0
        %v2534 = vadd.f32 0.0, %v2533
        %v2535 = vpop.f32.mrb[0].mxu0
        %2536 = vdwg.mxu0
        %v2537 = vmul.f32 %v2534, %v2534
        %2539 = vrot.lane.b32.xlu0 %v2534, 127
        %v2540 = vpop.permute.xlu0 %2539
        %v2542 = vmul.f32 %v2534, %v2540
        %2544 = vrot.lane.b32.xlu0 %v2537, 2
        %v2545 = vpop.permute.xlu0 %2544
        %v2547 = vsub.f32 %v2534, %v2545
        %2549 = vrot.lane.b32.xlu0 %v2542, 4
        %v2550 = vpop.permute.xlu0 %2549
        %v2552 = vsub.f32 %v2534, %v2550
        %v2553 = vmul.f32 %v2552, 2.0
        %v2554 = vadd.f32 %v2553, 0.0225
        %2556 = vrot.lane.b32.xlu0 %v2547, 127
        %v2557 = vpop.permute.xlu0 %2556
        %v2559 = vadd.f32 %v2547, %v2557
        %v2560 = vadd.f32 %v2559, 0.0225
        %v2561 = vrcp.pop %v2560
        %2563 = vrot.lane.b32.xlu0 %v2561, 2
        %v2564 = vpop.permute.xlu0 %2563
        %v2566 = vmul.f32 %v2554, %v2564
        %v2567 = vmul.f32 %v2542, 2.0
        %v2568 = vadd.f32 %v2567, 0.0025
        %2570 = vrot.lane.b32.xlu0 %v2566, 124
        %v2571 = vpop.permute.xlu0 %2570
        %v2573 = vmul.f32 %v2568, %v2571
        %2574 = vrot.lane.b32.xlu0 %v2537, 127
        %v2575 = vpop.permute.xlu0 %2574
        %v2577 = vadd.f32 %v2537, %v2575
        %v2578 = vadd.f32 %v2577, 0.0025
        %v2579 = vrcp.pop %v2578
        %v2580 = vmul.f32 %v2573, %v2579
        %v2581 = vadd.f32 %v2580, 0.0
        %s2582 = vtos %v2581
        %v2583 = vstv %s2582
        %vm2584 = vcmask 49200
        %2585 = vst.msk [vmem:[%s876] sm:$0x1] %vm2584, %v2583
        %v2586 = vadd.f32 %v2566, 0.0
        %2588 = vrot.lane.b32.xlu0 %v2586, 124
        %v2589 = vpop.permute.xlu0 %2588
        %s2591 = vtos %v2589
        %v2592 = vstv %s2591
        %vm2593 = vcmask 57400
        %2594 = vst.msk [vmem:[%s876] sm:$0x1] %vm2593, %v2592
        %v2595 = vld [vmem:[%s15] sm:$0x3]
        %v2596 = vld [vmem:[%s19] sm:$0xff]
        %2597 = vst.msk [vmem:[#allocation2] sm:$0xf] %vm2357, %v2350
        %2598 = vst.msk [vmem:[#allocation2] sm:$0xf] %vm2359, %v2350
        %v2599 = vld [vmem:[#allocation2] sm:$0xf]
        %v2601 = vsel %vm2382, %v2595, 0
        %v2604 = vsel %vm2386, %v2599, 0
        %2606 = vmatprep.subr.mxu0 0.0
        %2607 = vmatpush1.msra.mxu0 %v2604
        %2608 = vmatprep.subr.mxu0 0.0
        %2609 = vmatpush1.msra.mxu0 0.0
        %2610 = vmatprep.subr.mxu0 0.0
        %2611 = vmatpush1.msra.mxu0 0.0
        %2612 = vmatprep.subr.mxu0 0.0
        %2613 = vmatpush1.msra.mxu0 0.0
        %2614 = vmatprep.subr.mxu0 0.0
        %2615 = vmatpush1.msra.mxu0 0.0
        %2616 = vmatprep.subr.mxu0 0.0
        %2617 = vmatpush1.msra.mxu0 0.0
        %2618 = vmatprep.subr.mxu0 0.0
        %2619 = vmatpush1.msra.mxu0 0.0
        %2620 = vmatprep.subr.mxu0 0.0
        %2621 = vmatpush1.msra.mxu0 0.0
        %2622 = vmatprep.subr.mxu0 0.0
        %2623 = vmatpush1.msra.mxu0 0.0
        %2624 = vmatprep.subr.mxu0 0.0
        %2625 = vmatpush1.msra.mxu0 0.0
        %2626 = vmatprep.subr.mxu0 0.0
        %2627 = vmatpush1.msra.mxu0 0.0
        %2628 = vmatprep.subr.mxu0 0.0
        %2629 = vmatpush1.msra.mxu0 0.0
        %2630 = vmatprep.subr.mxu0 0.0
        %2631 = vmatpush1.msra.mxu0 0.0
        %2632 = vmatprep.subr.mxu0 0.0
        %2633 = vmatpush1.msra.mxu0 0.0
        %2634 = vmatprep.subr.mxu0 0.0
        %2635 = vmatpush1.msra.mxu0 0.0
        %2636 = vmatprep.subr.mxu0 0.0
        %2637 = vmatpush1.msra.mxu0 0.0
        %2638 = vmatprep.subr.mxu0 0.0
        %2639 = vmatpush1.msra.mxu0 0.0
        %2640 = vmatprep.subr.mxu0 0.0
        %2641 = vmatpush1.msra.mxu0 0.0
        %2642 = vmatprep.subr.mxu0 0.0
        %2643 = vmatpush1.msra.mxu0 0.0
        %2644 = vmatprep.subr.mxu0 0.0
        %2645 = vmatpush1.msra.mxu0 0.0
        %2646 = vmatprep.subr.mxu0 0.0
        %2647 = vmatpush1.msra.mxu0 0.0
        %2648 = vmatprep.subr.mxu0 0.0
        %2649 = vmatpush1.msra.mxu0 0.0
        %2650 = vmatprep.subr.mxu0 0.0
        %2651 = vmatpush1.msra.mxu0 0.0
        %2652 = vmatprep.subr.mxu0 0.0
        %2653 = vmatpush1.msra.mxu0 0.0
        %2654 = vmatprep.subr.mxu0 0.0
        %2655 = vmatpush1.msra.mxu0 0.0
        %2656 = vmatprep.subr.mxu0 0.0
        %2657 = vmatpush1.msra.mxu0 0.0
        %2658 = vmatprep.subr.mxu0 0.0
        %2659 = vmatpush1.msra.mxu0 0.0
        %2660 = vmatprep.subr.mxu0 0.0
        %2661 = vmatpush1.msra.mxu0 0.0
        %2662 = vmatprep.subr.mxu0 0.0
        %2663 = vmatpush1.msra.mxu0 0.0
        %2664 = vmatprep.subr.mxu0 0.0
        %2665 = vmatpush1.msra.mxu0 0.0
        %2666 = vmatprep.subr.mxu0 0.0
        %2667 = vmatpush1.msra.mxu0 0.0
        %2668 = vmatprep.subr.mxu0 0.0
        %2669 = vmatpush1.msra.mxu0 0.0
        %2670 = vmatprep.mubr.f32.mxu0 0.0
        %2671 = vmatmul.mubr.f32.gmra.mrb[0].mxu0 %v2601
        %v2672 = vpop.f32.mrb[0].mxu0
        %v2673 = vadd.f32 0.0, %v2672
        %v2674 = vpop.f32.mrb[0].mxu0
        %2675 = vdwg.mxu0
        %v2677 = vsel %vm1971, %v2673, 0
        %2679 = vmatprep.subr.mxu0 0.0
        %2680 = vmatpush1.msra.mxu0 %v2596
        %2681 = vmatprep.subr.mxu0 0.0
        %2682 = vmatpush1.msra.mxu0 0.0
        %2683 = vmatprep.subr.mxu0 0.0
        %2684 = vmatpush1.msra.mxu0 0.0
        %2685 = vmatprep.subr.mxu0 0.0
        %2686 = vmatpush1.msra.mxu0 0.0
        %2687 = vmatprep.subr.mxu0 0.0
        %2688 = vmatpush1.msra.mxu0 0.0
        %2689 = vmatprep.subr.mxu0 0.0
        %2690 = vmatpush1.msra.mxu0 0.0
        %2691 = vmatprep.subr.mxu0 0.0
        %2692 = vmatpush1.msra.mxu0 0.0
        %2693 = vmatprep.subr.mxu0 0.0
        %2694 = vmatpush1.msra.mxu0 0.0
        %2695 = vmatprep.subr.mxu0 0.0
        %2696 = vmatpush1.msra.mxu0 0.0
        %2697 = vmatprep.subr.mxu0 0.0
        %2698 = vmatpush1.msra.mxu0 0.0
        %2699 = vmatprep.subr.mxu0 0.0
        %2700 = vmatpush1.msra.mxu0 0.0
        %2701 = vmatprep.subr.mxu0 0.0
        %2702 = vmatpush1.msra.mxu0 0.0
        %2703 = vmatprep.subr.mxu0 0.0
        %2704 = vmatpush1.msra.mxu0 0.0
        %2705 = vmatprep.subr.mxu0 0.0
        %2706 = vmatpush1.msra.mxu0 0.0
        %2707 = vmatprep.subr.mxu0 0.0
        %2708 = vmatpush1.msra.mxu0 0.0
        %2709 = vmatprep.subr.mxu0 0.0
        %2710 = vmatpush1.msra.mxu0 0.0
        %2711 = vmatprep.subr.mxu0 0.0
        %2712 = vmatpush1.msra.mxu0 0.0
        %2713 = vmatprep.subr.mxu0 0.0
        %2714 = vmatpush1.msra.mxu0 0.0
        %2715 = vmatprep.subr.mxu0 0.0
        %2716 = vmatpush1.msra.mxu0 0.0
        %2717 = vmatprep.subr.mxu0 0.0
        %2718 = vmatpush1.msra.mxu0 0.0
        %2719 = vmatprep.subr.mxu0 0.0
        %2720 = vmatpush1.msra.mxu0 0.0
        %2721 = vmatprep.subr.mxu0 0.0
        %2722 = vmatpush1.msra.mxu0 0.0
        %2723 = vmatprep.subr.mxu0 0.0
        %2724 = vmatpush1.msra.mxu0 0.0
        %2725 = vmatprep.subr.mxu0 0.0
        %2726 = vmatpush1.msra.mxu0 0.0
        %2727 = vmatprep.subr.mxu0 0.0
        %2728 = vmatpush1.msra.mxu0 0.0
        %2729 = vmatprep.subr.mxu0 0.0
        %2730 = vmatpush1.msra.mxu0 0.0
        %2731 = vmatprep.subr.mxu0 0.0
        %2732 = vmatpush1.msra.mxu0 0.0
        %2733 = vmatprep.subr.mxu0 0.0
        %2734 = vmatpush1.msra.mxu0 0.0
        %2735 = vmatprep.subr.mxu0 0.0
        %2736 = vmatpush1.msra.mxu0 0.0
        %2737 = vmatprep.subr.mxu0 0.0
        %2738 = vmatpush1.msra.mxu0 0.0
        %2739 = vmatprep.subr.mxu0 0.0
        %2740 = vmatpush1.msra.mxu0 0.0
        %2741 = vmatprep.subr.mxu0 0.0
        %2742 = vmatpush1.msra.mxu0 0.0
        %2743 = vmatprep.mubr.f32.mxu0 0.0
        %2744 = vmatmul.mubr.f32.gmra.mrb[0].mxu0 %v2677
        %v2745 = vpop.f32.mrb[0].mxu0
        %v2746 = vadd.f32 0.0, %v2745
        %v2747 = vpop.f32.mrb[0].mxu0
        %2748 = vdwg.mxu0
        %v2749 = vld [vmem:[#allocation13] sm:$0x1]
        %v2750 = vld [vmem:[#allocation19] sm:$0xff]
        %v2751 = vld [vmem:[#allocation19 + $0x8] sm:$0x3]
        %vm2752 = vcmask 9216
        %2753 = vst.msk [vmem:[#allocation2] sm:$0x3] %vm2752, %v2746
        %vm2754 = vcmask 25616
        %2755 = vst.msk [vmem:[#allocation2] sm:$0x3] %vm2754, %v2746
        %v2756 = vmul.f32 %v2746, %v2746
        %2758 = vrot.lane.b32.xlu0 %v2756, 4
        %v2759 = vpop.permute.xlu0 %2758
        %vm2761 = vcmask 42016
        %2762 = vst.msk [vmem:[#allocation2] sm:$0x3] %vm2761, %v2759
        %vm2763 = vcmask 58416
        %2764 = vst.msk [vmem:[#allocation2] sm:$0x3] %vm2763, %v2759
        %2766 = vrot.lane.b32.xlu0 %v2746, 126
        %v2767 = vpop.permute.xlu0 %2766
        %v2769 = vmul.f32 %v2746, %v2767
        %2771 = vrot.lane.b32.xlu0 %v2769, 8
        %v2772 = vpop.permute.xlu0 %2771
        %vm2774 = vcmask 74816
        %2775 = vst.msk [vmem:[#allocation2] sm:$0x3] %vm2774, %v2772
        %v2776 = vld [vmem:[#allocation2] sm:$0x3]
        %vm2777 = vcmask 15360
        %v2779 = vsel %vm2777, %v2749, 0
        %vm2781 = vcmask 1041408
        %v2783 = vsel %vm2781, %v2776, 0
        %2785 = vmatprep.subr.mxu0 0.0
        %2786 = vmatpush1.msra.mxu0 %v2783
        %2787 = vmatprep.subr.mxu0 0.0
        %2788 = vmatpush1.msra.mxu0 0.0
        %2789 = vmatprep.subr.mxu0 0.0
        %2790 = vmatpush1.msra.mxu0 0.0
        %2791 = vmatprep.subr.mxu0 0.0
        %2792 = vmatpush1.msra.mxu0 0.0
        %2793 = vmatprep.subr.mxu0 0.0
        %2794 = vmatpush1.msra.mxu0 0.0
        %2795 = vmatprep.subr.mxu0 0.0
        %2796 = vmatpush1.msra.mxu0 0.0
        %2797 = vmatprep.subr.mxu0 0.0
        %2798 = vmatpush1.msra.mxu0 0.0
        %2799 = vmatprep.subr.mxu0 0.0
        %2800 = vmatpush1.msra.mxu0 0.0
        %2801 = vmatprep.subr.mxu0 0.0
        %2802 = vmatpush1.msra.mxu0 0.0
        %2803 = vmatprep.subr.mxu0 0.0
        %2804 = vmatpush1.msra.mxu0 0.0
        %2805 = vmatprep.subr.mxu0 0.0
        %2806 = vmatpush1.msra.mxu0 0.0
        %2807 = vmatprep.subr.mxu0 0.0
        %2808 = vmatpush1.msra.mxu0 0.0
        %2809 = vmatprep.subr.mxu0 0.0
        %2810 = vmatpush1.msra.mxu0 0.0
        %2811 = vmatprep.subr.mxu0 0.0
        %2812 = vmatpush1.msra.mxu0 0.0
        %2813 = vmatprep.subr.mxu0 0.0
        %2814 = vmatpush1.msra.mxu0 0.0
        %2815 = vmatprep.subr.mxu0 0.0
        %2816 = vmatpush1.msra.mxu0 0.0
        %2817 = vmatprep.subr.mxu0 0.0
        %2818 = vmatpush1.msra.mxu0 0.0
        %2819 = vmatprep.subr.mxu0 0.0
        %2820 = vmatpush1.msra.mxu0 0.0
        %2821 = vmatprep.subr.mxu0 0.0
        %2822 = vmatpush1.msra.mxu0 0.0
        %2823 = vmatprep.subr.mxu0 0.0
        %2824 = vmatpush1.msra.mxu0 0.0
        %2825 = vmatprep.subr.mxu0 0.0
        %2826 = vmatpush1.msra.mxu0 0.0
        %2827 = vmatprep.subr.mxu0 0.0
        %2828 = vmatpush1.msra.mxu0 0.0
        %2829 = vmatprep.subr.mxu0 0.0
        %2830 = vmatpush1.msra.mxu0 0.0
        %2831 = vmatprep.subr.mxu0 0.0
        %2832 = vmatpush1.msra.mxu0 0.0
        %2833 = vmatprep.subr.mxu0 0.0
        %2834 = vmatpush1.msra.mxu0 0.0
        %2835 = vmatprep.subr.mxu0 0.0
        %2836 = vmatpush1.msra.mxu0 0.0
        %2837 = vmatprep.subr.mxu0 0.0
        %2838 = vmatpush1.msra.mxu0 0.0
        %2839 = vmatprep.subr.mxu0 0.0
        %2840 = vmatpush1.msra.mxu0 0.0
        %2841 = vmatprep.subr.mxu0 0.0
        %2842 = vmatpush1.msra.mxu0 0.0
        %2843 = vmatprep.subr.mxu0 0.0
        %2844 = vmatpush1.msra.mxu0 0.0
        %2845 = vmatprep.subr.mxu0 0.0
        %2846 = vmatpush1.msra.mxu0 0.0
        %2847 = vmatprep.subr.mxu0 0.0
        %2848 = vmatpush1.msra.mxu0 0.0
        %2849 = vmatprep.mubr.f32.mxu0 0.0
        %2850 = vmatmul.mubr.f32.gmra.mrb[0].mxu0 %v2779
        %v2851 = vpop.f32.mrb[0].mxu0
        %v2852 = vadd.f32 0.0, %v2851
        %v2853 = vpop.f32.mrb[0].mxu0
        %2854 = vdwg.mxu0
        %vm2855 = vcmask 80896
        %v2857 = vsel %vm2855, %v2852, 0
        %v2860 = vsel %vm2781, %v2751, 0
        %2862 = vmatprep.subr.mxu0 0.0
        %2863 = vmatpush1.msra.mxu0 %v2750
        %2864 = vmatprep.subr.mxu0 0.0
        %2865 = vmatpush1.msra.mxu0 %v2860
        %2866 = vmatprep.subr.mxu0 0.0
        %2867 = vmatpush1.msra.mxu0 0.0
        %2868 = vmatprep.subr.mxu0 0.0
        %2869 = vmatpush1.msra.mxu0 0.0
        %2870 = vmatprep.subr.mxu0 0.0
        %2871 = vmatpush1.msra.mxu0 0.0
        %2872 = vmatprep.subr.mxu0 0.0
        %2873 = vmatpush1.msra.mxu0 0.0
        %2874 = vmatprep.subr.mxu0 0.0
        %2875 = vmatpush1.msra.mxu0 0.0
        %2876 = vmatprep.subr.mxu0 0.0
        %2877 = vmatpush1.msra.mxu0 0.0
        %2878 = vmatprep.subr.mxu0 0.0
        %2879 = vmatpush1.msra.mxu0 0.0
        %2880 = vmatprep.subr.mxu0 0.0
        %2881 = vmatpush1.msra.mxu0 0.0
        %2882 = vmatprep.subr.mxu0 0.0
        %2883 = vmatpush1.msra.mxu0 0.0
        %2884 = vmatprep.subr.mxu0 0.0
        %2885 = vmatpush1.msra.mxu0 0.0
        %2886 = vmatprep.subr.mxu0 0.0
        %2887 = vmatpush1.msra.mxu0 0.0
        %2888 = vmatprep.subr.mxu0 0.0
        %2889 = vmatpush1.msra.mxu0 0.0
        %2890 = vmatprep.subr.mxu0 0.0
        %2891 = vmatpush1.msra.mxu0 0.0
        %2892 = vmatprep.subr.mxu0 0.0
        %2893 = vmatpush1.msra.mxu0 0.0
        %2894 = vmatprep.subr.mxu0 0.0
        %2895 = vmatpush1.msra.mxu0 0.0
        %2896 = vmatprep.subr.mxu0 0.0
        %2897 = vmatpush1.msra.mxu0 0.0
        %2898 = vmatprep.subr.mxu0 0.0
        %2899 = vmatpush1.msra.mxu0 0.0
        %2900 = vmatprep.subr.mxu0 0.0
        %2901 = vmatpush1.msra.mxu0 0.0
        %2902 = vmatprep.subr.mxu0 0.0
        %2903 = vmatpush1.msra.mxu0 0.0
        %2904 = vmatprep.subr.mxu0 0.0
        %2905 = vmatpush1.msra.mxu0 0.0
        %2906 = vmatprep.subr.mxu0 0.0
        %2907 = vmatpush1.msra.mxu0 0.0
        %2908 = vmatprep.subr.mxu0 0.0
        %2909 = vmatpush1.msra.mxu0 0.0
        %2910 = vmatprep.subr.mxu0 0.0
        %2911 = vmatpush1.msra.mxu0 0.0
        %2912 = vmatprep.subr.mxu0 0.0
        %2913 = vmatpush1.msra.mxu0 0.0
        %2914 = vmatprep.subr.mxu0 0.0
        %2915 = vmatpush1.msra.mxu0 0.0
        %2916 = vmatprep.subr.mxu0 0.0
        %2917 = vmatpush1.msra.mxu0 0.0
        %2918 = vmatprep.subr.mxu0 0.0
        %2919 = vmatpush1.msra.mxu0 0.0
        %2920 = vmatprep.subr.mxu0 0.0
        %2921 = vmatpush1.msra.mxu0 0.0
        %2922 = vmatprep.subr.mxu0 0.0
        %2923 = vmatpush1.msra.mxu0 0.0
        %2924 = vmatprep.subr.mxu0 0.0
        %2925 = vmatpush1.msra.mxu0 0.0
        %2926 = vmatprep.mubr.f32.mxu0 0.0
        %2927 = vmatmul.mubr.f32.gmra.mrb[0].mxu0 %v2857
        %v2928 = vpop.f32.mrb[0].mxu0
        %v2929 = vadd.f32 0.0, %v2928
        %v2930 = vpop.f32.mrb[0].mxu0
        %2931 = vdwg.mxu0
        %v2932 = vmul.f32 %v2929, %v2929
        %2934 = vrot.lane.b32.xlu0 %v2929, 127
        %v2935 = vpop.permute.xlu0 %2934
        %v2937 = vmul.f32 %v2929, %v2935
        %2939 = vrot.lane.b32.xlu0 %v2932, 2
        %v2940 = vpop.permute.xlu0 %2939
        %v2942 = vsub.f32 %v2929, %v2940
        %2944 = vrot.lane.b32.xlu0 %v2937, 4
        %v2945 = vpop.permute.xlu0 %2944
        %v2947 = vsub.f32 %v2929, %v2945
        %v2948 = vmul.f32 %v2947, 2.0
        %v2949 = vadd.f32 %v2948, 0.0225
        %2951 = vrot.lane.b32.xlu0 %v2942, 127
        %v2952 = vpop.permute.xlu0 %2951
        %v2954 = vadd.f32 %v2942, %v2952
        %v2955 = vadd.f32 %v2954, 0.0225
        %v2956 = vrcp.pop %v2955
        %2958 = vrot.lane.b32.xlu0 %v2956, 2
        %v2959 = vpop.permute.xlu0 %2958
        %v2961 = vmul.f32 %v2949, %v2959
        %v2962 = vmul.f32 %v2937, 2.0
        %v2963 = vadd.f32 %v2962, 0.0025
        %2965 = vrot.lane.b32.xlu0 %v2961, 124
        %v2966 = vpop.permute.xlu0 %2965
        %v2968 = vmul.f32 %v2963, %v2966
        %2969 = vrot.lane.b32.xlu0 %v2932, 127
        %v2970 = vpop.permute.xlu0 %2969
        %v2972 = vadd.f32 %v2932, %v2970
        %v2973 = vadd.f32 %v2972, 0.0025
        %v2974 = vrcp.pop %v2973
        %v2975 = vmul.f32 %v2968, %v2974
        %v2976 = vadd.f32 %v2975, 0.0
        %s2977 = vtos %v2976
        %v2978 = vstv %s2977
        %vm2979 = vcmask 65600
        %2980 = vst.msk [vmem:[%s876] sm:$0x1] %vm2979, %v2978
        %v2981 = vadd.f32 %v2961, 0.0
        %2983 = vrot.lane.b32.xlu0 %v2981, 124
        %v2984 = vpop.permute.xlu0 %2983
        %s2986 = vtos %v2984
        %v2987 = vstv %s2986
        %vm2988 = vcmask 73800
        %2989 = vst.msk [vmem:[%s876] sm:$0x1] %vm2988, %v2987
        %p2990 = scmp.lt.s32.totalorder %s44, 5
        %s2991 = scalar_select %p2990, %s44, 5
        %s2992 = scalar_lea.vmem %s20, %s2991
        // Predicated region
        $region165: #{_lambda_.1} parent=99 // pred_check
          %p2993 = pneg %p492
        $region166: #{_lambda_.1} parent=99 // pred_check_branch
          %2995 = sbr.rel (%p2993) target = $region168
        $region167: #{_lambda_.1} parent=99 // pred_region
          _
        $region168: #{_lambda_.1} parent=99 // pred_fallthru
          _
      $region100: #{_lambda_.1} parent=5 // pred_fallthru
        _
      %p2996 = scmp.le.s32.totalorder 2, %s39
      // Predicated region
      $region169: #{_lambda_.1} parent=5 // pred_check
        %p2997 = pneg %p2996
      $region170: #{_lambda_.1} parent=5 // pred_check_branch
        %2999 = sbr.rel (%p2997) target = $region172
      $region171: #{_lambda_.1} parent=5 // pred_region
        %s3000 = ssub.s32 %s39, 2
        // Predicated region
        $region173: #{_lambda_.1} parent=171 // pred_check
          %p3001 = pneg %p498
        $region174: #{_lambda_.1} parent=171 // pred_check_branch
          %3003 = sbr.rel (%p3001) target = $region176
        $region175: #{_lambda_.1} parent=171 // pred_region
          %p3004 = scmp.lt.s32.totalorder %s45, 5
          %s3005 = scalar_select %p3004, %s45, 5
          %s3006 = scalar_lea.vmem %s20, %s3005
        $region176: #{_lambda_.1} parent=171 // pred_fallthru
          _
      $region172: #{_lambda_.1} parent=5 // pred_fallthru
        _
    $region6: #{_lambda_.1} parent=1 // loop_footer
      %s43 = sadd.s32 1, %s39
    $region7: #{_lambda_.1} parent=1 // loop_footer_branch
      %38 = sbr.rel target = $region3
    $region8: #{_lambda_.1} parent=1 // loop_exit
      _
    %3007 = vsyncpa [#allocation4], 1
    %s3008 = scalar_lea.sflag [#allocation4], 1
    %3009 = vsyncpa %s3008, 1
    %3010 = vsyncpa [#allocation6], 1
    %s3011 = scalar_lea.sflag [#allocation6], 1
    %3012 = vsyncpa %s3011, 1
    %3013 = vsyncpa [#allocation9], 1
    %3014 = vsyncpa [#allocation12], 1
    %3015 = vsyncpa [#allocation15], 1
    %3016 = vsyncpa [#allocation18], 1
    %3017 = vsyncpa [#allocation21], 1
    %3018 = vsyncpa [#allocation24], 1
    %3019 = vsyncpa [#allocation27], 1

</llo_original>
